<compile_context>
chip_gen: v6e
topology: v6e:2x2x1
jax: 0.10.0
libtpu: 0.0.40
codegen_flags: <defaults>
</compile_context>

<pallas_src>
import jax
import jax.numpy as jnp
from jax.experimental import pallas as pl
from jax.experimental.pallas import tpu as pltpu

# ---------------- problem constants (from the module) ----------------
C_IN = 160
C_OUT = 160
GROUPS = 10
CPG = C_IN // GROUPS            # 16 channels per group
KH = KW = 3
STRIDE = 2
PAD = 1
EPS = 1e-5

H_IN = W_IN = 28
H_OUT = (H_IN + 2 * PAD - KH) // STRIDE + 1     # 14
W_OUT = (W_IN + 2 * PAD - KW) // STRIDE + 1     # 14
W_OUT_P = 16                                    # pad W_out 14 -> 16 (left pad cols)
P_PAD = H_OUT * W_OUT_P                         # 224 matmul rows
P_VALID = H_OUT * W_OUT                         # 196 real output pixels (BN divisor)

H_PAD = H_IN + 2 * PAD                          # 30
W_PAD = 2 * W_OUT_P + 2                         # 34 = 4 extra-left + 1 conv + 28 + 1
PH_ROWS = H_PAD // 2                            # 15 rows per stride-2 phase
PH_COLS = W_PAD // 2                            # 17 cols per stride-2 phase


# -------- Pallas kernel: fused relu -> grouped conv (9 tap matmuls) -> BN -> relu --------
def _fused_kernel(x_ref, w_ref, gamma_ref, beta_ref, o_ref):
    # x_ref:     (2, 2, 15, 17, 160) bf16  phase-decomposed padded NHWC input (pre-ReLU)
    # w_ref:     (9, 160, 160)       bf16  block-diagonal grouped weights, one per tap
    # gamma/beta:(1, 160)            f32
    # o_ref:     (224, 160)          f32   (H_out x W_out_padded, C_out)
    acc = jnp.zeros((P_PAD, C_OUT), jnp.float32)
    for kh in range(KH):
        for kw in range(KW):
            # stride-2 tap (kh, kw) is a contiguous window of phase (kh%2, kw%2)
            tap = x_ref[kh % 2, kw % 2,
                        pl.ds(kh // 2, H_OUT),
                        pl.ds(kw // 2, W_OUT_P), :]          # (14, 16, 160) bf16
            tap = jnp.maximum(tap, 0)                        # relu10, fused
            tap = tap.reshape(P_PAD, C_IN)                   # layout-trivial (16 % 8 == 0)
            acc = acc + jnp.dot(tap, w_ref[kh * KW + kw],
                                preferred_element_type=jnp.float32)

    # BatchNorm (training-mode batch stats) + affine + relu11.
    # Pad rows (ow_p in {0,1}) of acc are exactly 0, so dividing by the true
    # pixel count 196 gives the correct mean / biased variance.
    inv_n = 1.0 / float(P_VALID)
    s = jnp.sum(acc, axis=0, keepdims=True)
    ssq = jnp.sum(acc * acc, axis=0, keepdims=True)
    mean = s * inv_n
    var = jnp.maximum(ssq * inv_n - mean * mean, 0.0)        # clamp f32 cancellation
    scale = jax.lax.rsqrt(var + EPS) * gamma_ref[...]
    shift = beta_ref[...] - mean * scale
    o_ref[...] = jnp.maximum(acc * scale + shift, 0.0)


# ---------------- one-time weight prep (hoisted out of the per-call path) ----------------
def prepare_weights(w_oihw):
    """PyTorch grouped weight (160, 16, 3, 3) -> (9, 160, 160) bf16 block-diagonal."""
    wg = w_oihw.reshape(GROUPS, CPG, CPG, KH, KW)            # (g, co, ci, kh, kw)
    blk = jnp.zeros((KH * KW, C_IN, C_OUT), jnp.float32)
    for g in range(GROUPS):
        # (co, ci, kh, kw) -> (kh, kw, ci, co) -> (9, ci, co)
        wk = jnp.transpose(wg[g], (2, 3, 1, 0)).reshape(KH * KW, CPG, CPG)
        blk = blk.at[:, g * CPG:(g + 1) * CPG, g * CPG:(g + 1) * CPG].set(wk)
    return blk.astype(jnp.bfloat16)                          # (9, 160, 160)


# ---------------- jitted forward wrapper ----------------
@jax.jit
def fused_relu_gconv_bn_relu(x_nchw, w_packed, gamma, beta):
    """x_nchw: (1, 160, 28, 28) f32; w_packed: prepare_weights output.
    Returns (1, 160, 14, 14) f32."""
    N, C, H, W = x_nchw.shape
    assert N == 1 and C == C_IN and H == H_IN and W == W_IN

    # Cheap layout-only pass (no patch materialization):
    #   pad rows by (1,1) [conv]; pad cols by (5,1) = 4 extra-left zeros + conv pad,
    #   so the 2 extra output columns (left-aligned) see only zeros.
    x = x_nchw[0].astype(jnp.bfloat16)                       # (160, 28, 28)
    xp = jnp.pad(x, ((0, 0), (PAD, PAD), (PAD + 4, PAD)))    # (160, 30, 34)
    # stride-2 phase decomposition: xph[a, b, i, j, c] = xp[c, 2i+a, 2j+b]
    xph = xp.reshape(C_IN, PH_ROWS, 2, PH_COLS, 2)
    xph = jnp.transpose(xph, (2, 4, 1, 3, 0))                # (2, 2, 15, 17, 160)

    vmem = pl.BlockSpec(memory_space=pltpu.MemorySpace.VMEM)
    out = pl.pallas_call(
        _fused_kernel,
        out_shape=jax.ShapeDtypeStruct((P_PAD, C_OUT), jnp.float32),
        in_specs=[vmem, vmem, vmem, vmem],
        out_specs=vmem,
    )(xph, w_packed, gamma.reshape(1, C_OUT), beta.reshape(1, C_OUT))

    out = out.reshape(H_OUT, W_OUT_P, C_OUT)[:, W_OUT_P - W_OUT:, :]   # drop pad cols
    return jnp.transpose(out, (2, 0, 1))[None]               # (1, 160, 14, 14) NCHW


# ---------------- reference (plain JAX) for sanity checking ----------------
def _reference(x_nchw, w_oihw, gamma, beta, quantize):
    xr = jnp.maximum(x_nchw, 0.0)
    w = w_oihw
    if quantize:  # mirror the kernel's bf16 operand rounding
        xr = xr.astype(jnp.bfloat16).astype(jnp.float32)
        w = w.astype(jnp.bfloat16).astype(jnp.float32)
    conv = jax.lax.conv_general_dilated(
        xr, w, window_strides=(STRIDE, STRIDE),
        padding=((PAD, PAD), (PAD, PAD)),
        dimension_numbers=("NCHW", "OIHW", "NCHW"),
        feature_group_count=GROUPS,
        precision=jax.lax.Precision.HIGHEST)
    mean = conv.mean(axis=(0, 2, 3), keepdims=True)
    var = jnp.square(conv - mean).mean(axis=(0, 2, 3), keepdims=True)
    y = (conv - mean) * jax.lax.rsqrt(var + EPS)
    y = y * gamma.reshape(1, -1, 1, 1) + beta.reshape(1, -1, 1, 1)
    return jnp.maximum(y, 0.0)


if __name__ == "__main__":
    key = jax.random.PRNGKey(0)
    kx, kw = jax.random.split(key)

    # input consistent with the module: (1, 160, 28, 28)
    x = jax.random.normal(kx, (1, C_IN, H_IN, W_IN), dtype=jnp.float32)

    # deterministic parameter init (shapes from Conv2d / BatchNorm2d __init__)
    fan_in = CPG * KH * KW
    bound = 1.0 / float(fan_in) ** 0.5
    w = jax.random.uniform(kw, (C_OUT, CPG, KH, KW), jnp.float32, -bound, bound)
    gamma = jnp.ones((C_OUT,), jnp.float32)    # BatchNorm2d affine init
    beta = jnp.zeros((C_OUT,), jnp.float32)

    w_packed = prepare_weights(w)              # one-time, out of the hot path

    out = fused_relu_gconv_bn_relu(x, w_packed, gamma, beta)
    out = jax.block_until_ready(out)
    assert out.shape == (1, C_OUT, H_OUT, W_OUT), out.shape

    # tight check against a reference using the same bf16 operand rounding
    ref_q = _reference(x, w, gamma, beta, quantize=True)
    err_q = float(jnp.abs(out - ref_q).max())
    assert jnp.allclose(out, ref_q, atol=2e-3, rtol=2e-3), err_q

    # loose check against the full-f32 module semantics (bf16 operand precision)
    ref_f = _reference(x, w, gamma, beta, quantize=False)
    err_f = float(jnp.abs(out - ref_f).max())
    assert jnp.allclose(out, ref_f, atol=5e-2, rtol=5e-2), err_f

    print("KERNEL_OK")
</pallas_src>

<mosaic_0001>
module attributes {stable_mosaic.version = 11 : i64} {
  func.func @_fused_kernel(%arg0: memref<2x2x15x17x160xbf16, #tpu.memory_space<vmem>>, %arg1: memref<9x160x160xbf16, #tpu.memory_space<vmem>>, %arg2: memref<1x160xf32, #tpu.memory_space<vmem>>, %arg3: memref<1x160xf32, #tpu.memory_space<vmem>>, %arg4: memref<224x160xf32, #tpu.memory_space<vmem>>) attributes {dimension_semantics = [], scalar_prefetch = 0 : i64, scratch_operands = 0 : i64, tpu.core_type = #tpu.core_type<tc>} {
    %cst = arith.constant 0.000000e+00 : f32
    %0 = vector.broadcast %cst : f32 to vector<224x160xf32>
    %c0 = arith.constant 0 : index
    %c0_0 = arith.constant 0 : index
    %c0_1 = arith.constant 0 : index
    %c0_2 = arith.constant 0 : index
    %c0_3 = arith.constant 0 : index
    %1 = vector.load %arg0[%c0, %c0_0, %c0_1, %c0_2, %c0_3] : memref<2x2x15x17x160xbf16, #tpu.memory_space<vmem>>, vector<1x1x14x16x160xbf16>
    %2 = vector.shape_cast %1 : vector<1x1x14x16x160xbf16> to vector<14x16x160xbf16>
    %cst_4 = arith.constant 0.000000e+00 : bf16
    %3 = vector.broadcast %cst_4 : bf16 to vector<14x16x160xbf16>
    %4 = arith.maximumf %2, %3 : vector<14x16x160xbf16>
    %5 = vector.shape_cast %4 : vector<14x16x160xbf16> to vector<224x160xbf16>
    %c0_5 = arith.constant 0 : index
    %c0_6 = arith.constant 0 : index
    %c0_7 = arith.constant 0 : index
    %6 = vector.load %arg1[%c0_5, %c0_6, %c0_7] : memref<9x160x160xbf16, #tpu.memory_space<vmem>>, vector<1x160x160xbf16>
    %7 = vector.shape_cast %6 : vector<1x160x160xbf16> to vector<160x160xbf16>
    %cst_8 = arith.constant dense<0.000000e+00> : vector<224x160xf32>
    %8 = tpu.matmul %5, %7, %cst_8 {dimension_numbers = #tpu.dot_dimension_numbers<[1], [0], [0], [1], [0, 0, 1, 1], [], []>} : vector<224x160xbf16>, vector<160x160xbf16>, vector<224x160xf32> -> vector<224x160xf32>
    %9 = arith.addf %0, %8 : vector<224x160xf32>
    %c0_9 = arith.constant 0 : index
    %c1 = arith.constant 1 : index
    %c0_10 = arith.constant 0 : index
    %c0_11 = arith.constant 0 : index
    %c0_12 = arith.constant 0 : index
    %10 = vector.load %arg0[%c0_9, %c1, %c0_10, %c0_11, %c0_12] : memref<2x2x15x17x160xbf16, #tpu.memory_space<vmem>>, vector<1x1x14x16x160xbf16>
    %11 = vector.shape_cast %10 : vector<1x1x14x16x160xbf16> to vector<14x16x160xbf16>
    %cst_13 = arith.constant 0.000000e+00 : bf16
    %12 = vector.broadcast %cst_13 : bf16 to vector<14x16x160xbf16>
    %13 = arith.maximumf %11, %12 : vector<14x16x160xbf16>
    %14 = vector.shape_cast %13 : vector<14x16x160xbf16> to vector<224x160xbf16>
    %c1_14 = arith.constant 1 : index
    %c0_15 = arith.constant 0 : index
    %c0_16 = arith.constant 0 : index
    %15 = vector.load %arg1[%c1_14, %c0_15, %c0_16] : memref<9x160x160xbf16, #tpu.memory_space<vmem>>, vector<1x160x160xbf16>
    %16 = vector.shape_cast %15 : vector<1x160x160xbf16> to vector<160x160xbf16>
    %cst_17 = arith.constant dense<0.000000e+00> : vector<224x160xf32>
    %17 = tpu.matmul %14, %16, %cst_17 {dimension_numbers = #tpu.dot_dimension_numbers<[1], [0], [0], [1], [0, 0, 1, 1], [], []>} : vector<224x160xbf16>, vector<160x160xbf16>, vector<224x160xf32> -> vector<224x160xf32>
    %18 = arith.addf %9, %17 : vector<224x160xf32>
    %c0_18 = arith.constant 0 : index
    %c0_19 = arith.constant 0 : index
    %c0_20 = arith.constant 0 : index
    %c1_21 = arith.constant 1 : index
    %c0_22 = arith.constant 0 : index
    %19 = vector.load %arg0[%c0_18, %c0_19, %c0_20, %c1_21, %c0_22] : memref<2x2x15x17x160xbf16, #tpu.memory_space<vmem>>, vector<1x1x14x16x160xbf16>
    %20 = vector.shape_cast %19 : vector<1x1x14x16x160xbf16> to vector<14x16x160xbf16>
    %cst_23 = arith.constant 0.000000e+00 : bf16
    %21 = vector.broadcast %cst_23 : bf16 to vector<14x16x160xbf16>
    %22 = arith.maximumf %20, %21 : vector<14x16x160xbf16>
    %23 = vector.shape_cast %22 : vector<14x16x160xbf16> to vector<224x160xbf16>
    %c2 = arith.constant 2 : index
    %c0_24 = arith.constant 0 : index
    %c0_25 = arith.constant 0 : index
    %24 = vector.load %arg1[%c2, %c0_24, %c0_25] : memref<9x160x160xbf16, #tpu.memory_space<vmem>>, vector<1x160x160xbf16>
    %25 = vector.shape_cast %24 : vector<1x160x160xbf16> to vector<160x160xbf16>
    %cst_26 = arith.constant dense<0.000000e+00> : vector<224x160xf32>
    %26 = tpu.matmul %23, %25, %cst_26 {dimension_numbers = #tpu.dot_dimension_numbers<[1], [0], [0], [1], [0, 0, 1, 1], [], []>} : vector<224x160xbf16>, vector<160x160xbf16>, vector<224x160xf32> -> vector<224x160xf32>
    %27 = arith.addf %18, %26 : vector<224x160xf32>
    %c1_27 = arith.constant 1 : index
    %c0_28 = arith.constant 0 : index
    %c0_29 = arith.constant 0 : index
    %c0_30 = arith.constant 0 : index
    %c0_31 = arith.constant 0 : index
    %28 = vector.load %arg0[%c1_27, %c0_28, %c0_29, %c0_30, %c0_31] : memref<2x2x15x17x160xbf16, #tpu.memory_space<vmem>>, vector<1x1x14x16x160xbf16>
    %29 = vector.shape_cast %28 : vector<1x1x14x16x160xbf16> to vector<14x16x160xbf16>
    %cst_32 = arith.constant 0.000000e+00 : bf16
    %30 = vector.broadcast %cst_32 : bf16 to vector<14x16x160xbf16>
    %31 = arith.maximumf %29, %30 : vector<14x16x160xbf16>
    %32 = vector.shape_cast %31 : vector<14x16x160xbf16> to vector<224x160xbf16>
    %c3 = arith.constant 3 : index
    %c0_33 = arith.constant 0 : index
    %c0_34 = arith.constant 0 : index
    %33 = vector.load %arg1[%c3, %c0_33, %c0_34] : memref<9x160x160xbf16, #tpu.memory_space<vmem>>, vector<1x160x160xbf16>
    %34 = vector.shape_cast %33 : vector<1x160x160xbf16> to vector<160x160xbf16>
    %cst_35 = arith.constant dense<0.000000e+00> : vector<224x160xf32>
    %35 = tpu.matmul %32, %34, %cst_35 {dimension_numbers = #tpu.dot_dimension_numbers<[1], [0], [0], [1], [0, 0, 1, 1], [], []>} : vector<224x160xbf16>, vector<160x160xbf16>, vector<224x160xf32> -> vector<224x160xf32>
    %36 = arith.addf %27, %35 : vector<224x160xf32>
    %c1_36 = arith.constant 1 : index
    %c1_37 = arith.constant 1 : index
    %c0_38 = arith.constant 0 : index
    %c0_39 = arith.constant 0 : index
    %c0_40 = arith.constant 0 : index
    %37 = vector.load %arg0[%c1_36, %c1_37, %c0_38, %c0_39, %c0_40] : memref<2x2x15x17x160xbf16, #tpu.memory_space<vmem>>, vector<1x1x14x16x160xbf16>
    %38 = vector.shape_cast %37 : vector<1x1x14x16x160xbf16> to vector<14x16x160xbf16>
    %cst_41 = arith.constant 0.000000e+00 : bf16
    %39 = vector.broadcast %cst_41 : bf16 to vector<14x16x160xbf16>
    %40 = arith.maximumf %38, %39 : vector<14x16x160xbf16>
    %41 = vector.shape_cast %40 : vector<14x16x160xbf16> to vector<224x160xbf16>
    %c4 = arith.constant 4 : index
    %c0_42 = arith.constant 0 : index
    %c0_43 = arith.constant 0 : index
    %42 = vector.load %arg1[%c4, %c0_42, %c0_43] : memref<9x160x160xbf16, #tpu.memory_space<vmem>>, vector<1x160x160xbf16>
    %43 = vector.shape_cast %42 : vector<1x160x160xbf16> to vector<160x160xbf16>
    %cst_44 = arith.constant dense<0.000000e+00> : vector<224x160xf32>
    %44 = tpu.matmul %41, %43, %cst_44 {dimension_numbers = #tpu.dot_dimension_numbers<[1], [0], [0], [1], [0, 0, 1, 1], [], []>} : vector<224x160xbf16>, vector<160x160xbf16>, vector<224x160xf32> -> vector<224x160xf32>
    %45 = arith.addf %36, %44 : vector<224x160xf32>
    %c1_45 = arith.constant 1 : index
    %c0_46 = arith.constant 0 : index
    %c0_47 = arith.constant 0 : index
    %c1_48 = arith.constant 1 : index
    %c0_49 = arith.constant 0 : index
    %46 = vector.load %arg0[%c1_45, %c0_46, %c0_47, %c1_48, %c0_49] : memref<2x2x15x17x160xbf16, #tpu.memory_space<vmem>>, vector<1x1x14x16x160xbf16>
    %47 = vector.shape_cast %46 : vector<1x1x14x16x160xbf16> to vector<14x16x160xbf16>
    %cst_50 = arith.constant 0.000000e+00 : bf16
    %48 = vector.broadcast %cst_50 : bf16 to vector<14x16x160xbf16>
    %49 = arith.maximumf %47, %48 : vector<14x16x160xbf16>
    %50 = vector.shape_cast %49 : vector<14x16x160xbf16> to vector<224x160xbf16>
    %c5 = arith.constant 5 : index
    %c0_51 = arith.constant 0 : index
    %c0_52 = arith.constant 0 : index
    %51 = vector.load %arg1[%c5, %c0_51, %c0_52] : memref<9x160x160xbf16, #tpu.memory_space<vmem>>, vector<1x160x160xbf16>
    %52 = vector.shape_cast %51 : vector<1x160x160xbf16> to vector<160x160xbf16>
    %cst_53 = arith.constant dense<0.000000e+00> : vector<224x160xf32>
    %53 = tpu.matmul %50, %52, %cst_53 {dimension_numbers = #tpu.dot_dimension_numbers<[1], [0], [0], [1], [0, 0, 1, 1], [], []>} : vector<224x160xbf16>, vector<160x160xbf16>, vector<224x160xf32> -> vector<224x160xf32>
    %54 = arith.addf %45, %53 : vector<224x160xf32>
    %c0_54 = arith.constant 0 : index
    %c0_55 = arith.constant 0 : index
    %c1_56 = arith.constant 1 : index
    %c0_57 = arith.constant 0 : index
    %c0_58 = arith.constant 0 : index
    %55 = vector.load %arg0[%c0_54, %c0_55, %c1_56, %c0_57, %c0_58] : memref<2x2x15x17x160xbf16, #tpu.memory_space<vmem>>, vector<1x1x14x16x160xbf16>
    %56 = vector.shape_cast %55 : vector<1x1x14x16x160xbf16> to vector<14x16x160xbf16>
    %cst_59 = arith.constant 0.000000e+00 : bf16
    %57 = vector.broadcast %cst_59 : bf16 to vector<14x16x160xbf16>
    %58 = arith.maximumf %56, %57 : vector<14x16x160xbf16>
    %59 = vector.shape_cast %58 : vector<14x16x160xbf16> to vector<224x160xbf16>
    %c6 = arith.constant 6 : index
    %c0_60 = arith.constant 0 : index
    %c0_61 = arith.constant 0 : index
    %60 = vector.load %arg1[%c6, %c0_60, %c0_61] : memref<9x160x160xbf16, #tpu.memory_space<vmem>>, vector<1x160x160xbf16>
    %61 = vector.shape_cast %60 : vector<1x160x160xbf16> to vector<160x160xbf16>
    %cst_62 = arith.constant dense<0.000000e+00> : vector<224x160xf32>
    %62 = tpu.matmul %59, %61, %cst_62 {dimension_numbers = #tpu.dot_dimension_numbers<[1], [0], [0], [1], [0, 0, 1, 1], [], []>} : vector<224x160xbf16>, vector<160x160xbf16>, vector<224x160xf32> -> vector<224x160xf32>
    %63 = arith.addf %54, %62 : vector<224x160xf32>
    %c0_63 = arith.constant 0 : index
    %c1_64 = arith.constant 1 : index
    %c1_65 = arith.constant 1 : index
    %c0_66 = arith.constant 0 : index
    %c0_67 = arith.constant 0 : index
    %64 = vector.load %arg0[%c0_63, %c1_64, %c1_65, %c0_66, %c0_67] : memref<2x2x15x17x160xbf16, #tpu.memory_space<vmem>>, vector<1x1x14x16x160xbf16>
    %65 = vector.shape_cast %64 : vector<1x1x14x16x160xbf16> to vector<14x16x160xbf16>
    %cst_68 = arith.constant 0.000000e+00 : bf16
    %66 = vector.broadcast %cst_68 : bf16 to vector<14x16x160xbf16>
    %67 = arith.maximumf %65, %66 : vector<14x16x160xbf16>
    %68 = vector.shape_cast %67 : vector<14x16x160xbf16> to vector<224x160xbf16>
    %c7 = arith.constant 7 : index
    %c0_69 = arith.constant 0 : index
    %c0_70 = arith.constant 0 : index
    %69 = vector.load %arg1[%c7, %c0_69, %c0_70] : memref<9x160x160xbf16, #tpu.memory_space<vmem>>, vector<1x160x160xbf16>
    %70 = vector.shape_cast %69 : vector<1x160x160xbf16> to vector<160x160xbf16>
    %cst_71 = arith.constant dense<0.000000e+00> : vector<224x160xf32>
    %71 = tpu.matmul %68, %70, %cst_71 {dimension_numbers = #tpu.dot_dimension_numbers<[1], [0], [0], [1], [0, 0, 1, 1], [], []>} : vector<224x160xbf16>, vector<160x160xbf16>, vector<224x160xf32> -> vector<224x160xf32>
    %72 = arith.addf %63, %71 : vector<224x160xf32>
    %c0_72 = arith.constant 0 : index
    %c0_73 = arith.constant 0 : index
    %c1_74 = arith.constant 1 : index
    %c1_75 = arith.constant 1 : index
    %c0_76 = arith.constant 0 : index
    %73 = vector.load %arg0[%c0_72, %c0_73, %c1_74, %c1_75, %c0_76] : memref<2x2x15x17x160xbf16, #tpu.memory_space<vmem>>, vector<1x1x14x16x160xbf16>
    %74 = vector.shape_cast %73 : vector<1x1x14x16x160xbf16> to vector<14x16x160xbf16>
    %cst_77 = arith.constant 0.000000e+00 : bf16
    %75 = vector.broadcast %cst_77 : bf16 to vector<14x16x160xbf16>
    %76 = arith.maximumf %74, %75 : vector<14x16x160xbf16>
    %77 = vector.shape_cast %76 : vector<14x16x160xbf16> to vector<224x160xbf16>
    %c8 = arith.constant 8 : index
    %c0_78 = arith.constant 0 : index
    %c0_79 = arith.constant 0 : index
    %78 = vector.load %arg1[%c8, %c0_78, %c0_79] : memref<9x160x160xbf16, #tpu.memory_space<vmem>>, vector<1x160x160xbf16>
    %79 = vector.shape_cast %78 : vector<1x160x160xbf16> to vector<160x160xbf16>
    %cst_80 = arith.constant dense<0.000000e+00> : vector<224x160xf32>
    %80 = tpu.matmul %77, %79, %cst_80 {dimension_numbers = #tpu.dot_dimension_numbers<[1], [0], [0], [1], [0, 0, 1, 1], [], []>} : vector<224x160xbf16>, vector<160x160xbf16>, vector<224x160xf32> -> vector<224x160xf32>
    %81 = arith.addf %72, %80 : vector<224x160xf32>
    %cst_81 = arith.constant dense<0.000000e+00> : vector<160xf32>
    %82 = vector.multi_reduction <add>, %81, %cst_81 [0] : vector<224x160xf32> to vector<160xf32>
    %83 = vector.shape_cast %82 : vector<160xf32> to vector<1x160xf32>
    %84 = arith.mulf %81, %81 : vector<224x160xf32>
    %cst_82 = arith.constant dense<0.000000e+00> : vector<160xf32>
    %85 = vector.multi_reduction <add>, %84, %cst_82 [0] : vector<224x160xf32> to vector<160xf32>
    %86 = vector.shape_cast %85 : vector<160xf32> to vector<1x160xf32>
    %cst_83 = arith.constant 0.00510204071 : f32
    %87 = vector.broadcast %cst_83 : f32 to vector<1x160xf32>
    %88 = arith.mulf %83, %87 : vector<1x160xf32>
    %cst_84 = arith.constant 0.00510204071 : f32
    %89 = vector.broadcast %cst_84 : f32 to vector<1x160xf32>
    %90 = arith.mulf %86, %89 : vector<1x160xf32>
    %91 = arith.mulf %88, %88 : vector<1x160xf32>
    %92 = arith.subf %90, %91 : vector<1x160xf32>
    %cst_85 = arith.constant 0.000000e+00 : f32
    %93 = vector.broadcast %cst_85 : f32 to vector<1x160xf32>
    %94 = arith.maximumf %92, %93 : vector<1x160xf32>
    %cst_86 = arith.constant 9.99999974E-6 : f32
    %95 = vector.broadcast %cst_86 : f32 to vector<1x160xf32>
    %96 = arith.addf %94, %95 : vector<1x160xf32>
    %97 = math.rsqrt %96 : vector<1x160xf32>
    %c0_87 = arith.constant 0 : index
    %c0_88 = arith.constant 0 : index
    %98 = vector.load %arg2[%c0_87, %c0_88] : memref<1x160xf32, #tpu.memory_space<vmem>>, vector<1x160xf32>
    %99 = arith.mulf %97, %98 : vector<1x160xf32>
    %c0_89 = arith.constant 0 : index
    %c0_90 = arith.constant 0 : index
    %100 = vector.load %arg3[%c0_89, %c0_90] : memref<1x160xf32, #tpu.memory_space<vmem>>, vector<1x160xf32>
    %101 = arith.mulf %88, %99 : vector<1x160xf32>
    %102 = arith.subf %100, %101 : vector<1x160xf32>
    %103 = vector.broadcast %99 : vector<1x160xf32> to vector<224x160xf32>
    %104 = arith.mulf %81, %103 : vector<224x160xf32>
    %105 = vector.broadcast %102 : vector<1x160xf32> to vector<224x160xf32>
    %106 = arith.addf %104, %105 : vector<224x160xf32>
    %cst_91 = arith.constant 0.000000e+00 : f32
    %107 = vector.broadcast %cst_91 : f32 to vector<224x160xf32>
    %108 = arith.maximumf %106, %107 : vector<224x160xf32>
    %c0_92 = arith.constant 0 : index
    %c0_93 = arith.constant 0 : index
    %109 = vector.load %arg4[%c0_92, %c0_93] : memref<224x160xf32, #tpu.memory_space<vmem>>, vector<224x160xf32>
    tpu.vector_store %arg4[%c0_92, %c0_93], %108 {strides = array<i32>} : memref<224x160xf32, #tpu.memory_space<vmem>>, vector<224x160xf32>,
    return
  }
}

</mosaic_0001>

<llo_original>
// kernel: fused_relu_gconv_bn_relu.1
$region0: #{fused_relu_gconv_bn_relu.1}
  #allocation0 [shape = 'u32[]', space=smem, size = 0x4, offset = 0x4, fixed_abs, tag = 'smem constant byte address 0x4 - core index']
  #allocation1 [shape = 'u32[144,128]{1,0:T(1,128)}', space=vmem, size = 0x12000, scoped, tag = 'internal scratch']
  %s0 = inlined_call_operand.vmem [shape: bf16[2,2,15,17,160], index: 0, kind: input, shape index: {}]
  %s1 = inlined_call_operand.vmem [shape: bf16[9,160,160], index: 1, kind: input, shape index: {}]
  %s2 = inlined_call_operand.vmem [shape: f32[1,160], index: 2, kind: input, shape index: {}]
  %s3 = inlined_call_operand.vmem [shape: f32[1,160], index: 3, kind: input, shape index: {}]
  %s4 = inlined_call_operand.vmem [shape: f32[224,160], index: 4, kind: output, shape index: {}]
  %s5 = sld [smem:[#allocation0]]
  $region26: #{fused_relu_gconv_bn_relu.1} parent=0
    _
  %s7 = ssub.s32 1, %s5
  %s8 = scalar_select 0, %s7, %s5
  // Predicated region
  $region2: #{fused_relu_gconv_bn_relu.1} parent=0 // pred_check
    _
  $region3: #{fused_relu_gconv_bn_relu.1} parent=0 // pred_check_branch
    %10 = sbr.rel (0) target = $region5
  $region4: #{fused_relu_gconv_bn_relu.1} parent=0 // pred_region
    _
  $region5: #{fused_relu_gconv_bn_relu.1} parent=0 // pred_fallthru
    _
  // Predicated region
  $region6: #{fused_relu_gconv_bn_relu.1} parent=0 // pred_check
    _
  $region7: #{fused_relu_gconv_bn_relu.1} parent=0 // pred_check_branch
    %12 = sbr.rel (0) target = $region9
  $region8: #{fused_relu_gconv_bn_relu.1} parent=0 // pred_region
    _
  $region9: #{fused_relu_gconv_bn_relu.1} parent=0 // pred_fallthru
    _
  // Predicated region
  $region10: #{fused_relu_gconv_bn_relu.1} parent=0 // pred_check
    _
  $region11: #{fused_relu_gconv_bn_relu.1} parent=0 // pred_check_branch
    %14 = sbr.rel (0) target = $region13
  $region12: #{fused_relu_gconv_bn_relu.1} parent=0 // pred_region
    _
  $region13: #{fused_relu_gconv_bn_relu.1} parent=0 // pred_fallthru
    _
  // Predicated region
  $region14: #{fused_relu_gconv_bn_relu.1} parent=0 // pred_check
    _
  $region15: #{fused_relu_gconv_bn_relu.1} parent=0 // pred_check_branch
    %16 = sbr.rel (0) target = $region17
  $region16: #{fused_relu_gconv_bn_relu.1} parent=0 // pred_region
    _
  $region17: #{fused_relu_gconv_bn_relu.1} parent=0 // pred_fallthru
    _
  %v18 = vld [vmem:[%s0] sm:$0xff]
  %v19 = vld [vmem:[%s0 + $0x8] sm:$0xff]
  %v20 = vld [vmem:[%s0 + $0x18] sm:$0xff]
  %v21 = vld [vmem:[%s0 + $0x20] sm:$0xff]
  %v22 = vld [vmem:[%s0 + $0x30] sm:$0xff]
  %v23 = vld [vmem:[%s0 + $0x38] sm:$0xff]
  %v24 = vld [vmem:[%s0 + $0x48] sm:$0xff]
  %v25 = vld [vmem:[%s0 + $0x50] sm:$0xff]
  %v26 = vld [vmem:[%s0 + $0x60] sm:$0xff]
  %v27 = vld [vmem:[%s0 + $0x68] sm:$0xff]
  %v28 = vld [vmem:[%s0 + $0x78] sm:$0xff]
  %v29 = vld [vmem:[%s0 + $0x80] sm:$0xff]
  %v30 = vld [vmem:[%s0 + $0x90] sm:$0xff]
  %v31 = vld [vmem:[%s0 + $0x98] sm:$0xff]
  %v32 = vld [vmem:[%s0 + $0xa8] sm:$0xff]
  %v33 = vld [vmem:[%s0 + $0xb0] sm:$0xff]
  %v34 = vld [vmem:[%s0 + $0xc0] sm:$0xff]
  %v35 = vld [vmem:[%s0 + $0xc8] sm:$0xff]
  %v36 = vld [vmem:[%s0 + $0xd8] sm:$0xff]
  %v37 = vld [vmem:[%s0 + $0xe0] sm:$0xff]
  %v38 = vld [vmem:[%s0 + $0xf0] sm:$0xff]
  %v39 = vld [vmem:[%s0 + $0xf8] sm:$0xff]
  %v40 = vld [vmem:[%s0 + $0x108] sm:$0xff]
  %v41 = vld [vmem:[%s0 + $0x110] sm:$0xff]
  %v42 = vld [vmem:[%s0 + $0x120] sm:$0xff]
  %v43 = vld [vmem:[%s0 + $0x128] sm:$0xff]
  %v44 = vld [vmem:[%s0 + $0x138] sm:$0xff]
  %v45 = vld [vmem:[%s0 + $0x140] sm:$0xff]
  %v46 = vmax.bf16 %v18, 0
  %v47 = vmax.bf16 %v19, 0
  %v48 = vmax.bf16 %v20, 0
  %v49 = vmax.bf16 %v21, 0
  %v50 = vmax.bf16 %v22, 0
  %v51 = vmax.bf16 %v23, 0
  %v52 = vmax.bf16 %v24, 0
  %v53 = vmax.bf16 %v25, 0
  %v54 = vmax.bf16 %v26, 0
  %v55 = vmax.bf16 %v27, 0
  %v56 = vmax.bf16 %v28, 0
  %v57 = vmax.bf16 %v29, 0
  %v58 = vmax.bf16 %v30, 0
  %v59 = vmax.bf16 %v31, 0
  %v60 = vmax.bf16 %v32, 0
  %v61 = vmax.bf16 %v33, 0
  %v62 = vmax.bf16 %v34, 0
  %v63 = vmax.bf16 %v35, 0
  %v64 = vmax.bf16 %v36, 0
  %v65 = vmax.bf16 %v37, 0
  %v66 = vmax.bf16 %v38, 0
  %v67 = vmax.bf16 %v39, 0
  %v68 = vmax.bf16 %v40, 0
  %v69 = vmax.bf16 %v41, 0
  %v70 = vmax.bf16 %v42, 0
  %v71 = vmax.bf16 %v43, 0
  %v72 = vmax.bf16 %v44, 0
  %v73 = vmax.bf16 %v45, 0
  %v74 = vld [vmem:[%s1] sm:$0xff]
  %v75 = vld [vmem:[%s1 + $0x8] sm:$0xff]
  %v76 = vld [vmem:[%s1 + $0x10] sm:$0xff]
  %v77 = vld [vmem:[%s1 + $0x18] sm:$0xff]
  %v78 = vld [vmem:[%s1 + $0x20] sm:$0xff]
  %v79 = vld [vmem:[%s1 + $0x28] sm:$0xff]
  %v80 = vld [vmem:[%s1 + $0x30] sm:$0xff]
  %v81 = vld [vmem:[%s1 + $0x38] sm:$0xff]
  %v82 = vld [vmem:[%s1 + $0x40] sm:$0xff]
  %v83 = vld [vmem:[%s1 + $0x48] sm:$0xff]
  %v84 = vld [vmem:[%s1 + $0x50] sm:$0xff]
  %v85 = vld [vmem:[%s1 + $0x58] sm:$0xff]
  %v86 = vld [vmem:[%s1 + $0x60] sm:$0xff]
  %v87 = vld [vmem:[%s1 + $0x68] sm:$0xff]
  %v88 = vld [vmem:[%s1 + $0x70] sm:$0xff]
  %v89 = vld [vmem:[%s1 + $0x78] sm:$0xff]
  %v90 = vld [vmem:[%s1 + $0x80] sm:$0xff]
  %v91 = vld [vmem:[%s1 + $0x88] sm:$0xff]
  %v92 = vld [vmem:[%s1 + $0x90] sm:$0xff]
  %v93 = vld [vmem:[%s1 + $0x98] sm:$0xff]
  %s94 = scalar_lea.vmem %s0, 360
  %v95 = vld [vmem:[%s94] sm:$0xff]
  %v96 = vld [vmem:[%s94 + $0x8] sm:$0xff]
  %v97 = vld [vmem:[%s94 + $0x18] sm:$0xff]
  %v98 = vld [vmem:[%s94 + $0x20] sm:$0xff]
  %v99 = vld [vmem:[%s94 + $0x30] sm:$0xff]
  %v100 = vld [vmem:[%s94 + $0x38] sm:$0xff]
  %v101 = vld [vmem:[%s94 + $0x48] sm:$0xff]
  %v102 = vld [vmem:[%s94 + $0x50] sm:$0xff]
  %v103 = vld [vmem:[%s94 + $0x60] sm:$0xff]
  %v104 = vld [vmem:[%s94 + $0x68] sm:$0xff]
  %v105 = vld [vmem:[%s94 + $0x78] sm:$0xff]
  %v106 = vld [vmem:[%s94 + $0x80] sm:$0xff]
  %v107 = vld [vmem:[%s94 + $0x90] sm:$0xff]
  %v108 = vld [vmem:[%s94 + $0x98] sm:$0xff]
  %v109 = vld [vmem:[%s94 + $0xa8] sm:$0xff]
  %v110 = vld [vmem:[%s94 + $0xb0] sm:$0xff]
  %v111 = vld [vmem:[%s94 + $0xc0] sm:$0xff]
  %v112 = vld [vmem:[%s94 + $0xc8] sm:$0xff]
  %v113 = vld [vmem:[%s94 + $0xd8] sm:$0xff]
  %v114 = vld [vmem:[%s94 + $0xe0] sm:$0xff]
  %v115 = vld [vmem:[%s94 + $0xf0] sm:$0xff]
  %v116 = vld [vmem:[%s94 + $0xf8] sm:$0xff]
  %v117 = vld [vmem:[%s94 + $0x108] sm:$0xff]
  %v118 = vld [vmem:[%s94 + $0x110] sm:$0xff]
  %v119 = vld [vmem:[%s94 + $0x120] sm:$0xff]
  %v120 = vld [vmem:[%s94 + $0x128] sm:$0xff]
  %v121 = vld [vmem:[%s94 + $0x138] sm:$0xff]
  %v122 = vld [vmem:[%s94 + $0x140] sm:$0xff]
  %v123 = vmax.bf16 %v95, 0
  %v124 = vmax.bf16 %v96, 0
  %v125 = vmax.bf16 %v97, 0
  %v126 = vmax.bf16 %v98, 0
  %v127 = vmax.bf16 %v99, 0
  %v128 = vmax.bf16 %v100, 0
  %v129 = vmax.bf16 %v101, 0
  %v130 = vmax.bf16 %v102, 0
  %v131 = vmax.bf16 %v103, 0
  %v132 = vmax.bf16 %v104, 0
  %v133 = vmax.bf16 %v105, 0
  %v134 = vmax.bf16 %v106, 0
  %v135 = vmax.bf16 %v107, 0
  %v136 = vmax.bf16 %v108, 0
  %v137 = vmax.bf16 %v109, 0
  %v138 = vmax.bf16 %v110, 0
  %v139 = vmax.bf16 %v111, 0
  %v140 = vmax.bf16 %v112, 0
  %v141 = vmax.bf16 %v113, 0
  %v142 = vmax.bf16 %v114, 0
  %v143 = vmax.bf16 %v115, 0
  %v144 = vmax.bf16 %v116, 0
  %v145 = vmax.bf16 %v117, 0
  %v146 = vmax.bf16 %v118, 0
  %v147 = vmax.bf16 %v119, 0
  %v148 = vmax.bf16 %v120, 0
  %v149 = vmax.bf16 %v121, 0
  %v150 = vmax.bf16 %v122, 0
  %s151 = scalar_lea.vmem %s1, 160
  %v152 = vld [vmem:[%s151] sm:$0xff]
  %v153 = vld [vmem:[%s151 + $0x8] sm:$0xff]
  %v154 = vld [vmem:[%s151 + $0x10] sm:$0xff]
  %v155 = vld [vmem:[%s151 + $0x18] sm:$0xff]
  %v156 = vld [vmem:[%s151 + $0x20] sm:$0xff]
  %v157 = vld [vmem:[%s151 + $0x28] sm:$0xff]
  %v158 = vld [vmem:[%s151 + $0x30] sm:$0xff]
  %v159 = vld [vmem:[%s151 + $0x38] sm:$0xff]
  %v160 = vld [vmem:[%s151 + $0x40] sm:$0xff]
  %v161 = vld [vmem:[%s151 + $0x48] sm:$0xff]
  %v162 = vld [vmem:[%s151 + $0x50] sm:$0xff]
  %v163 = vld [vmem:[%s151 + $0x58] sm:$0xff]
  %v164 = vld [vmem:[%s151 + $0x60] sm:$0xff]
  %v165 = vld [vmem:[%s151 + $0x68] sm:$0xff]
  %v166 = vld [vmem:[%s151 + $0x70] sm:$0xff]
  %v167 = vld [vmem:[%s151 + $0x78] sm:$0xff]
  %v168 = vld [vmem:[%s151 + $0x80] sm:$0xff]
  %v169 = vld [vmem:[%s151 + $0x88] sm:$0xff]
  %v170 = vld [vmem:[%s151 + $0x90] sm:$0xff]
  %v171 = vld [vmem:[%s151 + $0x98] sm:$0xff]
  %v200 = vunpack.c.l.b16 %v123
  %v201 = vunpack.c.h.b16 %v123
  %v202 = vunpack.c.l.b16 %v124
  %v203 = vunpack.c.h.b16 %v124
  %v204 = vunpack.c.l.b16 %v125
  %v205 = vunpack.c.h.b16 %v125
  %v206 = vunpack.c.l.b16 %v126
  %v207 = vunpack.c.h.b16 %v126
  %v208 = vunpack.c.l.b16 %v127
  %v209 = vunpack.c.h.b16 %v127
  %v210 = vunpack.c.l.b16 %v128
  %v211 = vunpack.c.h.b16 %v128
  %v212 = vunpack.c.l.b16 %v129
  %v213 = vunpack.c.h.b16 %v129
  %v214 = vunpack.c.l.b16 %v130
  %v215 = vunpack.c.h.b16 %v130
  %v216 = vunpack.c.l.b16 %v131
  %v217 = vunpack.c.h.b16 %v131
  %v218 = vunpack.c.l.b16 %v132
  %v219 = vunpack.c.h.b16 %v132
  %v220 = vunpack.c.l.b16 %v133
  %v221 = vunpack.c.h.b16 %v133
  %v222 = vunpack.c.l.b16 %v134
  %v223 = vunpack.c.h.b16 %v134
  %v224 = vunpack.c.l.b16 %v135
  %v225 = vunpack.c.h.b16 %v135
  %v226 = vunpack.c.l.b16 %v136
  %v227 = vunpack.c.h.b16 %v136
  %v228 = vunpack.c.l.b16 %v137
  %v229 = vunpack.c.h.b16 %v137
  %v230 = vunpack.c.l.b16 %v138
  %v231 = vunpack.c.h.b16 %v138
  %v232 = vunpack.c.l.b16 %v139
  %v233 = vunpack.c.h.b16 %v139
  %v234 = vunpack.c.l.b16 %v140
  %v235 = vunpack.c.h.b16 %v140
  %v236 = vunpack.c.l.b16 %v141
  %v237 = vunpack.c.h.b16 %v141
  %v238 = vunpack.c.l.b16 %v142
  %v239 = vunpack.c.h.b16 %v142
  %v240 = vunpack.c.l.b16 %v143
  %v241 = vunpack.c.h.b16 %v143
  %v242 = vunpack.c.l.b16 %v144
  %v243 = vunpack.c.h.b16 %v144
  %v244 = vunpack.c.l.b16 %v145
  %v245 = vunpack.c.h.b16 %v145
  %v246 = vunpack.c.l.b16 %v146
  %v247 = vunpack.c.h.b16 %v146
  %v248 = vunpack.c.l.b16 %v147
  %v249 = vunpack.c.h.b16 %v147
  %v250 = vunpack.c.l.b16 %v148
  %v251 = vunpack.c.h.b16 %v148
  %v252 = vunpack.c.l.b16 %v149
  %v253 = vunpack.c.h.b16 %v149
  %v254 = vunpack.c.l.b16 %v150
  %v255 = vunpack.c.h.b16 %v150
  %v256 = vpack.c.b16 %v202, %v200
  %v257 = vpack.c.b16 %v203, %v201
  %v258 = vpack.c.b16 %v206, %v204
  %v259 = vpack.c.b16 %v207, %v205
  %v260 = vpack.c.b16 %v210, %v208
  %v261 = vpack.c.b16 %v211, %v209
  %v262 = vpack.c.b16 %v214, %v212
  %v263 = vpack.c.b16 %v215, %v213
  %v264 = vpack.c.b16 %v218, %v216
  %v265 = vpack.c.b16 %v219, %v217
  %v266 = vpack.c.b16 %v222, %v220
  %v267 = vpack.c.b16 %v223, %v221
  %v268 = vpack.c.b16 %v226, %v224
  %v269 = vpack.c.b16 %v227, %v225
  %v270 = vpack.c.b16 %v230, %v228
  %v271 = vpack.c.b16 %v231, %v229
  %v272 = vpack.c.b16 %v234, %v232
  %v273 = vpack.c.b16 %v235, %v233
  %v274 = vpack.c.b16 %v238, %v236
  %v275 = vpack.c.b16 %v239, %v237
  %v276 = vpack.c.b16 %v242, %v240
  %v277 = vpack.c.b16 %v243, %v241
  %v278 = vpack.c.b16 %v246, %v244
  %v279 = vpack.c.b16 %v247, %v245
  %v280 = vpack.c.b16 %v250, %v248
  %v281 = vpack.c.b16 %v251, %v249
  %v282 = vpack.c.b16 %v254, %v252
  %v283 = vpack.c.b16 %v255, %v253
  %v318 = vunpack.c.l.b16 %v152
  %v319 = vunpack.c.h.b16 %v152
  %v320 = vunpack.c.l.b16 %v153
  %v321 = vunpack.c.h.b16 %v153
  %v322 = vunpack.c.l.b16 %v154
  %v323 = vunpack.c.h.b16 %v154
  %v324 = vunpack.c.l.b16 %v155
  %v325 = vunpack.c.h.b16 %v155
  %v326 = vunpack.c.l.b16 %v156
  %v327 = vunpack.c.h.b16 %v156
  %v328 = vunpack.c.l.b16 %v157
  %v329 = vunpack.c.h.b16 %v157
  %v330 = vunpack.c.l.b16 %v158
  %v331 = vunpack.c.h.b16 %v158
  %v332 = vunpack.c.l.b16 %v159
  %v333 = vunpack.c.h.b16 %v159
  %v334 = vunpack.c.l.b16 %v160
  %v335 = vunpack.c.h.b16 %v160
  %v336 = vunpack.c.l.b16 %v161
  %v337 = vunpack.c.h.b16 %v161
  %v338 = vunpack.c.l.b16 %v162
  %v339 = vunpack.c.h.b16 %v162
  %v340 = vunpack.c.l.b16 %v163
  %v341 = vunpack.c.h.b16 %v163
  %v342 = vunpack.c.l.b16 %v164
  %v343 = vunpack.c.h.b16 %v164
  %v344 = vunpack.c.l.b16 %v165
  %v345 = vunpack.c.h.b16 %v165
  %v346 = vunpack.c.l.b16 %v166
  %v347 = vunpack.c.h.b16 %v166
  %v348 = vunpack.c.l.b16 %v167
  %v349 = vunpack.c.h.b16 %v167
  %v350 = vunpack.c.l.b16 %v168
  %v351 = vunpack.c.h.b16 %v168
  %v352 = vunpack.c.l.b16 %v169
  %v353 = vunpack.c.h.b16 %v169
  %v354 = vunpack.c.l.b16 %v170
  %v355 = vunpack.c.h.b16 %v170
  %v356 = vunpack.c.l.b16 %v171
  %v357 = vunpack.c.h.b16 %v171
  %v358 = vpack.c.b16 %v320, %v318
  %v359 = vpack.c.b16 %v321, %v319
  %v360 = vpack.c.b16 %v324, %v322
  %v361 = vpack.c.b16 %v325, %v323
  %v362 = vpack.c.b16 %v328, %v326
  %v363 = vpack.c.b16 %v329, %v327
  %v364 = vpack.c.b16 %v332, %v330
  %v365 = vpack.c.b16 %v333, %v331
  %v366 = vpack.c.b16 %v336, %v334
  %v367 = vpack.c.b16 %v337, %v335
  %v368 = vpack.c.b16 %v340, %v338
  %v369 = vpack.c.b16 %v341, %v339
  %v370 = vpack.c.b16 %v344, %v342
  %v371 = vpack.c.b16 %v345, %v343
  %v372 = vpack.c.b16 %v348, %v346
  %v373 = vpack.c.b16 %v349, %v347
  %v374 = vpack.c.b16 %v352, %v350
  %v375 = vpack.c.b16 %v353, %v351
  %v376 = vpack.c.b16 %v356, %v354
  %v377 = vpack.c.b16 %v357, %v355
  %vm398 = vcmask 261120
  %v400 = vsel %vm398, %v257, 0
  %v403 = vsel %vm398, %v259, 0
  %v406 = vsel %vm398, %v261, 0
  %v409 = vsel %vm398, %v263, 0
  %v412 = vsel %vm398, %v265, 0
  %v415 = vsel %vm398, %v267, 0
  %v418 = vsel %vm398, %v269, 0
  %v421 = vsel %vm398, %v271, 0
  %v424 = vsel %vm398, %v273, 0
  %v427 = vsel %vm398, %v275, 0
  %v430 = vsel %vm398, %v277, 0
  %v433 = vsel %vm398, %v279, 0
  %v436 = vsel %vm398, %v281, 0
  %v439 = vsel %vm398, %v283, 0
  %441 = vmatprep.subr.bf16.mxu0 %v373
  %442 = vmatpush1.bf16.msra.mxu0 %v372
  %443 = vmatprep.subr.bf16.mxu0 %v371
  %444 = vmatpush1.bf16.msra.mxu0 %v370
  %445 = vmatprep.subr.bf16.mxu0 %v369
  %446 = vmatpush1.bf16.msra.mxu0 %v368
  %447 = vmatprep.subr.bf16.mxu0 %v367
  %448 = vmatpush1.bf16.msra.mxu0 %v366
  %449 = vmatprep.subr.bf16.mxu0 %v365
  %450 = vmatpush1.bf16.msra.mxu0 %v364
  %451 = vmatprep.subr.bf16.mxu0 %v363
  %452 = vmatpush1.bf16.msra.mxu0 %v362
  %453 = vmatprep.subr.bf16.mxu0 %v361
  %454 = vmatpush1.bf16.msra.mxu0 %v360
  %455 = vmatprep.subr.bf16.mxu0 %v359
  %456 = vmatpush1.bf16.msra.mxu0 %v358
  %457 = vmatprep.subr.bf16.mxu0 0
  %458 = vmatpush2.bf16.msra.mxu0 0
  %459 = vmatprep.subr.bf16.mxu0 0
  %460 = vmatpush2.bf16.msra.mxu0 0
  %461 = vmatprep.subr.bf16.mxu0 0
  %462 = vmatpush2.bf16.msra.mxu0 0
  %463 = vmatprep.subr.bf16.mxu0 0
  %464 = vmatpush2.bf16.msra.mxu0 0
  %465 = vmatprep.subr.bf16.mxu0 0
  %466 = vmatpush2.bf16.msra.mxu0 0
  %467 = vmatprep.subr.bf16.mxu0 0
  %468 = vmatpush2.bf16.msra.mxu0 0
  %469 = vmatprep.subr.bf16.mxu0 %v377
  %470 = vmatpush2.bf16.msra.mxu0 %v376
  %471 = vmatprep.subr.bf16.mxu0 %v375
  %472 = vmatpush2.bf16.msra.mxu0 %v374
  %473 = vmatprep.mubr.bf16.mxu0 %v400
  %474 = vmatmul.mubr.bf16.gmra.mxu0 %v256
  %v475 = vpop.f32.mrf.mxu0
  %v476 = vadd.f32 0.0, %v475
  %v477 = vpop.f32.mrf.mxu0
  %v478 = vadd.f32 0.0, %v477
  %v479 = vpop.f32.mrf.mxu0
  %v480 = vadd.f32 0.0, %v479
  %v481 = vpop.f32.mrf.mxu0
  %v482 = vadd.f32 0.0, %v481
  %483 = vmatprep.mubr.bf16.mxu0 %v403
  %484 = vmatmul.mubr.bf16.gmra.mxu0 %v258
  %v485 = vpop.f32.mrf.mxu0
  %v486 = vadd.f32 0.0, %v485
  %v487 = vpop.f32.mrf.mxu0
  %v488 = vadd.f32 0.0, %v487
  %v489 = vpop.f32.mrf.mxu0
  %v490 = vadd.f32 0.0, %v489
  %v491 = vpop.f32.mrf.mxu0
  %v492 = vadd.f32 0.0, %v491
  %493 = vmatprep.mubr.bf16.mxu0 %v406
  %494 = vmatmul.mubr.bf16.gmra.mxu0 %v260
  %v495 = vpop.f32.mrf.mxu0
  %v496 = vadd.f32 0.0, %v495
  %v497 = vpop.f32.mrf.mxu0
  %v498 = vadd.f32 0.0, %v497
  %v499 = vpop.f32.mrf.mxu0
  %v500 = vadd.f32 0.0, %v499
  %v501 = vpop.f32.mrf.mxu0
  %v502 = vadd.f32 0.0, %v501
  %503 = vmatprep.mubr.bf16.mxu0 %v409
  %504 = vmatmul.mubr.bf16.gmra.mxu0 %v262
  %v505 = vpop.f32.mrf.mxu0
  %v506 = vadd.f32 0.0, %v505
  %v507 = vpop.f32.mrf.mxu0
  %v508 = vadd.f32 0.0, %v507
  %v509 = vpop.f32.mrf.mxu0
  %v510 = vadd.f32 0.0, %v509
  %v511 = vpop.f32.mrf.mxu0
  %v512 = vadd.f32 0.0, %v511
  %513 = vmatprep.mubr.bf16.mxu0 %v412
  %514 = vmatmul.mubr.bf16.gmra.mxu0 %v264
  %v515 = vpop.f32.mrf.mxu0
  %v516 = vadd.f32 0.0, %v515
  %v517 = vpop.f32.mrf.mxu0
  %v518 = vadd.f32 0.0, %v517
  %v519 = vpop.f32.mrf.mxu0
  %v520 = vadd.f32 0.0, %v519
  %v521 = vpop.f32.mrf.mxu0
  %v522 = vadd.f32 0.0, %v521
  %523 = vmatprep.mubr.bf16.mxu0 %v415
  %524 = vmatmul.mubr.bf16.gmra.mxu0 %v266
  %v525 = vpop.f32.mrf.mxu0
  %v526 = vadd.f32 0.0, %v525
  %v527 = vpop.f32.mrf.mxu0
  %v528 = vadd.f32 0.0, %v527
  %v529 = vpop.f32.mrf.mxu0
  %v530 = vadd.f32 0.0, %v529
  %v531 = vpop.f32.mrf.mxu0
  %v532 = vadd.f32 0.0, %v531
  %533 = vmatprep.mubr.bf16.mxu0 %v418
  %534 = vmatmul.mubr.bf16.gmra.mxu0 %v268
  %v535 = vpop.f32.mrf.mxu0
  %v536 = vadd.f32 0.0, %v535
  %v537 = vpop.f32.mrf.mxu0
  %v538 = vadd.f32 0.0, %v537
  %v539 = vpop.f32.mrf.mxu0
  %v540 = vadd.f32 0.0, %v539
  %v541 = vpop.f32.mrf.mxu0
  %v542 = vadd.f32 0.0, %v541
  %543 = vmatprep.mubr.bf16.mxu0 %v421
  %544 = vmatmul.mubr.bf16.gmra.mxu0 %v270
  %v545 = vpop.f32.mrf.mxu0
  %v546 = vadd.f32 0.0, %v545
  %v547 = vpop.f32.mrf.mxu0
  %v548 = vadd.f32 0.0, %v547
  %v549 = vpop.f32.mrf.mxu0
  %v550 = vadd.f32 0.0, %v549
  %v551 = vpop.f32.mrf.mxu0
  %v552 = vadd.f32 0.0, %v551
  %553 = vmatprep.mubr.bf16.mxu0 %v424
  %554 = vmatmul.mubr.bf16.gmra.mxu0 %v272
  %v555 = vpop.f32.mrf.mxu0
  %v556 = vadd.f32 0.0, %v555
  %v557 = vpop.f32.mrf.mxu0
  %v558 = vadd.f32 0.0, %v557
  %v559 = vpop.f32.mrf.mxu0
  %v560 = vadd.f32 0.0, %v559
  %v561 = vpop.f32.mrf.mxu0
  %v562 = vadd.f32 0.0, %v561
  %563 = vmatprep.mubr.bf16.mxu0 %v427
  %564 = vmatmul.mubr.bf16.gmra.mxu0 %v274
  %v565 = vpop.f32.mrf.mxu0
  %v566 = vadd.f32 0.0, %v565
  %v567 = vpop.f32.mrf.mxu0
  %v568 = vadd.f32 0.0, %v567
  %v569 = vpop.f32.mrf.mxu0
  %v570 = vadd.f32 0.0, %v569
  %v571 = vpop.f32.mrf.mxu0
  %v572 = vadd.f32 0.0, %v571
  %573 = vmatprep.mubr.bf16.mxu0 %v430
  %574 = vmatmul.mubr.bf16.gmra.mxu0 %v276
  %v575 = vpop.f32.mrf.mxu0
  %v576 = vadd.f32 0.0, %v575
  %v577 = vpop.f32.mrf.mxu0
  %v578 = vadd.f32 0.0, %v577
  %v579 = vpop.f32.mrf.mxu0
  %v580 = vadd.f32 0.0, %v579
  %v581 = vpop.f32.mrf.mxu0
  %v582 = vadd.f32 0.0, %v581
  %583 = vmatprep.mubr.bf16.mxu0 %v433
  %584 = vmatmul.mubr.bf16.gmra.mxu0 %v278
  %v585 = vpop.f32.mrf.mxu0
  %v586 = vadd.f32 0.0, %v585
  %v587 = vpop.f32.mrf.mxu0
  %v588 = vadd.f32 0.0, %v587
  %v589 = vpop.f32.mrf.mxu0
  %v590 = vadd.f32 0.0, %v589
  %v591 = vpop.f32.mrf.mxu0
  %v592 = vadd.f32 0.0, %v591
  %593 = vmatprep.mubr.bf16.mxu0 %v436
  %594 = vmatmul.mubr.bf16.gmra.mxu0 %v280
  %v595 = vpop.f32.mrf.mxu0
  %v596 = vadd.f32 0.0, %v595
  %v597 = vpop.f32.mrf.mxu0
  %v598 = vadd.f32 0.0, %v597
  %v599 = vpop.f32.mrf.mxu0
  %v600 = vadd.f32 0.0, %v599
  %v601 = vpop.f32.mrf.mxu0
  %v602 = vadd.f32 0.0, %v601
  %603 = vmatprep.mubr.bf16.mxu0 %v439
  %604 = vmatmul.mubr.bf16.gmra.mxu0 %v282
  %v605 = vpop.f32.mrf.mxu0
  %v606 = vadd.f32 0.0, %v605
  %v607 = vpop.f32.mrf.mxu0
  %v608 = vadd.f32 0.0, %v607
  %v609 = vpop.f32.mrf.mxu0
  %v610 = vadd.f32 0.0, %v609
  %v611 = vpop.f32.mrf.mxu0
  %v612 = vadd.f32 0.0, %v611
  %613 = vdwg.mxu0
  %v642 = vunpack.c.l.b16 %v46
  %v643 = vunpack.c.h.b16 %v46
  %v644 = vunpack.c.l.b16 %v47
  %v645 = vunpack.c.h.b16 %v47
  %v646 = vunpack.c.l.b16 %v48
  %v647 = vunpack.c.h.b16 %v48
  %v648 = vunpack.c.l.b16 %v49
  %v649 = vunpack.c.h.b16 %v49
  %v650 = vunpack.c.l.b16 %v50
  %v651 = vunpack.c.h.b16 %v50
  %v652 = vunpack.c.l.b16 %v51
  %v653 = vunpack.c.h.b16 %v51
  %v654 = vunpack.c.l.b16 %v52
  %v655 = vunpack.c.h.b16 %v52
  %v656 = vunpack.c.l.b16 %v53
  %v657 = vunpack.c.h.b16 %v53
  %v658 = vunpack.c.l.b16 %v54
  %v659 = vunpack.c.h.b16 %v54
  %v660 = vunpack.c.l.b16 %v55
  %v661 = vunpack.c.h.b16 %v55
  %v662 = vunpack.c.l.b16 %v56
  %v663 = vunpack.c.h.b16 %v56
  %v664 = vunpack.c.l.b16 %v57
  %v665 = vunpack.c.h.b16 %v57
  %v666 = vunpack.c.l.b16 %v58
  %v667 = vunpack.c.h.b16 %v58
  %v668 = vunpack.c.l.b16 %v59
  %v669 = vunpack.c.h.b16 %v59
  %v670 = vunpack.c.l.b16 %v60
  %v671 = vunpack.c.h.b16 %v60
  %v672 = vunpack.c.l.b16 %v61
  %v673 = vunpack.c.h.b16 %v61
  %v674 = vunpack.c.l.b16 %v62
  %v675 = vunpack.c.h.b16 %v62
  %v676 = vunpack.c.l.b16 %v63
  %v677 = vunpack.c.h.b16 %v63
  %v678 = vunpack.c.l.b16 %v64
  %v679 = vunpack.c.h.b16 %v64
  %v680 = vunpack.c.l.b16 %v65
  %v681 = vunpack.c.h.b16 %v65
  %v682 = vunpack.c.l.b16 %v66
  %v683 = vunpack.c.h.b16 %v66
  %v684 = vunpack.c.l.b16 %v67
  %v685 = vunpack.c.h.b16 %v67
  %v686 = vunpack.c.l.b16 %v68
  %v687 = vunpack.c.h.b16 %v68
  %v688 = vunpack.c.l.b16 %v69
  %v689 = vunpack.c.h.b16 %v69
  %v690 = vunpack.c.l.b16 %v70
  %v691 = vunpack.c.h.b16 %v70
  %v692 = vunpack.c.l.b16 %v71
  %v693 = vunpack.c.h.b16 %v71
  %v694 = vunpack.c.l.b16 %v72
  %v695 = vunpack.c.h.b16 %v72
  %v696 = vunpack.c.l.b16 %v73
  %v697 = vunpack.c.h.b16 %v73
  %v698 = vpack.c.b16 %v644, %v642
  %v699 = vpack.c.b16 %v645, %v643
  %v700 = vpack.c.b16 %v648, %v646
  %v701 = vpack.c.b16 %v649, %v647
  %v702 = vpack.c.b16 %v652, %v650
  %v703 = vpack.c.b16 %v653, %v651
  %v704 = vpack.c.b16 %v656, %v654
  %v705 = vpack.c.b16 %v657, %v655
  %v706 = vpack.c.b16 %v660, %v658
  %v707 = vpack.c.b16 %v661, %v659
  %v708 = vpack.c.b16 %v664, %v662
  %v709 = vpack.c.b16 %v665, %v663
  %v710 = vpack.c.b16 %v668, %v666
  %v711 = vpack.c.b16 %v669, %v667
  %v712 = vpack.c.b16 %v672, %v670
  %v713 = vpack.c.b16 %v673, %v671
  %v714 = vpack.c.b16 %v676, %v674
  %v715 = vpack.c.b16 %v677, %v675
  %v716 = vpack.c.b16 %v680, %v678
  %v717 = vpack.c.b16 %v681, %v679
  %v718 = vpack.c.b16 %v684, %v682
  %v719 = vpack.c.b16 %v685, %v683
  %v720 = vpack.c.b16 %v688, %v686
  %v721 = vpack.c.b16 %v689, %v687
  %v722 = vpack.c.b16 %v692, %v690
  %v723 = vpack.c.b16 %v693, %v691
  %v724 = vpack.c.b16 %v696, %v694
  %v725 = vpack.c.b16 %v697, %v695
  %v760 = vunpack.c.l.b16 %v74
  %v761 = vunpack.c.h.b16 %v74
  %v762 = vunpack.c.l.b16 %v75
  %v763 = vunpack.c.h.b16 %v75
  %v764 = vunpack.c.l.b16 %v76
  %v765 = vunpack.c.h.b16 %v76
  %v766 = vunpack.c.l.b16 %v77
  %v767 = vunpack.c.h.b16 %v77
  %v768 = vunpack.c.l.b16 %v78
  %v769 = vunpack.c.h.b16 %v78
  %v770 = vunpack.c.l.b16 %v79
  %v771 = vunpack.c.h.b16 %v79
  %v772 = vunpack.c.l.b16 %v80
  %v773 = vunpack.c.h.b16 %v80
  %v774 = vunpack.c.l.b16 %v81
  %v775 = vunpack.c.h.b16 %v81
  %v776 = vunpack.c.l.b16 %v82
  %v777 = vunpack.c.h.b16 %v82
  %v778 = vunpack.c.l.b16 %v83
  %v779 = vunpack.c.h.b16 %v83
  %v780 = vunpack.c.l.b16 %v84
  %v781 = vunpack.c.h.b16 %v84
  %v782 = vunpack.c.l.b16 %v85
  %v783 = vunpack.c.h.b16 %v85
  %v784 = vunpack.c.l.b16 %v86
  %v785 = vunpack.c.h.b16 %v86
  %v786 = vunpack.c.l.b16 %v87
  %v787 = vunpack.c.h.b16 %v87
  %v788 = vunpack.c.l.b16 %v88
  %v789 = vunpack.c.h.b16 %v88
  %v790 = vunpack.c.l.b16 %v89
  %v791 = vunpack.c.h.b16 %v89
  %v792 = vunpack.c.l.b16 %v90
  %v793 = vunpack.c.h.b16 %v90
  %v794 = vunpack.c.l.b16 %v91
  %v795 = vunpack.c.h.b16 %v91
  %v796 = vunpack.c.l.b16 %v92
  %v797 = vunpack.c.h.b16 %v92
  %v798 = vunpack.c.l.b16 %v93
  %v799 = vunpack.c.h.b16 %v93
  %v800 = vpack.c.b16 %v762, %v760
  %v801 = vpack.c.b16 %v763, %v761
  %v802 = vpack.c.b16 %v766, %v764
  %v803 = vpack.c.b16 %v767, %v765
  %v804 = vpack.c.b16 %v770, %v768
  %v805 = vpack.c.b16 %v771, %v769
  %v806 = vpack.c.b16 %v774, %v772
  %v807 = vpack.c.b16 %v775, %v773
  %v808 = vpack.c.b16 %v778, %v776
  %v809 = vpack.c.b16 %v779, %v777
  %v810 = vpack.c.b16 %v782, %v780
  %v811 = vpack.c.b16 %v783, %v781
  %v812 = vpack.c.b16 %v786, %v784
  %v813 = vpack.c.b16 %v787, %v785
  %v814 = vpack.c.b16 %v790, %v788
  %v815 = vpack.c.b16 %v791, %v789
  %v816 = vpack.c.b16 %v794, %v792
  %v817 = vpack.c.b16 %v795, %v793
  %v818 = vpack.c.b16 %v798, %v796
  %v819 = vpack.c.b16 %v799, %v797
  %v841 = vsel %vm398, %v699, 0
  %v844 = vsel %vm398, %v701, 0
  %v847 = vsel %vm398, %v703, 0
  %v850 = vsel %vm398, %v705, 0
  %v853 = vsel %vm398, %v707, 0
  %v856 = vsel %vm398, %v709, 0
  %v859 = vsel %vm398, %v711, 0
  %v862 = vsel %vm398, %v713, 0
  %v865 = vsel %vm398, %v715, 0
  %v868 = vsel %vm398, %v717, 0
  %v871 = vsel %vm398, %v719, 0
  %v874 = vsel %vm398, %v721, 0
  %v877 = vsel %vm398, %v723, 0
  %v880 = vsel %vm398, %v725, 0
  %882 = vmatprep.subr.bf16.mxu0 %v815
  %883 = vmatpush1.bf16.msra.mxu0 %v814
  %884 = vmatprep.subr.bf16.mxu0 %v813
  %885 = vmatpush1.bf16.msra.mxu0 %v812
  %886 = vmatprep.subr.bf16.mxu0 %v811
  %887 = vmatpush1.bf16.msra.mxu0 %v810
  %888 = vmatprep.subr.bf16.mxu0 %v809
  %889 = vmatpush1.bf16.msra.mxu0 %v808
  %890 = vmatprep.subr.bf16.mxu0 %v807
  %891 = vmatpush1.bf16.msra.mxu0 %v806
  %892 = vmatprep.subr.bf16.mxu0 %v805
  %893 = vmatpush1.bf16.msra.mxu0 %v804
  %894 = vmatprep.subr.bf16.mxu0 %v803
  %895 = vmatpush1.bf16.msra.mxu0 %v802
  %896 = vmatprep.subr.bf16.mxu0 %v801
  %897 = vmatpush1.bf16.msra.mxu0 %v800
  %898 = vmatprep.subr.bf16.mxu0 0
  %899 = vmatpush2.bf16.msra.mxu0 0
  %900 = vmatprep.subr.bf16.mxu0 0
  %901 = vmatpush2.bf16.msra.mxu0 0
  %902 = vmatprep.subr.bf16.mxu0 0
  %903 = vmatpush2.bf16.msra.mxu0 0
  %904 = vmatprep.subr.bf16.mxu0 0
  %905 = vmatpush2.bf16.msra.mxu0 0
  %906 = vmatprep.subr.bf16.mxu0 0
  %907 = vmatpush2.bf16.msra.mxu0 0
  %908 = vmatprep.subr.bf16.mxu0 0
  %909 = vmatpush2.bf16.msra.mxu0 0
  %910 = vmatprep.subr.bf16.mxu0 %v819
  %911 = vmatpush2.bf16.msra.mxu0 %v818
  %912 = vmatprep.subr.bf16.mxu0 %v817
  %913 = vmatpush2.bf16.msra.mxu0 %v816
  %914 = vmatprep.mubr.bf16.mxu0 %v841
  %915 = vmatmul.mubr.bf16.gmra.mxu0 %v698
  %v916 = vpop.f32.mrf.mxu0
  %v917 = vadd.f32 %v476, %v916
  %v918 = vpop.f32.mrf.mxu0
  %v919 = vadd.f32 %v478, %v918
  %v920 = vpop.f32.mrf.mxu0
  %v921 = vadd.f32 %v480, %v920
  %v922 = vpop.f32.mrf.mxu0
  %v923 = vadd.f32 %v482, %v922
  %924 = vmatprep.mubr.bf16.mxu0 %v844
  %925 = vmatmul.mubr.bf16.gmra.mxu0 %v700
  %v926 = vpop.f32.mrf.mxu0
  %v927 = vadd.f32 %v486, %v926
  %v928 = vpop.f32.mrf.mxu0
  %v929 = vadd.f32 %v488, %v928
  %v930 = vpop.f32.mrf.mxu0
  %v931 = vadd.f32 %v490, %v930
  %v932 = vpop.f32.mrf.mxu0
  %v933 = vadd.f32 %v492, %v932
  %934 = vmatprep.mubr.bf16.mxu0 %v847
  %935 = vmatmul.mubr.bf16.gmra.mxu0 %v702
  %v936 = vpop.f32.mrf.mxu0
  %v937 = vadd.f32 %v496, %v936
  %v938 = vpop.f32.mrf.mxu0
  %v939 = vadd.f32 %v498, %v938
  %v940 = vpop.f32.mrf.mxu0
  %v941 = vadd.f32 %v500, %v940
  %v942 = vpop.f32.mrf.mxu0
  %v943 = vadd.f32 %v502, %v942
  %944 = vmatprep.mubr.bf16.mxu0 %v850
  %945 = vmatmul.mubr.bf16.gmra.mxu0 %v704
  %v946 = vpop.f32.mrf.mxu0
  %v947 = vadd.f32 %v506, %v946
  %v948 = vpop.f32.mrf.mxu0
  %v949 = vadd.f32 %v508, %v948
  %v950 = vpop.f32.mrf.mxu0
  %v951 = vadd.f32 %v510, %v950
  %v952 = vpop.f32.mrf.mxu0
  %v953 = vadd.f32 %v512, %v952
  %954 = vmatprep.mubr.bf16.mxu0 %v853
  %955 = vmatmul.mubr.bf16.gmra.mxu0 %v706
  %v956 = vpop.f32.mrf.mxu0
  %v957 = vadd.f32 %v516, %v956
  %v958 = vpop.f32.mrf.mxu0
  %v959 = vadd.f32 %v518, %v958
  %v960 = vpop.f32.mrf.mxu0
  %v961 = vadd.f32 %v520, %v960
  %v962 = vpop.f32.mrf.mxu0
  %v963 = vadd.f32 %v522, %v962
  %964 = vmatprep.mubr.bf16.mxu0 %v856
  %965 = vmatmul.mubr.bf16.gmra.mxu0 %v708
  %v966 = vpop.f32.mrf.mxu0
  %v967 = vadd.f32 %v526, %v966
  %v968 = vpop.f32.mrf.mxu0
  %v969 = vadd.f32 %v528, %v968
  %v970 = vpop.f32.mrf.mxu0
  %v971 = vadd.f32 %v530, %v970
  %v972 = vpop.f32.mrf.mxu0
  %v973 = vadd.f32 %v532, %v972
  %974 = vmatprep.mubr.bf16.mxu0 %v859
  %975 = vmatmul.mubr.bf16.gmra.mxu0 %v710
  %v976 = vpop.f32.mrf.mxu0
  %v977 = vadd.f32 %v536, %v976
  %v978 = vpop.f32.mrf.mxu0
  %v979 = vadd.f32 %v538, %v978
  %v980 = vpop.f32.mrf.mxu0
  %v981 = vadd.f32 %v540, %v980
  %v982 = vpop.f32.mrf.mxu0
  %v983 = vadd.f32 %v542, %v982
  %984 = vmatprep.mubr.bf16.mxu0 %v862
  %985 = vmatmul.mubr.bf16.gmra.mxu0 %v712
  %v986 = vpop.f32.mrf.mxu0
  %v987 = vadd.f32 %v546, %v986
  %v988 = vpop.f32.mrf.mxu0
  %v989 = vadd.f32 %v548, %v988
  %v990 = vpop.f32.mrf.mxu0
  %v991 = vadd.f32 %v550, %v990
  %v992 = vpop.f32.mrf.mxu0
  %v993 = vadd.f32 %v552, %v992
  %994 = vmatprep.mubr.bf16.mxu0 %v865
  %995 = vmatmul.mubr.bf16.gmra.mxu0 %v714
  %v996 = vpop.f32.mrf.mxu0
  %v997 = vadd.f32 %v556, %v996
  %v998 = vpop.f32.mrf.mxu0
  %v999 = vadd.f32 %v558, %v998
  %v1000 = vpop.f32.mrf.mxu0
  %v1001 = vadd.f32 %v560, %v1000
  %v1002 = vpop.f32.mrf.mxu0
  %v1003 = vadd.f32 %v562, %v1002
  %1004 = vmatprep.mubr.bf16.mxu0 %v868
  %1005 = vmatmul.mubr.bf16.gmra.mxu0 %v716
  %v1006 = vpop.f32.mrf.mxu0
  %v1007 = vadd.f32 %v566, %v1006
  %v1008 = vpop.f32.mrf.mxu0
  %v1009 = vadd.f32 %v568, %v1008
  %v1010 = vpop.f32.mrf.mxu0
  %v1011 = vadd.f32 %v570, %v1010
  %v1012 = vpop.f32.mrf.mxu0
  %v1013 = vadd.f32 %v572, %v1012
  %1014 = vmatprep.mubr.bf16.mxu0 %v871
  %1015 = vmatmul.mubr.bf16.gmra.mxu0 %v718
  %v1016 = vpop.f32.mrf.mxu0
  %v1017 = vadd.f32 %v576, %v1016
  %v1018 = vpop.f32.mrf.mxu0
  %v1019 = vadd.f32 %v578, %v1018
  %v1020 = vpop.f32.mrf.mxu0
  %v1021 = vadd.f32 %v580, %v1020
  %v1022 = vpop.f32.mrf.mxu0
  %v1023 = vadd.f32 %v582, %v1022
  %1024 = vmatprep.mubr.bf16.mxu0 %v874
  %1025 = vmatmul.mubr.bf16.gmra.mxu0 %v720
  %v1026 = vpop.f32.mrf.mxu0
  %v1027 = vadd.f32 %v586, %v1026
  %v1028 = vpop.f32.mrf.mxu0
  %v1029 = vadd.f32 %v588, %v1028
  %v1030 = vpop.f32.mrf.mxu0
  %v1031 = vadd.f32 %v590, %v1030
  %v1032 = vpop.f32.mrf.mxu0
  %v1033 = vadd.f32 %v592, %v1032
  %1034 = vmatprep.mubr.bf16.mxu0 %v877
  %1035 = vmatmul.mubr.bf16.gmra.mxu0 %v722
  %v1036 = vpop.f32.mrf.mxu0
  %v1037 = vadd.f32 %v596, %v1036
  %v1038 = vpop.f32.mrf.mxu0
  %v1039 = vadd.f32 %v598, %v1038
  %v1040 = vpop.f32.mrf.mxu0
  %v1041 = vadd.f32 %v600, %v1040
  %v1042 = vpop.f32.mrf.mxu0
  %v1043 = vadd.f32 %v602, %v1042
  %1044 = vmatprep.mubr.bf16.mxu0 %v880
  %1045 = vmatmul.mubr.bf16.gmra.mxu0 %v724
  %v1046 = vpop.f32.mrf.mxu0
  %v1047 = vadd.f32 %v606, %v1046
  %v1048 = vpop.f32.mrf.mxu0
  %v1049 = vadd.f32 %v608, %v1048
  %v1050 = vpop.f32.mrf.mxu0
  %v1051 = vadd.f32 %v610, %v1050
  %v1052 = vpop.f32.mrf.mxu0
  %v1053 = vadd.f32 %v612, %v1052
  %1054 = vdwg.mxu0
  %v1055 = vld [vmem:[%s0] sm:$0xff]
  %v1056 = vld [vmem:[%s0 + $0x8] sm:$0xff]
  %v1057 = vld [vmem:[%s0 + $0x10] sm:$0x11]
  %v1058 = vld [vmem:[%s0 + $0x18] sm:$0xff]
  %v1059 = vld [vmem:[%s0 + $0x20] sm:$0xff]
  %v1060 = vld [vmem:[%s0 + $0x28] sm:$0x11]
  %v1061 = vld [vmem:[%s0 + $0x30] sm:$0xff]
  %v1062 = vld [vmem:[%s0 + $0x38] sm:$0xff]
  %v1063 = vld [vmem:[%s0 + $0x40] sm:$0x11]
  %v1064 = vld [vmem:[%s0 + $0x48] sm:$0xff]
  %v1065 = vld [vmem:[%s0 + $0x50] sm:$0xff]
  %v1066 = vld [vmem:[%s0 + $0x58] sm:$0x11]
  %v1067 = vld [vmem:[%s0 + $0x60] sm:$0xff]
  %v1068 = vld [vmem:[%s0 + $0x68] sm:$0xff]
  %v1069 = vld [vmem:[%s0 + $0x70] sm:$0x11]
  %v1070 = vld [vmem:[%s0 + $0x78] sm:$0xff]
  %v1071 = vld [vmem:[%s0 + $0x80] sm:$0xff]
  %v1072 = vld [vmem:[%s0 + $0x88] sm:$0x11]
  %v1073 = vld [vmem:[%s0 + $0x90] sm:$0xff]
  %v1074 = vld [vmem:[%s0 + $0x98] sm:$0xff]
  %v1075 = vld [vmem:[%s0 + $0xa0] sm:$0x11]
  %v1076 = vld [vmem:[%s0 + $0xa8] sm:$0xff]
  %v1077 = vld [vmem:[%s0 + $0xb0] sm:$0xff]
  %v1078 = vld [vmem:[%s0 + $0xb8] sm:$0x11]
  %v1079 = vld [vmem:[%s0 + $0xc0] sm:$0xff]
  %v1080 = vld [vmem:[%s0 + $0xc8] sm:$0xff]
  %v1081 = vld [vmem:[%s0 + $0xd0] sm:$0x11]
  %v1082 = vld [vmem:[%s0 + $0xd8] sm:$0xff]
  %v1083 = vld [vmem:[%s0 + $0xe0] sm:$0xff]
  %v1084 = vld [vmem:[%s0 + $0xe8] sm:$0x11]
  %v1085 = vld [vmem:[%s0 + $0xf0] sm:$0xff]
  %v1086 = vld [vmem:[%s0 + $0xf8] sm:$0xff]
  %v1087 = vld [vmem:[%s0 + $0x100] sm:$0x11]
  %v1088 = vld [vmem:[%s0 + $0x108] sm:$0xff]
  %v1089 = vld [vmem:[%s0 + $0x110] sm:$0xff]
  %v1090 = vld [vmem:[%s0 + $0x118] sm:$0x11]
  %v1091 = vld [vmem:[%s0 + $0x120] sm:$0xff]
  %v1092 = vld [vmem:[%s0 + $0x128] sm:$0xff]
  %v1093 = vld [vmem:[%s0 + $0x130] sm:$0x11]
  %v1094 = vld [vmem:[%s0 + $0x138] sm:$0xff]
  %v1095 = vld [vmem:[%s0 + $0x140] sm:$0xff]
  %v1096 = vld [vmem:[%s0 + $0x148] sm:$0x11]
  %v1097 = vmax.bf16 %v1055, 0
  %v1098 = vmax.bf16 %v1056, 0
  %v1099 = vmax.bf16 %v1057, 0
  %v1100 = vmax.bf16 %v1058, 0
  %v1101 = vmax.bf16 %v1059, 0
  %v1102 = vmax.bf16 %v1060, 0
  %v1103 = vmax.bf16 %v1061, 0
  %v1104 = vmax.bf16 %v1062, 0
  %v1105 = vmax.bf16 %v1063, 0
  %v1106 = vmax.bf16 %v1064, 0
  %v1107 = vmax.bf16 %v1065, 0
  %v1108 = vmax.bf16 %v1066, 0
  %v1109 = vmax.bf16 %v1067, 0
  %v1110 = vmax.bf16 %v1068, 0
  %v1111 = vmax.bf16 %v1069, 0
  %v1112 = vmax.bf16 %v1070, 0
  %v1113 = vmax.bf16 %v1071, 0
  %v1114 = vmax.bf16 %v1072, 0
  %v1115 = vmax.bf16 %v1073, 0
  %v1116 = vmax.bf16 %v1074, 0
  %v1117 = vmax.bf16 %v1075, 0
  %v1118 = vmax.bf16 %v1076, 0
  %v1119 = vmax.bf16 %v1077, 0
  %v1120 = vmax.bf16 %v1078, 0
  %v1121 = vmax.bf16 %v1079, 0
  %v1122 = vmax.bf16 %v1080, 0
  %v1123 = vmax.bf16 %v1081, 0
  %v1124 = vmax.bf16 %v1082, 0
  %v1125 = vmax.bf16 %v1083, 0
  %v1126 = vmax.bf16 %v1084, 0
  %v1127 = vmax.bf16 %v1085, 0
  %v1128 = vmax.bf16 %v1086, 0
  %v1129 = vmax.bf16 %v1087, 0
  %v1130 = vmax.bf16 %v1088, 0
  %v1131 = vmax.bf16 %v1089, 0
  %v1132 = vmax.bf16 %v1090, 0
  %v1133 = vmax.bf16 %v1091, 0
  %v1134 = vmax.bf16 %v1092, 0
  %v1135 = vmax.bf16 %v1093, 0
  %v1136 = vmax.bf16 %v1094, 0
  %v1137 = vmax.bf16 %v1095, 0
  %v1138 = vmax.bf16 %v1096, 0
  %vm1139 = vsmask.f32 3328
  %vm1140 = vsmask.f32 7440
  %vm1141 = vmor %vm1139, %vm1140
  %v1143 = vshrl.u32 %v1097, 16
  %v1145 = vrot.slane %v1143, 4
  %v1146 = vshll.u32 %v1097, 16
  %v1148 = vrot.slane %v1146, 5
  %v1149 = vor.u32 %v1145, %v1148
  %v1150 = vrot.slane %v1149, 4
  %v1152 = vshll.u32 %v1098, 16
  %v1154 = vrot.slane %v1152, 5
  %v1155 = vsel %vm1141, %v1150, %v1154
  %v1156 = vshrl.u32 %v1098, 16
  %v1158 = vrot.slane %v1156, 4
  %v1159 = vor.u32 %v1158, %v1154
  %v1160 = vrot.slane %v1159, 4
  %v1162 = vshll.u32 %v1099, 16
  %v1164 = vrot.slane %v1162, 5
  %v1165 = vsel %vm1141, %v1160, %v1164
  %v1167 = vshrl.u32 %v1100, 16
  %v1169 = vrot.slane %v1167, 4
  %v1170 = vshll.u32 %v1100, 16
  %v1172 = vrot.slane %v1170, 5
  %v1173 = vor.u32 %v1169, %v1172
  %v1174 = vrot.slane %v1173, 4
  %v1176 = vshll.u32 %v1101, 16
  %v1178 = vrot.slane %v1176, 5
  %v1179 = vsel %vm1141, %v1174, %v1178
  %v1180 = vshrl.u32 %v1101, 16
  %v1182 = vrot.slane %v1180, 4
  %v1183 = vor.u32 %v1182, %v1178
  %v1184 = vrot.slane %v1183, 4
  %v1186 = vshll.u32 %v1102, 16
  %v1188 = vrot.slane %v1186, 5
  %v1189 = vsel %vm1141, %v1184, %v1188
  %v1191 = vshrl.u32 %v1103, 16
  %v1193 = vrot.slane %v1191, 4
  %v1194 = vshll.u32 %v1103, 16
  %v1196 = vrot.slane %v1194, 5
  %v1197 = vor.u32 %v1193, %v1196
  %v1198 = vrot.slane %v1197, 4
  %v1200 = vshll.u32 %v1104, 16
  %v1202 = vrot.slane %v1200, 5
  %v1203 = vsel %vm1141, %v1198, %v1202
  %v1204 = vshrl.u32 %v1104, 16
  %v1206 = vrot.slane %v1204, 4
  %v1207 = vor.u32 %v1206, %v1202
  %v1208 = vrot.slane %v1207, 4
  %v1210 = vshll.u32 %v1105, 16
  %v1212 = vrot.slane %v1210, 5
  %v1213 = vsel %vm1141, %v1208, %v1212
  %v1215 = vshrl.u32 %v1106, 16
  %v1217 = vrot.slane %v1215, 4
  %v1218 = vshll.u32 %v1106, 16
  %v1220 = vrot.slane %v1218, 5
  %v1221 = vor.u32 %v1217, %v1220
  %v1222 = vrot.slane %v1221, 4
  %v1224 = vshll.u32 %v1107, 16
  %v1226 = vrot.slane %v1224, 5
  %v1227 = vsel %vm1141, %v1222, %v1226
  %v1228 = vshrl.u32 %v1107, 16
  %v1230 = vrot.slane %v1228, 4
  %v1231 = vor.u32 %v1230, %v1226
  %v1232 = vrot.slane %v1231, 4
  %v1234 = vshll.u32 %v1108, 16
  %v1236 = vrot.slane %v1234, 5
  %v1237 = vsel %vm1141, %v1232, %v1236
  %v1239 = vshrl.u32 %v1109, 16
  %v1241 = vrot.slane %v1239, 4
  %v1242 = vshll.u32 %v1109, 16
  %v1244 = vrot.slane %v1242, 5
  %v1245 = vor.u32 %v1241, %v1244
  %v1246 = vrot.slane %v1245, 4
  %v1248 = vshll.u32 %v1110, 16
  %v1250 = vrot.slane %v1248, 5
  %v1251 = vsel %vm1141, %v1246, %v1250
  %v1252 = vshrl.u32 %v1110, 16
  %v1254 = vrot.slane %v1252, 4
  %v1255 = vor.u32 %v1254, %v1250
  %v1256 = vrot.slane %v1255, 4
  %v1258 = vshll.u32 %v1111, 16
  %v1260 = vrot.slane %v1258, 5
  %v1261 = vsel %vm1141, %v1256, %v1260
  %v1263 = vshrl.u32 %v1112, 16
  %v1265 = vrot.slane %v1263, 4
  %v1266 = vshll.u32 %v1112, 16
  %v1268 = vrot.slane %v1266, 5
  %v1269 = vor.u32 %v1265, %v1268
  %v1270 = vrot.slane %v1269, 4
  %v1272 = vshll.u32 %v1113, 16
  %v1274 = vrot.slane %v1272, 5
  %v1275 = vsel %vm1141, %v1270, %v1274
  %v1276 = vshrl.u32 %v1113, 16
  %v1278 = vrot.slane %v1276, 4
  %v1279 = vor.u32 %v1278, %v1274
  %v1280 = vrot.slane %v1279, 4
  %v1282 = vshll.u32 %v1114, 16
  %v1284 = vrot.slane %v1282, 5
  %v1285 = vsel %vm1141, %v1280, %v1284
  %v1287 = vshrl.u32 %v1115, 16
  %v1289 = vrot.slane %v1287, 4
  %v1290 = vshll.u32 %v1115, 16
  %v1292 = vrot.slane %v1290, 5
  %v1293 = vor.u32 %v1289, %v1292
  %v1294 = vrot.slane %v1293, 4
  %v1296 = vshll.u32 %v1116, 16
  %v1298 = vrot.slane %v1296, 5
  %v1299 = vsel %vm1141, %v1294, %v1298
  %v1300 = vshrl.u32 %v1116, 16
  %v1302 = vrot.slane %v1300, 4
  %v1303 = vor.u32 %v1302, %v1298
  %v1304 = vrot.slane %v1303, 4
  %v1306 = vshll.u32 %v1117, 16
  %v1308 = vrot.slane %v1306, 5
  %v1309 = vsel %vm1141, %v1304, %v1308
  %v1311 = vshrl.u32 %v1118, 16
  %v1313 = vrot.slane %v1311, 4
  %v1314 = vshll.u32 %v1118, 16
  %v1316 = vrot.slane %v1314, 5
  %v1317 = vor.u32 %v1313, %v1316
  %v1318 = vrot.slane %v1317, 4
  %v1320 = vshll.u32 %v1119, 16
  %v1322 = vrot.slane %v1320, 5
  %v1323 = vsel %vm1141, %v1318, %v1322
  %v1324 = vshrl.u32 %v1119, 16
  %v1326 = vrot.slane %v1324, 4
  %v1327 = vor.u32 %v1326, %v1322
  %v1328 = vrot.slane %v1327, 4
  %v1330 = vshll.u32 %v1120, 16
  %v1332 = vrot.slane %v1330, 5
  %v1333 = vsel %vm1141, %v1328, %v1332
  %v1335 = vshrl.u32 %v1121, 16
  %v1337 = vrot.slane %v1335, 4
  %v1338 = vshll.u32 %v1121, 16
  %v1340 = vrot.slane %v1338, 5
  %v1341 = vor.u32 %v1337, %v1340
  %v1342 = vrot.slane %v1341, 4
  %v1344 = vshll.u32 %v1122, 16
  %v1346 = vrot.slane %v1344, 5
  %v1347 = vsel %vm1141, %v1342, %v1346
  %v1348 = vshrl.u32 %v1122, 16
  %v1350 = vrot.slane %v1348, 4
  %v1351 = vor.u32 %v1350, %v1346
  %v1352 = vrot.slane %v1351, 4
  %v1354 = vshll.u32 %v1123, 16
  %v1356 = vrot.slane %v1354, 5
  %v1357 = vsel %vm1141, %v1352, %v1356
  %v1359 = vshrl.u32 %v1124, 16
  %v1361 = vrot.slane %v1359, 4
  %v1362 = vshll.u32 %v1124, 16
  %v1364 = vrot.slane %v1362, 5
  %v1365 = vor.u32 %v1361, %v1364
  %v1366 = vrot.slane %v1365, 4
  %v1368 = vshll.u32 %v1125, 16
  %v1370 = vrot.slane %v1368, 5
  %v1371 = vsel %vm1141, %v1366, %v1370
  %v1372 = vshrl.u32 %v1125, 16
  %v1374 = vrot.slane %v1372, 4
  %v1375 = vor.u32 %v1374, %v1370
  %v1376 = vrot.slane %v1375, 4
  %v1378 = vshll.u32 %v1126, 16
  %v1380 = vrot.slane %v1378, 5
  %v1381 = vsel %vm1141, %v1376, %v1380
  %v1383 = vshrl.u32 %v1127, 16
  %v1385 = vrot.slane %v1383, 4
  %v1386 = vshll.u32 %v1127, 16
  %v1388 = vrot.slane %v1386, 5
  %v1389 = vor.u32 %v1385, %v1388
  %v1390 = vrot.slane %v1389, 4
  %v1392 = vshll.u32 %v1128, 16
  %v1394 = vrot.slane %v1392, 5
  %v1395 = vsel %vm1141, %v1390, %v1394
  %v1396 = vshrl.u32 %v1128, 16
  %v1398 = vrot.slane %v1396, 4
  %v1399 = vor.u32 %v1398, %v1394
  %v1400 = vrot.slane %v1399, 4
  %v1402 = vshll.u32 %v1129, 16
  %v1404 = vrot.slane %v1402, 5
  %v1405 = vsel %vm1141, %v1400, %v1404
  %v1407 = vshrl.u32 %v1130, 16
  %v1409 = vrot.slane %v1407, 4
  %v1410 = vshll.u32 %v1130, 16
  %v1412 = vrot.slane %v1410, 5
  %v1413 = vor.u32 %v1409, %v1412
  %v1414 = vrot.slane %v1413, 4
  %v1416 = vshll.u32 %v1131, 16
  %v1418 = vrot.slane %v1416, 5
  %v1419 = vsel %vm1141, %v1414, %v1418
  %v1420 = vshrl.u32 %v1131, 16
  %v1422 = vrot.slane %v1420, 4
  %v1423 = vor.u32 %v1422, %v1418
  %v1424 = vrot.slane %v1423, 4
  %v1426 = vshll.u32 %v1132, 16
  %v1428 = vrot.slane %v1426, 5
  %v1429 = vsel %vm1141, %v1424, %v1428
  %v1431 = vshrl.u32 %v1133, 16
  %v1433 = vrot.slane %v1431, 4
  %v1434 = vshll.u32 %v1133, 16
  %v1436 = vrot.slane %v1434, 5
  %v1437 = vor.u32 %v1433, %v1436
  %v1438 = vrot.slane %v1437, 4
  %v1440 = vshll.u32 %v1134, 16
  %v1442 = vrot.slane %v1440, 5
  %v1443 = vsel %vm1141, %v1438, %v1442
  %v1444 = vshrl.u32 %v1134, 16
  %v1446 = vrot.slane %v1444, 4
  %v1447 = vor.u32 %v1446, %v1442
  %v1448 = vrot.slane %v1447, 4
  %v1450 = vshll.u32 %v1135, 16
  %v1452 = vrot.slane %v1450, 5
  %v1453 = vsel %vm1141, %v1448, %v1452
  %v1455 = vshrl.u32 %v1136, 16
  %v1457 = vrot.slane %v1455, 4
  %v1458 = vshll.u32 %v1136, 16
  %v1460 = vrot.slane %v1458, 5
  %v1461 = vor.u32 %v1457, %v1460
  %v1462 = vrot.slane %v1461, 4
  %v1464 = vshll.u32 %v1137, 16
  %v1466 = vrot.slane %v1464, 5
  %v1467 = vsel %vm1141, %v1462, %v1466
  %v1468 = vshrl.u32 %v1137, 16
  %v1470 = vrot.slane %v1468, 4
  %v1471 = vor.u32 %v1470, %v1466
  %v1472 = vrot.slane %v1471, 4
  %v1474 = vshll.u32 %v1138, 16
  %v1476 = vrot.slane %v1474, 5
  %v1477 = vsel %vm1141, %v1472, %v1476
  %s1478 = scalar_lea.vmem %s1, 320
  %v1479 = vld [vmem:[%s1478] sm:$0xff]
  %v1480 = vld [vmem:[%s1478 + $0x8] sm:$0xff]
  %v1481 = vld [vmem:[%s1478 + $0x10] sm:$0xff]
  %v1482 = vld [vmem:[%s1478 + $0x18] sm:$0xff]
  %v1483 = vld [vmem:[%s1478 + $0x20] sm:$0xff]
  %v1484 = vld [vmem:[%s1478 + $0x28] sm:$0xff]
  %v1485 = vld [vmem:[%s1478 + $0x30] sm:$0xff]
  %v1486 = vld [vmem:[%s1478 + $0x38] sm:$0xff]
  %v1487 = vld [vmem:[%s1478 + $0x40] sm:$0xff]
  %v1488 = vld [vmem:[%s1478 + $0x48] sm:$0xff]
  %v1489 = vld [vmem:[%s1478 + $0x50] sm:$0xff]
  %v1490 = vld [vmem:[%s1478 + $0x58] sm:$0xff]
  %v1491 = vld [vmem:[%s1478 + $0x60] sm:$0xff]
  %v1492 = vld [vmem:[%s1478 + $0x68] sm:$0xff]
  %v1493 = vld [vmem:[%s1478 + $0x70] sm:$0xff]
  %v1494 = vld [vmem:[%s1478 + $0x78] sm:$0xff]
  %v1495 = vld [vmem:[%s1478 + $0x80] sm:$0xff]
  %v1496 = vld [vmem:[%s1478 + $0x88] sm:$0xff]
  %v1497 = vld [vmem:[%s1478 + $0x90] sm:$0xff]
  %v1498 = vld [vmem:[%s1478 + $0x98] sm:$0xff]
  %v1499 = vunpack.c.l.b16 %v1155
  %v1500 = vunpack.c.h.b16 %v1155
  %v1501 = vunpack.c.l.b16 %v1165
  %v1502 = vunpack.c.h.b16 %v1165
  %v1503 = vunpack.c.l.b16 %v1179
  %v1504 = vunpack.c.h.b16 %v1179
  %v1505 = vunpack.c.l.b16 %v1189
  %v1506 = vunpack.c.h.b16 %v1189
  %v1507 = vunpack.c.l.b16 %v1203
  %v1508 = vunpack.c.h.b16 %v1203
  %v1509 = vunpack.c.l.b16 %v1213
  %v1510 = vunpack.c.h.b16 %v1213
  %v1511 = vunpack.c.l.b16 %v1227
  %v1512 = vunpack.c.h.b16 %v1227
  %v1513 = vunpack.c.l.b16 %v1237
  %v1514 = vunpack.c.h.b16 %v1237
  %v1515 = vunpack.c.l.b16 %v1251
  %v1516 = vunpack.c.h.b16 %v1251
  %v1517 = vunpack.c.l.b16 %v1261
  %v1518 = vunpack.c.h.b16 %v1261
  %v1519 = vunpack.c.l.b16 %v1275
  %v1520 = vunpack.c.h.b16 %v1275
  %v1521 = vunpack.c.l.b16 %v1285
  %v1522 = vunpack.c.h.b16 %v1285
  %v1523 = vunpack.c.l.b16 %v1299
  %v1524 = vunpack.c.h.b16 %v1299
  %v1525 = vunpack.c.l.b16 %v1309
  %v1526 = vunpack.c.h.b16 %v1309
  %v1527 = vunpack.c.l.b16 %v1323
  %v1528 = vunpack.c.h.b16 %v1323
  %v1529 = vunpack.c.l.b16 %v1333
  %v1530 = vunpack.c.h.b16 %v1333
  %v1531 = vunpack.c.l.b16 %v1347
  %v1532 = vunpack.c.h.b16 %v1347
  %v1533 = vunpack.c.l.b16 %v1357
  %v1534 = vunpack.c.h.b16 %v1357
  %v1535 = vunpack.c.l.b16 %v1371
  %v1536 = vunpack.c.h.b16 %v1371
  %v1537 = vunpack.c.l.b16 %v1381
  %v1538 = vunpack.c.h.b16 %v1381
  %v1539 = vunpack.c.l.b16 %v1395
  %v1540 = vunpack.c.h.b16 %v1395
  %v1541 = vunpack.c.l.b16 %v1405
  %v1542 = vunpack.c.h.b16 %v1405
  %v1543 = vunpack.c.l.b16 %v1419
  %v1544 = vunpack.c.h.b16 %v1419
  %v1545 = vunpack.c.l.b16 %v1429
  %v1546 = vunpack.c.h.b16 %v1429
  %v1547 = vunpack.c.l.b16 %v1443
  %v1548 = vunpack.c.h.b16 %v1443
  %v1549 = vunpack.c.l.b16 %v1453
  %v1550 = vunpack.c.h.b16 %v1453
  %v1551 = vunpack.c.l.b16 %v1467
  %v1552 = vunpack.c.h.b16 %v1467
  %v1553 = vunpack.c.l.b16 %v1477
  %v1554 = vunpack.c.h.b16 %v1477
  %v1555 = vpack.c.b16 %v1501, %v1499
  %v1556 = vpack.c.b16 %v1502, %v1500
  %v1557 = vpack.c.b16 %v1505, %v1503
  %v1558 = vpack.c.b16 %v1506, %v1504
  %v1559 = vpack.c.b16 %v1509, %v1507
  %v1560 = vpack.c.b16 %v1510, %v1508
  %v1561 = vpack.c.b16 %v1513, %v1511
  %v1562 = vpack.c.b16 %v1514, %v1512
  %v1563 = vpack.c.b16 %v1517, %v1515
  %v1564 = vpack.c.b16 %v1518, %v1516
  %v1565 = vpack.c.b16 %v1521, %v1519
  %v1566 = vpack.c.b16 %v1522, %v1520
  %v1567 = vpack.c.b16 %v1525, %v1523
  %v1568 = vpack.c.b16 %v1526, %v1524
  %v1569 = vpack.c.b16 %v1529, %v1527
  %v1570 = vpack.c.b16 %v1530, %v1528
  %v1571 = vpack.c.b16 %v1533, %v1531
  %v1572 = vpack.c.b16 %v1534, %v1532
  %v1573 = vpack.c.b16 %v1537, %v1535
  %v1574 = vpack.c.b16 %v1538, %v1536
  %v1575 = vpack.c.b16 %v1541, %v1539
  %v1576 = vpack.c.b16 %v1542, %v1540
  %v1577 = vpack.c.b16 %v1545, %v1543
  %v1578 = vpack.c.b16 %v1546, %v1544
  %v1579 = vpack.c.b16 %v1549, %v1547
  %v1580 = vpack.c.b16 %v1550, %v1548
  %v1581 = vpack.c.b16 %v1553, %v1551
  %v1582 = vpack.c.b16 %v1554, %v1552
  %v1617 = vunpack.c.l.b16 %v1479
  %v1618 = vunpack.c.h.b16 %v1479
  %v1619 = vunpack.c.l.b16 %v1480
  %v1620 = vunpack.c.h.b16 %v1480
  %v1621 = vunpack.c.l.b16 %v1481
  %v1622 = vunpack.c.h.b16 %v1481
  %v1623 = vunpack.c.l.b16 %v1482
  %v1624 = vunpack.c.h.b16 %v1482
  %v1625 = vunpack.c.l.b16 %v1483
  %v1626 = vunpack.c.h.b16 %v1483
  %v1627 = vunpack.c.l.b16 %v1484
  %v1628 = vunpack.c.h.b16 %v1484
  %v1629 = vunpack.c.l.b16 %v1485
  %v1630 = vunpack.c.h.b16 %v1485
  %v1631 = vunpack.c.l.b16 %v1486
  %v1632 = vunpack.c.h.b16 %v1486
  %v1633 = vunpack.c.l.b16 %v1487
  %v1634 = vunpack.c.h.b16 %v1487
  %v1635 = vunpack.c.l.b16 %v1488
  %v1636 = vunpack.c.h.b16 %v1488
  %v1637 = vunpack.c.l.b16 %v1489
  %v1638 = vunpack.c.h.b16 %v1489
  %v1639 = vunpack.c.l.b16 %v1490
  %v1640 = vunpack.c.h.b16 %v1490
  %v1641 = vunpack.c.l.b16 %v1491
  %v1642 = vunpack.c.h.b16 %v1491
  %v1643 = vunpack.c.l.b16 %v1492
  %v1644 = vunpack.c.h.b16 %v1492
  %v1645 = vunpack.c.l.b16 %v1493
  %v1646 = vunpack.c.h.b16 %v1493
  %v1647 = vunpack.c.l.b16 %v1494
  %v1648 = vunpack.c.h.b16 %v1494
  %v1649 = vunpack.c.l.b16 %v1495
  %v1650 = vunpack.c.h.b16 %v1495
  %v1651 = vunpack.c.l.b16 %v1496
  %v1652 = vunpack.c.h.b16 %v1496
  %v1653 = vunpack.c.l.b16 %v1497
  %v1654 = vunpack.c.h.b16 %v1497
  %v1655 = vunpack.c.l.b16 %v1498
  %v1656 = vunpack.c.h.b16 %v1498
  %v1657 = vpack.c.b16 %v1619, %v1617
  %v1658 = vpack.c.b16 %v1620, %v1618
  %v1659 = vpack.c.b16 %v1623, %v1621
  %v1660 = vpack.c.b16 %v1624, %v1622
  %v1661 = vpack.c.b16 %v1627, %v1625
  %v1662 = vpack.c.b16 %v1628, %v1626
  %v1663 = vpack.c.b16 %v1631, %v1629
  %v1664 = vpack.c.b16 %v1632, %v1630
  %v1665 = vpack.c.b16 %v1635, %v1633
  %v1666 = vpack.c.b16 %v1636, %v1634
  %v1667 = vpack.c.b16 %v1639, %v1637
  %v1668 = vpack.c.b16 %v1640, %v1638
  %v1669 = vpack.c.b16 %v1643, %v1641
  %v1670 = vpack.c.b16 %v1644, %v1642
  %v1671 = vpack.c.b16 %v1647, %v1645
  %v1672 = vpack.c.b16 %v1648, %v1646
  %v1673 = vpack.c.b16 %v1651, %v1649
  %v1674 = vpack.c.b16 %v1652, %v1650
  %v1675 = vpack.c.b16 %v1655, %v1653
  %v1676 = vpack.c.b16 %v1656, %v1654
  %v1698 = vsel %vm398, %v1556, 0
  %v1701 = vsel %vm398, %v1558, 0
  %v1704 = vsel %vm398, %v1560, 0
  %v1707 = vsel %vm398, %v1562, 0
  %v1710 = vsel %vm398, %v1564, 0
  %v1713 = vsel %vm398, %v1566, 0
  %v1716 = vsel %vm398, %v1568, 0
  %v1719 = vsel %vm398, %v1570, 0
  %v1722 = vsel %vm398, %v1572, 0
  %v1725 = vsel %vm398, %v1574, 0
  %v1728 = vsel %vm398, %v1576, 0
  %v1731 = vsel %vm398, %v1578, 0
  %v1734 = vsel %vm398, %v1580, 0
  %v1737 = vsel %vm398, %v1582, 0
  %1739 = vmatprep.subr.bf16.mxu0 %v1672
  %1740 = vmatpush1.bf16.msra.mxu0 %v1671
  %1741 = vmatprep.subr.bf16.mxu0 %v1670
  %1742 = vmatpush1.bf16.msra.mxu0 %v1669
  %1743 = vmatprep.subr.bf16.mxu0 %v1668
  %1744 = vmatpush1.bf16.msra.mxu0 %v1667
  %1745 = vmatprep.subr.bf16.mxu0 %v1666
  %1746 = vmatpush1.bf16.msra.mxu0 %v1665
  %1747 = vmatprep.subr.bf16.mxu0 %v1664
  %1748 = vmatpush1.bf16.msra.mxu0 %v1663
  %1749 = vmatprep.subr.bf16.mxu0 %v1662
  %1750 = vmatpush1.bf16.msra.mxu0 %v1661
  %1751 = vmatprep.subr.bf16.mxu0 %v1660
  %1752 = vmatpush1.bf16.msra.mxu0 %v1659
  %1753 = vmatprep.subr.bf16.mxu0 %v1658
  %1754 = vmatpush1.bf16.msra.mxu0 %v1657
  %1755 = vmatprep.subr.bf16.mxu0 0
  %1756 = vmatpush2.bf16.msra.mxu0 0
  %1757 = vmatprep.subr.bf16.mxu0 0
  %1758 = vmatpush2.bf16.msra.mxu0 0
  %1759 = vmatprep.subr.bf16.mxu0 0
  %1760 = vmatpush2.bf16.msra.mxu0 0
  %1761 = vmatprep.subr.bf16.mxu0 0
  %1762 = vmatpush2.bf16.msra.mxu0 0
  %1763 = vmatprep.subr.bf16.mxu0 0
  %1764 = vmatpush2.bf16.msra.mxu0 0
  %1765 = vmatprep.subr.bf16.mxu0 0
  %1766 = vmatpush2.bf16.msra.mxu0 0
  %1767 = vmatprep.subr.bf16.mxu0 %v1676
  %1768 = vmatpush2.bf16.msra.mxu0 %v1675
  %1769 = vmatprep.subr.bf16.mxu0 %v1674
  %1770 = vmatpush2.bf16.msra.mxu0 %v1673
  %1771 = vmatprep.mubr.bf16.mxu0 %v1698
  %1772 = vmatmul.mubr.bf16.gmra.mxu0 %v1555
  %v1773 = vpop.f32.mrf.mxu0
  %v1774 = vadd.f32 0.0, %v1773
  %v1775 = vpop.f32.mrf.mxu0
  %v1776 = vadd.f32 0.0, %v1775
  %v1777 = vpop.f32.mrf.mxu0
  %v1778 = vadd.f32 0.0, %v1777
  %v1779 = vpop.f32.mrf.mxu0
  %v1780 = vadd.f32 0.0, %v1779
  %1781 = vmatprep.mubr.bf16.mxu0 %v1701
  %1782 = vmatmul.mubr.bf16.gmra.mxu0 %v1557
  %v1783 = vpop.f32.mrf.mxu0
  %v1784 = vadd.f32 0.0, %v1783
  %v1785 = vpop.f32.mrf.mxu0
  %v1786 = vadd.f32 0.0, %v1785
  %v1787 = vpop.f32.mrf.mxu0
  %v1788 = vadd.f32 0.0, %v1787
  %v1789 = vpop.f32.mrf.mxu0
  %v1790 = vadd.f32 0.0, %v1789
  %1791 = vmatprep.mubr.bf16.mxu0 %v1704
  %1792 = vmatmul.mubr.bf16.gmra.mxu0 %v1559
  %v1793 = vpop.f32.mrf.mxu0
  %v1794 = vadd.f32 0.0, %v1793
  %v1795 = vpop.f32.mrf.mxu0
  %v1796 = vadd.f32 0.0, %v1795
  %v1797 = vpop.f32.mrf.mxu0
  %v1798 = vadd.f32 0.0, %v1797
  %v1799 = vpop.f32.mrf.mxu0
  %v1800 = vadd.f32 0.0, %v1799
  %1801 = vmatprep.mubr.bf16.mxu0 %v1707
  %1802 = vmatmul.mubr.bf16.gmra.mxu0 %v1561
  %v1803 = vpop.f32.mrf.mxu0
  %v1804 = vadd.f32 0.0, %v1803
  %v1805 = vpop.f32.mrf.mxu0
  %v1806 = vadd.f32 0.0, %v1805
  %v1807 = vpop.f32.mrf.mxu0
  %v1808 = vadd.f32 0.0, %v1807
  %v1809 = vpop.f32.mrf.mxu0
  %v1810 = vadd.f32 0.0, %v1809
  %1811 = vmatprep.mubr.bf16.mxu0 %v1710
  %1812 = vmatmul.mubr.bf16.gmra.mxu0 %v1563
  %v1813 = vpop.f32.mrf.mxu0
  %v1814 = vadd.f32 0.0, %v1813
  %v1815 = vpop.f32.mrf.mxu0
  %v1816 = vadd.f32 0.0, %v1815
  %v1817 = vpop.f32.mrf.mxu0
  %v1818 = vadd.f32 0.0, %v1817
  %v1819 = vpop.f32.mrf.mxu0
  %v1820 = vadd.f32 0.0, %v1819
  %1821 = vmatprep.mubr.bf16.mxu0 %v1713
  %1822 = vmatmul.mubr.bf16.gmra.mxu0 %v1565
  %v1823 = vpop.f32.mrf.mxu0
  %v1824 = vadd.f32 0.0, %v1823
  %v1825 = vpop.f32.mrf.mxu0
  %v1826 = vadd.f32 0.0, %v1825
  %v1827 = vpop.f32.mrf.mxu0
  %v1828 = vadd.f32 0.0, %v1827
  %v1829 = vpop.f32.mrf.mxu0
  %v1830 = vadd.f32 0.0, %v1829
  %1831 = vmatprep.mubr.bf16.mxu0 %v1716
  %1832 = vmatmul.mubr.bf16.gmra.mxu0 %v1567
  %v1833 = vpop.f32.mrf.mxu0
  %v1834 = vadd.f32 0.0, %v1833
  %v1835 = vpop.f32.mrf.mxu0
  %v1836 = vadd.f32 0.0, %v1835
  %v1837 = vpop.f32.mrf.mxu0
  %v1838 = vadd.f32 0.0, %v1837
  %v1839 = vpop.f32.mrf.mxu0
  %v1840 = vadd.f32 0.0, %v1839
  %1841 = vmatprep.mubr.bf16.mxu0 %v1719
  %1842 = vmatmul.mubr.bf16.gmra.mxu0 %v1569
  %v1843 = vpop.f32.mrf.mxu0
  %v1844 = vadd.f32 0.0, %v1843
  %v1845 = vpop.f32.mrf.mxu0
  %v1846 = vadd.f32 0.0, %v1845
  %v1847 = vpop.f32.mrf.mxu0
  %v1848 = vadd.f32 0.0, %v1847
  %v1849 = vpop.f32.mrf.mxu0
  %v1850 = vadd.f32 0.0, %v1849
  %1851 = vmatprep.mubr.bf16.mxu0 %v1722
  %1852 = vmatmul.mubr.bf16.gmra.mxu0 %v1571
  %v1853 = vpop.f32.mrf.mxu0
  %v1854 = vadd.f32 0.0, %v1853
  %v1855 = vpop.f32.mrf.mxu0
  %v1856 = vadd.f32 0.0, %v1855
  %v1857 = vpop.f32.mrf.mxu0
  %v1858 = vadd.f32 0.0, %v1857
  %v1859 = vpop.f32.mrf.mxu0
  %v1860 = vadd.f32 0.0, %v1859
  %1861 = vmatprep.mubr.bf16.mxu0 %v1725
  %1862 = vmatmul.mubr.bf16.gmra.mxu0 %v1573
  %v1863 = vpop.f32.mrf.mxu0
  %v1864 = vadd.f32 0.0, %v1863
  %v1865 = vpop.f32.mrf.mxu0
  %v1866 = vadd.f32 0.0, %v1865
  %v1867 = vpop.f32.mrf.mxu0
  %v1868 = vadd.f32 0.0, %v1867
  %v1869 = vpop.f32.mrf.mxu0
  %v1870 = vadd.f32 0.0, %v1869
  %1871 = vmatprep.mubr.bf16.mxu0 %v1728
  %1872 = vmatmul.mubr.bf16.gmra.mxu0 %v1575
  %v1873 = vpop.f32.mrf.mxu0
  %v1874 = vadd.f32 0.0, %v1873
  %v1875 = vpop.f32.mrf.mxu0
  %v1876 = vadd.f32 0.0, %v1875
  %v1877 = vpop.f32.mrf.mxu0
  %v1878 = vadd.f32 0.0, %v1877
  %v1879 = vpop.f32.mrf.mxu0
  %v1880 = vadd.f32 0.0, %v1879
  %1881 = vmatprep.mubr.bf16.mxu0 %v1731
  %1882 = vmatmul.mubr.bf16.gmra.mxu0 %v1577
  %v1883 = vpop.f32.mrf.mxu0
  %v1884 = vadd.f32 0.0, %v1883
  %v1885 = vpop.f32.mrf.mxu0
  %v1886 = vadd.f32 0.0, %v1885
  %v1887 = vpop.f32.mrf.mxu0
  %v1888 = vadd.f32 0.0, %v1887
  %v1889 = vpop.f32.mrf.mxu0
  %v1890 = vadd.f32 0.0, %v1889
  %1891 = vmatprep.mubr.bf16.mxu0 %v1734
  %1892 = vmatmul.mubr.bf16.gmra.mxu0 %v1579
  %v1893 = vpop.f32.mrf.mxu0
  %v1894 = vadd.f32 0.0, %v1893
  %v1895 = vpop.f32.mrf.mxu0
  %v1896 = vadd.f32 0.0, %v1895
  %v1897 = vpop.f32.mrf.mxu0
  %v1898 = vadd.f32 0.0, %v1897
  %v1899 = vpop.f32.mrf.mxu0
  %v1900 = vadd.f32 0.0, %v1899
  %1901 = vmatprep.mubr.bf16.mxu0 %v1737
  %1902 = vmatmul.mubr.bf16.gmra.mxu0 %v1581
  %v1903 = vpop.f32.mrf.mxu0
  %v1904 = vadd.f32 0.0, %v1903
  %v1905 = vpop.f32.mrf.mxu0
  %v1906 = vadd.f32 0.0, %v1905
  %v1907 = vpop.f32.mrf.mxu0
  %v1908 = vadd.f32 0.0, %v1907
  %v1909 = vpop.f32.mrf.mxu0
  %v1910 = vadd.f32 0.0, %v1909
  %1911 = vdwg.mxu0
  %v1912 = vadd.f32 %v917, %v1774
  %v1913 = vadd.f32 %v919, %v1776
  %v1914 = vadd.f32 %v921, %v1778
  %v1915 = vadd.f32 %v923, %v1780
  %v1916 = vadd.f32 %v927, %v1784
  %v1917 = vadd.f32 %v929, %v1786
  %v1918 = vadd.f32 %v931, %v1788
  %v1919 = vadd.f32 %v933, %v1790
  %v1920 = vadd.f32 %v937, %v1794
  %v1921 = vadd.f32 %v939, %v1796
  %v1922 = vadd.f32 %v941, %v1798
  %v1923 = vadd.f32 %v943, %v1800
  %v1924 = vadd.f32 %v947, %v1804
  %v1925 = vadd.f32 %v949, %v1806
  %v1926 = vadd.f32 %v951, %v1808
  %v1927 = vadd.f32 %v953, %v1810
  %v1928 = vadd.f32 %v957, %v1814
  %v1929 = vadd.f32 %v959, %v1816
  %v1930 = vadd.f32 %v961, %v1818
  %v1931 = vadd.f32 %v963, %v1820
  %v1932 = vadd.f32 %v967, %v1824
  %v1933 = vadd.f32 %v969, %v1826
  %v1934 = vadd.f32 %v971, %v1828
  %v1935 = vadd.f32 %v973, %v1830
  %v1936 = vadd.f32 %v977, %v1834
  %v1937 = vadd.f32 %v979, %v1836
  %v1938 = vadd.f32 %v981, %v1838
  %v1939 = vadd.f32 %v983, %v1840
  %v1940 = vadd.f32 %v987, %v1844
  %v1941 = vadd.f32 %v989, %v1846
  %v1942 = vadd.f32 %v991, %v1848
  %v1943 = vadd.f32 %v993, %v1850
  %v1944 = vadd.f32 %v997, %v1854
  %v1945 = vadd.f32 %v999, %v1856
  %v1946 = vadd.f32 %v1001, %v1858
  %v1947 = vadd.f32 %v1003, %v1860
  %v1948 = vadd.f32 %v1007, %v1864
  %v1949 = vadd.f32 %v1009, %v1866
  %v1950 = vadd.f32 %v1011, %v1868
  %v1951 = vadd.f32 %v1013, %v1870
  %v1952 = vadd.f32 %v1017, %v1874
  %v1953 = vadd.f32 %v1019, %v1876
  %v1954 = vadd.f32 %v1021, %v1878
  %v1955 = vadd.f32 %v1023, %v1880
  %v1956 = vadd.f32 %v1027, %v1884
  %v1957 = vadd.f32 %v1029, %v1886
  %v1958 = vadd.f32 %v1031, %v1888
  %v1959 = vadd.f32 %v1033, %v1890
  %v1960 = vadd.f32 %v1037, %v1894
  %v1961 = vadd.f32 %v1039, %v1896
  %v1962 = vadd.f32 %v1041, %v1898
  %v1963 = vadd.f32 %v1043, %v1900
  %v1964 = vadd.f32 %v1047, %v1904
  %v1965 = vadd.f32 %v1049, %v1906
  %v1966 = vadd.f32 %v1051, %v1908
  %v1967 = vadd.f32 %v1053, %v1910
  %s1968 = scalar_lea.vmem %s0, 720
  %v1969 = vld [vmem:[%s1968] sm:$0xff]
  %v1970 = vld [vmem:[%s1968 + $0x8] sm:$0xff]
  %v1971 = vld [vmem:[%s1968 + $0x18] sm:$0xff]
  %v1972 = vld [vmem:[%s1968 + $0x20] sm:$0xff]
  %v1973 = vld [vmem:[%s1968 + $0x30] sm:$0xff]
  %v1974 = vld [vmem:[%s1968 + $0x38] sm:$0xff]
  %v1975 = vld [vmem:[%s1968 + $0x48] sm:$0xff]
  %v1976 = vld [vmem:[%s1968 + $0x50] sm:$0xff]
  %v1977 = vld [vmem:[%s1968 + $0x60] sm:$0xff]
  %v1978 = vld [vmem:[%s1968 + $0x68] sm:$0xff]
  %v1979 = vld [vmem:[%s1968 + $0x78] sm:$0xff]
  %v1980 = vld [vmem:[%s1968 + $0x80] sm:$0xff]
  %v1981 = vld [vmem:[%s1968 + $0x90] sm:$0xff]
  %v1982 = vld [vmem:[%s1968 + $0x98] sm:$0xff]
  %v1983 = vld [vmem:[%s1968 + $0xa8] sm:$0xff]
  %v1984 = vld [vmem:[%s1968 + $0xb0] sm:$0xff]
  %v1985 = vld [vmem:[%s1968 + $0xc0] sm:$0xff]
  %v1986 = vld [vmem:[%s1968 + $0xc8] sm:$0xff]
  %v1987 = vld [vmem:[%s1968 + $0xd8] sm:$0xff]
  %v1988 = vld [vmem:[%s1968 + $0xe0] sm:$0xff]
  %v1989 = vld [vmem:[%s1968 + $0xf0] sm:$0xff]
  %v1990 = vld [vmem:[%s1968 + $0xf8] sm:$0xff]
  %v1991 = vld [vmem:[%s1968 + $0x108] sm:$0xff]
  %v1992 = vld [vmem:[%s1968 + $0x110] sm:$0xff]
  %v1993 = vld [vmem:[%s1968 + $0x120] sm:$0xff]
  %v1994 = vld [vmem:[%s1968 + $0x128] sm:$0xff]
  %v1995 = vld [vmem:[%s1968 + $0x138] sm:$0xff]
  %v1996 = vld [vmem:[%s1968 + $0x140] sm:$0xff]
  %v1997 = vmax.bf16 %v1969, 0
  %v1998 = vmax.bf16 %v1970, 0
  %v1999 = vmax.bf16 %v1971, 0
  %v2000 = vmax.bf16 %v1972, 0
  %v2001 = vmax.bf16 %v1973, 0
  %v2002 = vmax.bf16 %v1974, 0
  %v2003 = vmax.bf16 %v1975, 0
  %v2004 = vmax.bf16 %v1976, 0
  %v2005 = vmax.bf16 %v1977, 0
  %v2006 = vmax.bf16 %v1978, 0
  %v2007 = vmax.bf16 %v1979, 0
  %v2008 = vmax.bf16 %v1980, 0
  %v2009 = vmax.bf16 %v1981, 0
  %v2010 = vmax.bf16 %v1982, 0
  %v2011 = vmax.bf16 %v1983, 0
  %v2012 = vmax.bf16 %v1984, 0
  %v2013 = vmax.bf16 %v1985, 0
  %v2014 = vmax.bf16 %v1986, 0
  %v2015 = vmax.bf16 %v1987, 0
  %v2016 = vmax.bf16 %v1988, 0
  %v2017 = vmax.bf16 %v1989, 0
  %v2018 = vmax.bf16 %v1990, 0
  %v2019 = vmax.bf16 %v1991, 0
  %v2020 = vmax.bf16 %v1992, 0
  %v2021 = vmax.bf16 %v1993, 0
  %v2022 = vmax.bf16 %v1994, 0
  %v2023 = vmax.bf16 %v1995, 0
  %v2024 = vmax.bf16 %v1996, 0
  %s2025 = scalar_lea.vmem %s1, 480
  %v2026 = vld [vmem:[%s2025] sm:$0xff]
  %v2027 = vld [vmem:[%s2025 + $0x8] sm:$0xff]
  %v2028 = vld [vmem:[%s2025 + $0x10] sm:$0xff]
  %v2029 = vld [vmem:[%s2025 + $0x18] sm:$0xff]
  %v2030 = vld [vmem:[%s2025 + $0x20] sm:$0xff]
  %v2031 = vld [vmem:[%s2025 + $0x28] sm:$0xff]
  %v2032 = vld [vmem:[%s2025 + $0x30] sm:$0xff]
  %v2033 = vld [vmem:[%s2025 + $0x38] sm:$0xff]
  %v2034 = vld [vmem:[%s2025 + $0x40] sm:$0xff]
  %v2035 = vld [vmem:[%s2025 + $0x48] sm:$0xff]
  %v2036 = vld [vmem:[%s2025 + $0x50] sm:$0xff]
  %v2037 = vld [vmem:[%s2025 + $0x58] sm:$0xff]
  %v2038 = vld [vmem:[%s2025 + $0x60] sm:$0xff]
  %v2039 = vld [vmem:[%s2025 + $0x68] sm:$0xff]
  %v2040 = vld [vmem:[%s2025 + $0x70] sm:$0xff]
  %v2041 = vld [vmem:[%s2025 + $0x78] sm:$0xff]
  %v2042 = vld [vmem:[%s2025 + $0x80] sm:$0xff]
  %v2043 = vld [vmem:[%s2025 + $0x88] sm:$0xff]
  %v2044 = vld [vmem:[%s2025 + $0x90] sm:$0xff]
  %v2045 = vld [vmem:[%s2025 + $0x98] sm:$0xff]
  %v2074 = vunpack.c.l.b16 %v1997
  %v2075 = vunpack.c.h.b16 %v1997
  %v2076 = vunpack.c.l.b16 %v1998
  %v2077 = vunpack.c.h.b16 %v1998
  %v2078 = vunpack.c.l.b16 %v1999
  %v2079 = vunpack.c.h.b16 %v1999
  %v2080 = vunpack.c.l.b16 %v2000
  %v2081 = vunpack.c.h.b16 %v2000
  %v2082 = vunpack.c.l.b16 %v2001
  %v2083 = vunpack.c.h.b16 %v2001
  %v2084 = vunpack.c.l.b16 %v2002
  %v2085 = vunpack.c.h.b16 %v2002
  %v2086 = vunpack.c.l.b16 %v2003
  %v2087 = vunpack.c.h.b16 %v2003
  %v2088 = vunpack.c.l.b16 %v2004
  %v2089 = vunpack.c.h.b16 %v2004
  %v2090 = vunpack.c.l.b16 %v2005
  %v2091 = vunpack.c.h.b16 %v2005
  %v2092 = vunpack.c.l.b16 %v2006
  %v2093 = vunpack.c.h.b16 %v2006
  %v2094 = vunpack.c.l.b16 %v2007
  %v2095 = vunpack.c.h.b16 %v2007
  %v2096 = vunpack.c.l.b16 %v2008
  %v2097 = vunpack.c.h.b16 %v2008
  %v2098 = vunpack.c.l.b16 %v2009
  %v2099 = vunpack.c.h.b16 %v2009
  %v2100 = vunpack.c.l.b16 %v2010
  %v2101 = vunpack.c.h.b16 %v2010
  %v2102 = vunpack.c.l.b16 %v2011
  %v2103 = vunpack.c.h.b16 %v2011
  %v2104 = vunpack.c.l.b16 %v2012
  %v2105 = vunpack.c.h.b16 %v2012
  %v2106 = vunpack.c.l.b16 %v2013
  %v2107 = vunpack.c.h.b16 %v2013
  %v2108 = vunpack.c.l.b16 %v2014
  %v2109 = vunpack.c.h.b16 %v2014
  %v2110 = vunpack.c.l.b16 %v2015
  %v2111 = vunpack.c.h.b16 %v2015
  %v2112 = vunpack.c.l.b16 %v2016
  %v2113 = vunpack.c.h.b16 %v2016
  %v2114 = vunpack.c.l.b16 %v2017
  %v2115 = vunpack.c.h.b16 %v2017
  %v2116 = vunpack.c.l.b16 %v2018
  %v2117 = vunpack.c.h.b16 %v2018
  %v2118 = vunpack.c.l.b16 %v2019
  %v2119 = vunpack.c.h.b16 %v2019
  %v2120 = vunpack.c.l.b16 %v2020
  %v2121 = vunpack.c.h.b16 %v2020
  %v2122 = vunpack.c.l.b16 %v2021
  %v2123 = vunpack.c.h.b16 %v2021
  %v2124 = vunpack.c.l.b16 %v2022
  %v2125 = vunpack.c.h.b16 %v2022
  %v2126 = vunpack.c.l.b16 %v2023
  %v2127 = vunpack.c.h.b16 %v2023
  %v2128 = vunpack.c.l.b16 %v2024
  %v2129 = vunpack.c.h.b16 %v2024
  %v2130 = vpack.c.b16 %v2076, %v2074
  %v2131 = vpack.c.b16 %v2077, %v2075
  %v2132 = vpack.c.b16 %v2080, %v2078
  %v2133 = vpack.c.b16 %v2081, %v2079
  %v2134 = vpack.c.b16 %v2084, %v2082
  %v2135 = vpack.c.b16 %v2085, %v2083
  %v2136 = vpack.c.b16 %v2088, %v2086
  %v2137 = vpack.c.b16 %v2089, %v2087
  %v2138 = vpack.c.b16 %v2092, %v2090
  %v2139 = vpack.c.b16 %v2093, %v2091
  %v2140 = vpack.c.b16 %v2096, %v2094
  %v2141 = vpack.c.b16 %v2097, %v2095
  %v2142 = vpack.c.b16 %v2100, %v2098
  %v2143 = vpack.c.b16 %v2101, %v2099
  %v2144 = vpack.c.b16 %v2104, %v2102
  %v2145 = vpack.c.b16 %v2105, %v2103
  %v2146 = vpack.c.b16 %v2108, %v2106
  %v2147 = vpack.c.b16 %v2109, %v2107
  %v2148 = vpack.c.b16 %v2112, %v2110
  %v2149 = vpack.c.b16 %v2113, %v2111
  %v2150 = vpack.c.b16 %v2116, %v2114
  %v2151 = vpack.c.b16 %v2117, %v2115
  %v2152 = vpack.c.b16 %v2120, %v2118
  %v2153 = vpack.c.b16 %v2121, %v2119
  %v2154 = vpack.c.b16 %v2124, %v2122
  %v2155 = vpack.c.b16 %v2125, %v2123
  %v2156 = vpack.c.b16 %v2128, %v2126
  %v2157 = vpack.c.b16 %v2129, %v2127
  %v2192 = vunpack.c.l.b16 %v2026
  %v2193 = vunpack.c.h.b16 %v2026
  %v2194 = vunpack.c.l.b16 %v2027
  %v2195 = vunpack.c.h.b16 %v2027
  %v2196 = vunpack.c.l.b16 %v2028
  %v2197 = vunpack.c.h.b16 %v2028
  %v2198 = vunpack.c.l.b16 %v2029
  %v2199 = vunpack.c.h.b16 %v2029
  %v2200 = vunpack.c.l.b16 %v2030
  %v2201 = vunpack.c.h.b16 %v2030
  %v2202 = vunpack.c.l.b16 %v2031
  %v2203 = vunpack.c.h.b16 %v2031
  %v2204 = vunpack.c.l.b16 %v2032
  %v2205 = vunpack.c.h.b16 %v2032
  %v2206 = vunpack.c.l.b16 %v2033
  %v2207 = vunpack.c.h.b16 %v2033
  %v2208 = vunpack.c.l.b16 %v2034
  %v2209 = vunpack.c.h.b16 %v2034
  %v2210 = vunpack.c.l.b16 %v2035
  %v2211 = vunpack.c.h.b16 %v2035
  %v2212 = vunpack.c.l.b16 %v2036
  %v2213 = vunpack.c.h.b16 %v2036
  %v2214 = vunpack.c.l.b16 %v2037
  %v2215 = vunpack.c.h.b16 %v2037
  %v2216 = vunpack.c.l.b16 %v2038
  %v2217 = vunpack.c.h.b16 %v2038
  %v2218 = vunpack.c.l.b16 %v2039
  %v2219 = vunpack.c.h.b16 %v2039
  %v2220 = vunpack.c.l.b16 %v2040
  %v2221 = vunpack.c.h.b16 %v2040
  %v2222 = vunpack.c.l.b16 %v2041
  %v2223 = vunpack.c.h.b16 %v2041
  %v2224 = vunpack.c.l.b16 %v2042
  %v2225 = vunpack.c.h.b16 %v2042
  %v2226 = vunpack.c.l.b16 %v2043
  %v2227 = vunpack.c.h.b16 %v2043
  %v2228 = vunpack.c.l.b16 %v2044
  %v2229 = vunpack.c.h.b16 %v2044
  %v2230 = vunpack.c.l.b16 %v2045
  %v2231 = vunpack.c.h.b16 %v2045
  %v2232 = vpack.c.b16 %v2194, %v2192
  %v2233 = vpack.c.b16 %v2195, %v2193
  %v2234 = vpack.c.b16 %v2198, %v2196
  %v2235 = vpack.c.b16 %v2199, %v2197
  %v2236 = vpack.c.b16 %v2202, %v2200
  %v2237 = vpack.c.b16 %v2203, %v2201
  %v2238 = vpack.c.b16 %v2206, %v2204
  %v2239 = vpack.c.b16 %v2207, %v2205
  %v2240 = vpack.c.b16 %v2210, %v2208
  %v2241 = vpack.c.b16 %v2211, %v2209
  %v2242 = vpack.c.b16 %v2214, %v2212
  %v2243 = vpack.c.b16 %v2215, %v2213
  %v2244 = vpack.c.b16 %v2218, %v2216
  %v2245 = vpack.c.b16 %v2219, %v2217
  %v2246 = vpack.c.b16 %v2222, %v2220
  %v2247 = vpack.c.b16 %v2223, %v2221
  %v2248 = vpack.c.b16 %v2226, %v2224
  %v2249 = vpack.c.b16 %v2227, %v2225
  %v2250 = vpack.c.b16 %v2230, %v2228
  %v2251 = vpack.c.b16 %v2231, %v2229
  %v2273 = vsel %vm398, %v2131, 0
  %v2276 = vsel %vm398, %v2133, 0
  %v2279 = vsel %vm398, %v2135, 0
  %v2282 = vsel %vm398, %v2137, 0
  %v2285 = vsel %vm398, %v2139, 0
  %v2288 = vsel %vm398, %v2141, 0
  %v2291 = vsel %vm398, %v2143, 0
  %v2294 = vsel %vm398, %v2145, 0
  %v2297 = vsel %vm398, %v2147, 0
  %v2300 = vsel %vm398, %v2149, 0
  %v2303 = vsel %vm398, %v2151, 0
  %v2306 = vsel %vm398, %v2153, 0
  %v2309 = vsel %vm398, %v2155, 0
  %v2312 = vsel %vm398, %v2157, 0
  %2314 = vmatprep.subr.bf16.mxu0 %v2247
  %2315 = vmatpush1.bf16.msra.mxu0 %v2246
  %2316 = vmatprep.subr.bf16.mxu0 %v2245
  %2317 = vmatpush1.bf16.msra.mxu0 %v2244
  %2318 = vmatprep.subr.bf16.mxu0 %v2243
  %2319 = vmatpush1.bf16.msra.mxu0 %v2242
  %2320 = vmatprep.subr.bf16.mxu0 %v2241
  %2321 = vmatpush1.bf16.msra.mxu0 %v2240
  %2322 = vmatprep.subr.bf16.mxu0 %v2239
  %2323 = vmatpush1.bf16.msra.mxu0 %v2238
  %2324 = vmatprep.subr.bf16.mxu0 %v2237
  %2325 = vmatpush1.bf16.msra.mxu0 %v2236
  %2326 = vmatprep.subr.bf16.mxu0 %v2235
  %2327 = vmatpush1.bf16.msra.mxu0 %v2234
  %2328 = vmatprep.subr.bf16.mxu0 %v2233
  %2329 = vmatpush1.bf16.msra.mxu0 %v2232
  %2330 = vmatprep.subr.bf16.mxu0 0
  %2331 = vmatpush2.bf16.msra.mxu0 0
  %2332 = vmatprep.subr.bf16.mxu0 0
  %2333 = vmatpush2.bf16.msra.mxu0 0
  %2334 = vmatprep.subr.bf16.mxu0 0
  %2335 = vmatpush2.bf16.msra.mxu0 0
  %2336 = vmatprep.subr.bf16.mxu0 0
  %2337 = vmatpush2.bf16.msra.mxu0 0
  %2338 = vmatprep.subr.bf16.mxu0 0
  %2339 = vmatpush2.bf16.msra.mxu0 0
  %2340 = vmatprep.subr.bf16.mxu0 0
  %2341 = vmatpush2.bf16.msra.mxu0 0
  %2342 = vmatprep.subr.bf16.mxu0 %v2251
  %2343 = vmatpush2.bf16.msra.mxu0 %v2250
  %2344 = vmatprep.subr.bf16.mxu0 %v2249
  %2345 = vmatpush2.bf16.msra.mxu0 %v2248
  %2346 = vmatprep.mubr.bf16.mxu0 %v2273
  %2347 = vmatmul.mubr.bf16.gmra.mxu0 %v2130
  %v2348 = vpop.f32.mrf.mxu0
  %v2349 = vadd.f32 0.0, %v2348
  %v2350 = vpop.f32.mrf.mxu0
  %v2351 = vadd.f32 0.0, %v2350
  %v2352 = vpop.f32.mrf.mxu0
  %v2353 = vadd.f32 0.0, %v2352
  %v2354 = vpop.f32.mrf.mxu0
  %v2355 = vadd.f32 0.0, %v2354
  %2356 = vmatprep.mubr.bf16.mxu0 %v2276
  %2357 = vmatmul.mubr.bf16.gmra.mxu0 %v2132
  %v2358 = vpop.f32.mrf.mxu0
  %v2359 = vadd.f32 0.0, %v2358
  %v2360 = vpop.f32.mrf.mxu0
  %v2361 = vadd.f32 0.0, %v2360
  %v2362 = vpop.f32.mrf.mxu0
  %v2363 = vadd.f32 0.0, %v2362
  %v2364 = vpop.f32.mrf.mxu0
  %v2365 = vadd.f32 0.0, %v2364
  %2366 = vmatprep.mubr.bf16.mxu0 %v2279
  %2367 = vmatmul.mubr.bf16.gmra.mxu0 %v2134
  %v2368 = vpop.f32.mrf.mxu0
  %v2369 = vadd.f32 0.0, %v2368
  %v2370 = vpop.f32.mrf.mxu0
  %v2371 = vadd.f32 0.0, %v2370
  %v2372 = vpop.f32.mrf.mxu0
  %v2373 = vadd.f32 0.0, %v2372
  %v2374 = vpop.f32.mrf.mxu0
  %v2375 = vadd.f32 0.0, %v2374
  %2376 = vmatprep.mubr.bf16.mxu0 %v2282
  %2377 = vmatmul.mubr.bf16.gmra.mxu0 %v2136
  %v2378 = vpop.f32.mrf.mxu0
  %v2379 = vadd.f32 0.0, %v2378
  %v2380 = vpop.f32.mrf.mxu0
  %v2381 = vadd.f32 0.0, %v2380
  %v2382 = vpop.f32.mrf.mxu0
  %v2383 = vadd.f32 0.0, %v2382
  %v2384 = vpop.f32.mrf.mxu0
  %v2385 = vadd.f32 0.0, %v2384
  %2386 = vmatprep.mubr.bf16.mxu0 %v2285
  %2387 = vmatmul.mubr.bf16.gmra.mxu0 %v2138
  %v2388 = vpop.f32.mrf.mxu0
  %v2389 = vadd.f32 0.0, %v2388
  %v2390 = vpop.f32.mrf.mxu0
  %v2391 = vadd.f32 0.0, %v2390
  %v2392 = vpop.f32.mrf.mxu0
  %v2393 = vadd.f32 0.0, %v2392
  %v2394 = vpop.f32.mrf.mxu0
  %v2395 = vadd.f32 0.0, %v2394
  %2396 = vmatprep.mubr.bf16.mxu0 %v2288
  %2397 = vmatmul.mubr.bf16.gmra.mxu0 %v2140
  %v2398 = vpop.f32.mrf.mxu0
  %v2399 = vadd.f32 0.0, %v2398
  %v2400 = vpop.f32.mrf.mxu0
  %v2401 = vadd.f32 0.0, %v2400
  %v2402 = vpop.f32.mrf.mxu0
  %v2403 = vadd.f32 0.0, %v2402
  %v2404 = vpop.f32.mrf.mxu0
  %v2405 = vadd.f32 0.0, %v2404
  %2406 = vmatprep.mubr.bf16.mxu0 %v2291
  %2407 = vmatmul.mubr.bf16.gmra.mxu0 %v2142
  %v2408 = vpop.f32.mrf.mxu0
  %v2409 = vadd.f32 0.0, %v2408
  %v2410 = vpop.f32.mrf.mxu0
  %v2411 = vadd.f32 0.0, %v2410
  %v2412 = vpop.f32.mrf.mxu0
  %v2413 = vadd.f32 0.0, %v2412
  %v2414 = vpop.f32.mrf.mxu0
  %v2415 = vadd.f32 0.0, %v2414
  %2416 = vmatprep.mubr.bf16.mxu0 %v2294
  %2417 = vmatmul.mubr.bf16.gmra.mxu0 %v2144
  %v2418 = vpop.f32.mrf.mxu0
  %v2419 = vadd.f32 0.0, %v2418
  %v2420 = vpop.f32.mrf.mxu0
  %v2421 = vadd.f32 0.0, %v2420
  %v2422 = vpop.f32.mrf.mxu0
  %v2423 = vadd.f32 0.0, %v2422
  %v2424 = vpop.f32.mrf.mxu0
  %v2425 = vadd.f32 0.0, %v2424
  %2426 = vmatprep.mubr.bf16.mxu0 %v2297
  %2427 = vmatmul.mubr.bf16.gmra.mxu0 %v2146
  %v2428 = vpop.f32.mrf.mxu0
  %v2429 = vadd.f32 0.0, %v2428
  %v2430 = vpop.f32.mrf.mxu0
  %v2431 = vadd.f32 0.0, %v2430
  %v2432 = vpop.f32.mrf.mxu0
  %v2433 = vadd.f32 0.0, %v2432
  %v2434 = vpop.f32.mrf.mxu0
  %v2435 = vadd.f32 0.0, %v2434
  %2436 = vmatprep.mubr.bf16.mxu0 %v2300
  %2437 = vmatmul.mubr.bf16.gmra.mxu0 %v2148
  %v2438 = vpop.f32.mrf.mxu0
  %v2439 = vadd.f32 0.0, %v2438
  %v2440 = vpop.f32.mrf.mxu0
  %v2441 = vadd.f32 0.0, %v2440
  %v2442 = vpop.f32.mrf.mxu0
  %v2443 = vadd.f32 0.0, %v2442
  %v2444 = vpop.f32.mrf.mxu0
  %v2445 = vadd.f32 0.0, %v2444
  %2446 = vmatprep.mubr.bf16.mxu0 %v2303
  %2447 = vmatmul.mubr.bf16.gmra.mxu0 %v2150
  %v2448 = vpop.f32.mrf.mxu0
  %v2449 = vadd.f32 0.0, %v2448
  %v2450 = vpop.f32.mrf.mxu0
  %v2451 = vadd.f32 0.0, %v2450
  %v2452 = vpop.f32.mrf.mxu0
  %v2453 = vadd.f32 0.0, %v2452
  %v2454 = vpop.f32.mrf.mxu0
  %v2455 = vadd.f32 0.0, %v2454
  %2456 = vmatprep.mubr.bf16.mxu0 %v2306
  %2457 = vmatmul.mubr.bf16.gmra.mxu0 %v2152
  %v2458 = vpop.f32.mrf.mxu0
  %v2459 = vadd.f32 0.0, %v2458
  %v2460 = vpop.f32.mrf.mxu0
  %v2461 = vadd.f32 0.0, %v2460
  %v2462 = vpop.f32.mrf.mxu0
  %v2463 = vadd.f32 0.0, %v2462
  %v2464 = vpop.f32.mrf.mxu0
  %v2465 = vadd.f32 0.0, %v2464
  %2466 = vmatprep.mubr.bf16.mxu0 %v2309
  %2467 = vmatmul.mubr.bf16.gmra.mxu0 %v2154
  %v2468 = vpop.f32.mrf.mxu0
  %v2469 = vadd.f32 0.0, %v2468
  %v2470 = vpop.f32.mrf.mxu0
  %v2471 = vadd.f32 0.0, %v2470
  %v2472 = vpop.f32.mrf.mxu0
  %v2473 = vadd.f32 0.0, %v2472
  %v2474 = vpop.f32.mrf.mxu0
  %v2475 = vadd.f32 0.0, %v2474
  %2476 = vmatprep.mubr.bf16.mxu0 %v2312
  %2477 = vmatmul.mubr.bf16.gmra.mxu0 %v2156
  %v2478 = vpop.f32.mrf.mxu0
  %v2479 = vadd.f32 0.0, %v2478
  %v2480 = vpop.f32.mrf.mxu0
  %v2481 = vadd.f32 0.0, %v2480
  %v2482 = vpop.f32.mrf.mxu0
  %v2483 = vadd.f32 0.0, %v2482
  %v2484 = vpop.f32.mrf.mxu0
  %v2485 = vadd.f32 0.0, %v2484
  %2486 = vdwg.mxu0
  %v2487 = vadd.f32 %v1912, %v2349
  %v2488 = vadd.f32 %v1913, %v2351
  %v2489 = vadd.f32 %v1914, %v2353
  %v2490 = vadd.f32 %v1915, %v2355
  %v2491 = vadd.f32 %v1916, %v2359
  %v2492 = vadd.f32 %v1917, %v2361
  %v2493 = vadd.f32 %v1918, %v2363
  %v2494 = vadd.f32 %v1919, %v2365
  %v2495 = vadd.f32 %v1920, %v2369
  %v2496 = vadd.f32 %v1921, %v2371
  %v2497 = vadd.f32 %v1922, %v2373
  %v2498 = vadd.f32 %v1923, %v2375
  %v2499 = vadd.f32 %v1924, %v2379
  %v2500 = vadd.f32 %v1925, %v2381
  %v2501 = vadd.f32 %v1926, %v2383
  %v2502 = vadd.f32 %v1927, %v2385
  %v2503 = vadd.f32 %v1928, %v2389
  %v2504 = vadd.f32 %v1929, %v2391
  %v2505 = vadd.f32 %v1930, %v2393
  %v2506 = vadd.f32 %v1931, %v2395
  %v2507 = vadd.f32 %v1932, %v2399
  %v2508 = vadd.f32 %v1933, %v2401
  %v2509 = vadd.f32 %v1934, %v2403
  %v2510 = vadd.f32 %v1935, %v2405
  %v2511 = vadd.f32 %v1936, %v2409
  %v2512 = vadd.f32 %v1937, %v2411
  %v2513 = vadd.f32 %v1938, %v2413
  %v2514 = vadd.f32 %v1939, %v2415
  %v2515 = vadd.f32 %v1940, %v2419
  %v2516 = vadd.f32 %v1941, %v2421
  %v2517 = vadd.f32 %v1942, %v2423
  %v2518 = vadd.f32 %v1943, %v2425
  %v2519 = vadd.f32 %v1944, %v2429
  %v2520 = vadd.f32 %v1945, %v2431
  %v2521 = vadd.f32 %v1946, %v2433
  %v2522 = vadd.f32 %v1947, %v2435
  %v2523 = vadd.f32 %v1948, %v2439
  %v2524 = vadd.f32 %v1949, %v2441
  %v2525 = vadd.f32 %v1950, %v2443
  %v2526 = vadd.f32 %v1951, %v2445
  %v2527 = vadd.f32 %v1952, %v2449
  %v2528 = vadd.f32 %v1953, %v2451
  %v2529 = vadd.f32 %v1954, %v2453
  %v2530 = vadd.f32 %v1955, %v2455
  %v2531 = vadd.f32 %v1956, %v2459
  %v2532 = vadd.f32 %v1957, %v2461
  %v2533 = vadd.f32 %v1958, %v2463
  %v2534 = vadd.f32 %v1959, %v2465
  %v2535 = vadd.f32 %v1960, %v2469
  %v2536 = vadd.f32 %v1961, %v2471
  %v2537 = vadd.f32 %v1962, %v2473
  %v2538 = vadd.f32 %v1963, %v2475
  %v2539 = vadd.f32 %v1964, %v2479
  %v2540 = vadd.f32 %v1965, %v2481
  %v2541 = vadd.f32 %v1966, %v2483
  %v2542 = vadd.f32 %v1967, %v2485
  %s2543 = scalar_lea.vmem %s0, 1080
  %v2544 = vld [vmem:[%s2543] sm:$0xff]
  %v2545 = vld [vmem:[%s2543 + $0x8] sm:$0xff]
  %v2546 = vld [vmem:[%s2543 + $0x18] sm:$0xff]
  %v2547 = vld [vmem:[%s2543 + $0x20] sm:$0xff]
  %v2548 = vld [vmem:[%s2543 + $0x30] sm:$0xff]
  %v2549 = vld [vmem:[%s2543 + $0x38] sm:$0xff]
  %v2550 = vld [vmem:[%s2543 + $0x48] sm:$0xff]
  %v2551 = vld [vmem:[%s2543 + $0x50] sm:$0xff]
  %v2552 = vld [vmem:[%s2543 + $0x60] sm:$0xff]
  %v2553 = vld [vmem:[%s2543 + $0x68] sm:$0xff]
  %v2554 = vld [vmem:[%s2543 + $0x78] sm:$0xff]
  %v2555 = vld [vmem:[%s2543 + $0x80] sm:$0xff]
  %v2556 = vld [vmem:[%s2543 + $0x90] sm:$0xff]
  %v2557 = vld [vmem:[%s2543 + $0x98] sm:$0xff]
  %v2558 = vld [vmem:[%s2543 + $0xa8] sm:$0xff]
  %v2559 = vld [vmem:[%s2543 + $0xb0] sm:$0xff]
  %v2560 = vld [vmem:[%s2543 + $0xc0] sm:$0xff]
  %v2561 = vld [vmem:[%s2543 + $0xc8] sm:$0xff]
  %v2562 = vld [vmem:[%s2543 + $0xd8] sm:$0xff]
  %v2563 = vld [vmem:[%s2543 + $0xe0] sm:$0xff]
  %v2564 = vld [vmem:[%s2543 + $0xf0] sm:$0xff]
  %v2565 = vld [vmem:[%s2543 + $0xf8] sm:$0xff]
  %v2566 = vld [vmem:[%s2543 + $0x108] sm:$0xff]
  %v2567 = vld [vmem:[%s2543 + $0x110] sm:$0xff]
  %v2568 = vld [vmem:[%s2543 + $0x120] sm:$0xff]
  %v2569 = vld [vmem:[%s2543 + $0x128] sm:$0xff]
  %v2570 = vld [vmem:[%s2543 + $0x138] sm:$0xff]
  %v2571 = vld [vmem:[%s2543 + $0x140] sm:$0xff]
  %v2572 = vmax.bf16 %v2544, 0
  %v2573 = vmax.bf16 %v2545, 0
  %v2574 = vmax.bf16 %v2546, 0
  %v2575 = vmax.bf16 %v2547, 0
  %v2576 = vmax.bf16 %v2548, 0
  %v2577 = vmax.bf16 %v2549, 0
  %v2578 = vmax.bf16 %v2550, 0
  %v2579 = vmax.bf16 %v2551, 0
  %v2580 = vmax.bf16 %v2552, 0
  %v2581 = vmax.bf16 %v2553, 0
  %v2582 = vmax.bf16 %v2554, 0
  %v2583 = vmax.bf16 %v2555, 0
  %v2584 = vmax.bf16 %v2556, 0
  %v2585 = vmax.bf16 %v2557, 0
  %v2586 = vmax.bf16 %v2558, 0
  %v2587 = vmax.bf16 %v2559, 0
  %v2588 = vmax.bf16 %v2560, 0
  %v2589 = vmax.bf16 %v2561, 0
  %v2590 = vmax.bf16 %v2562, 0
  %v2591 = vmax.bf16 %v2563, 0
  %v2592 = vmax.bf16 %v2564, 0
  %v2593 = vmax.bf16 %v2565, 0
  %v2594 = vmax.bf16 %v2566, 0
  %v2595 = vmax.bf16 %v2567, 0
  %v2596 = vmax.bf16 %v2568, 0
  %v2597 = vmax.bf16 %v2569, 0
  %v2598 = vmax.bf16 %v2570, 0
  %v2599 = vmax.bf16 %v2571, 0
  %s2600 = scalar_lea.vmem %s1, 640
  %v2601 = vld [vmem:[%s2600] sm:$0xff]
  %v2602 = vld [vmem:[%s2600 + $0x8] sm:$0xff]
  %v2603 = vld [vmem:[%s2600 + $0x10] sm:$0xff]
  %v2604 = vld [vmem:[%s2600 + $0x18] sm:$0xff]
  %v2605 = vld [vmem:[%s2600 + $0x20] sm:$0xff]
  %v2606 = vld [vmem:[%s2600 + $0x28] sm:$0xff]
  %v2607 = vld [vmem:[%s2600 + $0x30] sm:$0xff]
  %v2608 = vld [vmem:[%s2600 + $0x38] sm:$0xff]
  %v2609 = vld [vmem:[%s2600 + $0x40] sm:$0xff]
  %v2610 = vld [vmem:[%s2600 + $0x48] sm:$0xff]
  %v2611 = vld [vmem:[%s2600 + $0x50] sm:$0xff]
  %v2612 = vld [vmem:[%s2600 + $0x58] sm:$0xff]
  %v2613 = vld [vmem:[%s2600 + $0x60] sm:$0xff]
  %v2614 = vld [vmem:[%s2600 + $0x68] sm:$0xff]
  %v2615 = vld [vmem:[%s2600 + $0x70] sm:$0xff]
  %v2616 = vld [vmem:[%s2600 + $0x78] sm:$0xff]
  %v2617 = vld [vmem:[%s2600 + $0x80] sm:$0xff]
  %v2618 = vld [vmem:[%s2600 + $0x88] sm:$0xff]
  %v2619 = vld [vmem:[%s2600 + $0x90] sm:$0xff]
  %v2620 = vld [vmem:[%s2600 + $0x98] sm:$0xff]
  %v2649 = vunpack.c.l.b16 %v2572
  %v2650 = vunpack.c.h.b16 %v2572
  %v2651 = vunpack.c.l.b16 %v2573
  %v2652 = vunpack.c.h.b16 %v2573
  %v2653 = vunpack.c.l.b16 %v2574
  %v2654 = vunpack.c.h.b16 %v2574
  %v2655 = vunpack.c.l.b16 %v2575
  %v2656 = vunpack.c.h.b16 %v2575
  %v2657 = vunpack.c.l.b16 %v2576
  %v2658 = vunpack.c.h.b16 %v2576
  %v2659 = vunpack.c.l.b16 %v2577
  %v2660 = vunpack.c.h.b16 %v2577
  %v2661 = vunpack.c.l.b16 %v2578
  %v2662 = vunpack.c.h.b16 %v2578
  %v2663 = vunpack.c.l.b16 %v2579
  %v2664 = vunpack.c.h.b16 %v2579
  %v2665 = vunpack.c.l.b16 %v2580
  %v2666 = vunpack.c.h.b16 %v2580
  %v2667 = vunpack.c.l.b16 %v2581
  %v2668 = vunpack.c.h.b16 %v2581
  %v2669 = vunpack.c.l.b16 %v2582
  %v2670 = vunpack.c.h.b16 %v2582
  %v2671 = vunpack.c.l.b16 %v2583
  %v2672 = vunpack.c.h.b16 %v2583
  %v2673 = vunpack.c.l.b16 %v2584
  %v2674 = vunpack.c.h.b16 %v2584
  %v2675 = vunpack.c.l.b16 %v2585
  %v2676 = vunpack.c.h.b16 %v2585
  %v2677 = vunpack.c.l.b16 %v2586
  %v2678 = vunpack.c.h.b16 %v2586
  %v2679 = vunpack.c.l.b16 %v2587
  %v2680 = vunpack.c.h.b16 %v2587
  %v2681 = vunpack.c.l.b16 %v2588
  %v2682 = vunpack.c.h.b16 %v2588
  %v2683 = vunpack.c.l.b16 %v2589
  %v2684 = vunpack.c.h.b16 %v2589
  %v2685 = vunpack.c.l.b16 %v2590
  %v2686 = vunpack.c.h.b16 %v2590
  %v2687 = vunpack.c.l.b16 %v2591
  %v2688 = vunpack.c.h.b16 %v2591
  %v2689 = vunpack.c.l.b16 %v2592
  %v2690 = vunpack.c.h.b16 %v2592
  %v2691 = vunpack.c.l.b16 %v2593
  %v2692 = vunpack.c.h.b16 %v2593
  %v2693 = vunpack.c.l.b16 %v2594
  %v2694 = vunpack.c.h.b16 %v2594
  %v2695 = vunpack.c.l.b16 %v2595
  %v2696 = vunpack.c.h.b16 %v2595
  %v2697 = vunpack.c.l.b16 %v2596
  %v2698 = vunpack.c.h.b16 %v2596
  %v2699 = vunpack.c.l.b16 %v2597
  %v2700 = vunpack.c.h.b16 %v2597
  %v2701 = vunpack.c.l.b16 %v2598
  %v2702 = vunpack.c.h.b16 %v2598
  %v2703 = vunpack.c.l.b16 %v2599
  %v2704 = vunpack.c.h.b16 %v2599
  %v2705 = vpack.c.b16 %v2651, %v2649
  %v2706 = vpack.c.b16 %v2652, %v2650
  %v2707 = vpack.c.b16 %v2655, %v2653
  %v2708 = vpack.c.b16 %v2656, %v2654
  %v2709 = vpack.c.b16 %v2659, %v2657
  %v2710 = vpack.c.b16 %v2660, %v2658
  %v2711 = vpack.c.b16 %v2663, %v2661
  %v2712 = vpack.c.b16 %v2664, %v2662
  %v2713 = vpack.c.b16 %v2667, %v2665
  %v2714 = vpack.c.b16 %v2668, %v2666
  %v2715 = vpack.c.b16 %v2671, %v2669
  %v2716 = vpack.c.b16 %v2672, %v2670
  %v2717 = vpack.c.b16 %v2675, %v2673
  %v2718 = vpack.c.b16 %v2676, %v2674
  %v2719 = vpack.c.b16 %v2679, %v2677
  %v2720 = vpack.c.b16 %v2680, %v2678
  %v2721 = vpack.c.b16 %v2683, %v2681
  %v2722 = vpack.c.b16 %v2684, %v2682
  %v2723 = vpack.c.b16 %v2687, %v2685
  %v2724 = vpack.c.b16 %v2688, %v2686
  %v2725 = vpack.c.b16 %v2691, %v2689
  %v2726 = vpack.c.b16 %v2692, %v2690
  %v2727 = vpack.c.b16 %v2695, %v2693
  %v2728 = vpack.c.b16 %v2696, %v2694
  %v2729 = vpack.c.b16 %v2699, %v2697
  %v2730 = vpack.c.b16 %v2700, %v2698
  %v2731 = vpack.c.b16 %v2703, %v2701
  %v2732 = vpack.c.b16 %v2704, %v2702
  %v2767 = vunpack.c.l.b16 %v2601
  %v2768 = vunpack.c.h.b16 %v2601
  %v2769 = vunpack.c.l.b16 %v2602
  %v2770 = vunpack.c.h.b16 %v2602
  %v2771 = vunpack.c.l.b16 %v2603
  %v2772 = vunpack.c.h.b16 %v2603
  %v2773 = vunpack.c.l.b16 %v2604
  %v2774 = vunpack.c.h.b16 %v2604
  %v2775 = vunpack.c.l.b16 %v2605
  %v2776 = vunpack.c.h.b16 %v2605
  %v2777 = vunpack.c.l.b16 %v2606
  %v2778 = vunpack.c.h.b16 %v2606
  %v2779 = vunpack.c.l.b16 %v2607
  %v2780 = vunpack.c.h.b16 %v2607
  %v2781 = vunpack.c.l.b16 %v2608
  %v2782 = vunpack.c.h.b16 %v2608
  %v2783 = vunpack.c.l.b16 %v2609
  %v2784 = vunpack.c.h.b16 %v2609
  %v2785 = vunpack.c.l.b16 %v2610
  %v2786 = vunpack.c.h.b16 %v2610
  %v2787 = vunpack.c.l.b16 %v2611
  %v2788 = vunpack.c.h.b16 %v2611
  %v2789 = vunpack.c.l.b16 %v2612
  %v2790 = vunpack.c.h.b16 %v2612
  %v2791 = vunpack.c.l.b16 %v2613
  %v2792 = vunpack.c.h.b16 %v2613
  %v2793 = vunpack.c.l.b16 %v2614
  %v2794 = vunpack.c.h.b16 %v2614
  %v2795 = vunpack.c.l.b16 %v2615
  %v2796 = vunpack.c.h.b16 %v2615
  %v2797 = vunpack.c.l.b16 %v2616
  %v2798 = vunpack.c.h.b16 %v2616
  %v2799 = vunpack.c.l.b16 %v2617
  %v2800 = vunpack.c.h.b16 %v2617
  %v2801 = vunpack.c.l.b16 %v2618
  %v2802 = vunpack.c.h.b16 %v2618
  %v2803 = vunpack.c.l.b16 %v2619
  %v2804 = vunpack.c.h.b16 %v2619
  %v2805 = vunpack.c.l.b16 %v2620
  %v2806 = vunpack.c.h.b16 %v2620
  %v2807 = vpack.c.b16 %v2769, %v2767
  %v2808 = vpack.c.b16 %v2770, %v2768
  %v2809 = vpack.c.b16 %v2773, %v2771
  %v2810 = vpack.c.b16 %v2774, %v2772
  %v2811 = vpack.c.b16 %v2777, %v2775
  %v2812 = vpack.c.b16 %v2778, %v2776
  %v2813 = vpack.c.b16 %v2781, %v2779
  %v2814 = vpack.c.b16 %v2782, %v2780
  %v2815 = vpack.c.b16 %v2785, %v2783
  %v2816 = vpack.c.b16 %v2786, %v2784
  %v2817 = vpack.c.b16 %v2789, %v2787
  %v2818 = vpack.c.b16 %v2790, %v2788
  %v2819 = vpack.c.b16 %v2793, %v2791
  %v2820 = vpack.c.b16 %v2794, %v2792
  %v2821 = vpack.c.b16 %v2797, %v2795
  %v2822 = vpack.c.b16 %v2798, %v2796
  %v2823 = vpack.c.b16 %v2801, %v2799
  %v2824 = vpack.c.b16 %v2802, %v2800
  %v2825 = vpack.c.b16 %v2805, %v2803
  %v2826 = vpack.c.b16 %v2806, %v2804
  %v2848 = vsel %vm398, %v2706, 0
  %v2851 = vsel %vm398, %v2708, 0
  %v2854 = vsel %vm398, %v2710, 0
  %v2857 = vsel %vm398, %v2712, 0
  %v2860 = vsel %vm398, %v2714, 0
  %v2863 = vsel %vm398, %v2716, 0
  %v2866 = vsel %vm398, %v2718, 0
  %v2869 = vsel %vm398, %v2720, 0
  %v2872 = vsel %vm398, %v2722, 0
  %v2875 = vsel %vm398, %v2724, 0
  %v2878 = vsel %vm398, %v2726, 0
  %v2881 = vsel %vm398, %v2728, 0
  %v2884 = vsel %vm398, %v2730, 0
  %v2887 = vsel %vm398, %v2732, 0
  %2889 = vmatprep.subr.bf16.mxu0 %v2822
  %2890 = vmatpush1.bf16.msra.mxu0 %v2821
  %2891 = vmatprep.subr.bf16.mxu0 %v2820
  %2892 = vmatpush1.bf16.msra.mxu0 %v2819
  %2893 = vmatprep.subr.bf16.mxu0 %v2818
  %2894 = vmatpush1.bf16.msra.mxu0 %v2817
  %2895 = vmatprep.subr.bf16.mxu0 %v2816
  %2896 = vmatpush1.bf16.msra.mxu0 %v2815
  %2897 = vmatprep.subr.bf16.mxu0 %v2814
  %2898 = vmatpush1.bf16.msra.mxu0 %v2813
  %2899 = vmatprep.subr.bf16.mxu0 %v2812
  %2900 = vmatpush1.bf16.msra.mxu0 %v2811
  %2901 = vmatprep.subr.bf16.mxu0 %v2810
  %2902 = vmatpush1.bf16.msra.mxu0 %v2809
  %2903 = vmatprep.subr.bf16.mxu0 %v2808
  %2904 = vmatpush1.bf16.msra.mxu0 %v2807
  %2905 = vmatprep.subr.bf16.mxu0 0
  %2906 = vmatpush2.bf16.msra.mxu0 0
  %2907 = vmatprep.subr.bf16.mxu0 0
  %2908 = vmatpush2.bf16.msra.mxu0 0
  %2909 = vmatprep.subr.bf16.mxu0 0
  %2910 = vmatpush2.bf16.msra.mxu0 0
  %2911 = vmatprep.subr.bf16.mxu0 0
  %2912 = vmatpush2.bf16.msra.mxu0 0
  %2913 = vmatprep.subr.bf16.mxu0 0
  %2914 = vmatpush2.bf16.msra.mxu0 0
  %2915 = vmatprep.subr.bf16.mxu0 0
  %2916 = vmatpush2.bf16.msra.mxu0 0
  %2917 = vmatprep.subr.bf16.mxu0 %v2826
  %2918 = vmatpush2.bf16.msra.mxu0 %v2825
  %2919 = vmatprep.subr.bf16.mxu0 %v2824
  %2920 = vmatpush2.bf16.msra.mxu0 %v2823
  %2921 = vmatprep.mubr.bf16.mxu0 %v2848
  %2922 = vmatmul.mubr.bf16.gmra.mxu0 %v2705
  %v2923 = vpop.f32.mrf.mxu0
  %v2924 = vadd.f32 0.0, %v2923
  %v2925 = vpop.f32.mrf.mxu0
  %v2926 = vadd.f32 0.0, %v2925
  %v2927 = vpop.f32.mrf.mxu0
  %v2928 = vadd.f32 0.0, %v2927
  %v2929 = vpop.f32.mrf.mxu0
  %v2930 = vadd.f32 0.0, %v2929
  %2931 = vmatprep.mubr.bf16.mxu0 %v2851
  %2932 = vmatmul.mubr.bf16.gmra.mxu0 %v2707
  %v2933 = vpop.f32.mrf.mxu0
  %v2934 = vadd.f32 0.0, %v2933
  %v2935 = vpop.f32.mrf.mxu0
  %v2936 = vadd.f32 0.0, %v2935
  %v2937 = vpop.f32.mrf.mxu0
  %v2938 = vadd.f32 0.0, %v2937
  %v2939 = vpop.f32.mrf.mxu0
  %v2940 = vadd.f32 0.0, %v2939
  %2941 = vmatprep.mubr.bf16.mxu0 %v2854
  %2942 = vmatmul.mubr.bf16.gmra.mxu0 %v2709
  %v2943 = vpop.f32.mrf.mxu0
  %v2944 = vadd.f32 0.0, %v2943
  %v2945 = vpop.f32.mrf.mxu0
  %v2946 = vadd.f32 0.0, %v2945
  %v2947 = vpop.f32.mrf.mxu0
  %v2948 = vadd.f32 0.0, %v2947
  %v2949 = vpop.f32.mrf.mxu0
  %v2950 = vadd.f32 0.0, %v2949
  %2951 = vmatprep.mubr.bf16.mxu0 %v2857
  %2952 = vmatmul.mubr.bf16.gmra.mxu0 %v2711
  %v2953 = vpop.f32.mrf.mxu0
  %v2954 = vadd.f32 0.0, %v2953
  %v2955 = vpop.f32.mrf.mxu0
  %v2956 = vadd.f32 0.0, %v2955
  %v2957 = vpop.f32.mrf.mxu0
  %v2958 = vadd.f32 0.0, %v2957
  %v2959 = vpop.f32.mrf.mxu0
  %v2960 = vadd.f32 0.0, %v2959
  %2961 = vmatprep.mubr.bf16.mxu0 %v2860
  %2962 = vmatmul.mubr.bf16.gmra.mxu0 %v2713
  %v2963 = vpop.f32.mrf.mxu0
  %v2964 = vadd.f32 0.0, %v2963
  %v2965 = vpop.f32.mrf.mxu0
  %v2966 = vadd.f32 0.0, %v2965
  %v2967 = vpop.f32.mrf.mxu0
  %v2968 = vadd.f32 0.0, %v2967
  %v2969 = vpop.f32.mrf.mxu0
  %v2970 = vadd.f32 0.0, %v2969
  %2971 = vmatprep.mubr.bf16.mxu0 %v2863
  %2972 = vmatmul.mubr.bf16.gmra.mxu0 %v2715
  %v2973 = vpop.f32.mrf.mxu0
  %v2974 = vadd.f32 0.0, %v2973
  %v2975 = vpop.f32.mrf.mxu0
  %v2976 = vadd.f32 0.0, %v2975
  %v2977 = vpop.f32.mrf.mxu0
  %v2978 = vadd.f32 0.0, %v2977
  %v2979 = vpop.f32.mrf.mxu0
  %v2980 = vadd.f32 0.0, %v2979
  %2981 = vmatprep.mubr.bf16.mxu0 %v2866
  %2982 = vmatmul.mubr.bf16.gmra.mxu0 %v2717
  %v2983 = vpop.f32.mrf.mxu0
  %v2984 = vadd.f32 0.0, %v2983
  %v2985 = vpop.f32.mrf.mxu0
  %v2986 = vadd.f32 0.0, %v2985
  %v2987 = vpop.f32.mrf.mxu0
  %v2988 = vadd.f32 0.0, %v2987
  %v2989 = vpop.f32.mrf.mxu0
  %v2990 = vadd.f32 0.0, %v2989
  %2991 = vmatprep.mubr.bf16.mxu0 %v2869
  %2992 = vmatmul.mubr.bf16.gmra.mxu0 %v2719
  %v2993 = vpop.f32.mrf.mxu0
  %v2994 = vadd.f32 0.0, %v2993
  %v2995 = vpop.f32.mrf.mxu0
  %v2996 = vadd.f32 0.0, %v2995
  %v2997 = vpop.f32.mrf.mxu0
  %v2998 = vadd.f32 0.0, %v2997
  %v2999 = vpop.f32.mrf.mxu0
  %v3000 = vadd.f32 0.0, %v2999
  %3001 = vmatprep.mubr.bf16.mxu0 %v2872
  %3002 = vmatmul.mubr.bf16.gmra.mxu0 %v2721
  %v3003 = vpop.f32.mrf.mxu0
  %v3004 = vadd.f32 0.0, %v3003
  %v3005 = vpop.f32.mrf.mxu0
  %v3006 = vadd.f32 0.0, %v3005
  %v3007 = vpop.f32.mrf.mxu0
  %v3008 = vadd.f32 0.0, %v3007
  %v3009 = vpop.f32.mrf.mxu0
  %v3010 = vadd.f32 0.0, %v3009
  %3011 = vmatprep.mubr.bf16.mxu0 %v2875
  %3012 = vmatmul.mubr.bf16.gmra.mxu0 %v2723
  %v3013 = vpop.f32.mrf.mxu0
  %v3014 = vadd.f32 0.0, %v3013
  %v3015 = vpop.f32.mrf.mxu0
  %v3016 = vadd.f32 0.0, %v3015
  %v3017 = vpop.f32.mrf.mxu0
  %v3018 = vadd.f32 0.0, %v3017
  %v3019 = vpop.f32.mrf.mxu0
  %v3020 = vadd.f32 0.0, %v3019
  %3021 = vmatprep.mubr.bf16.mxu0 %v2878
  %3022 = vmatmul.mubr.bf16.gmra.mxu0 %v2725
  %v3023 = vpop.f32.mrf.mxu0
  %v3024 = vadd.f32 0.0, %v3023
  %v3025 = vpop.f32.mrf.mxu0
  %v3026 = vadd.f32 0.0, %v3025
  %v3027 = vpop.f32.mrf.mxu0
  %v3028 = vadd.f32 0.0, %v3027
  %v3029 = vpop.f32.mrf.mxu0
  %v3030 = vadd.f32 0.0, %v3029
  %3031 = vmatprep.mubr.bf16.mxu0 %v2881
  %3032 = vmatmul.mubr.bf16.gmra.mxu0 %v2727
  %v3033 = vpop.f32.mrf.mxu0
  %v3034 = vadd.f32 0.0, %v3033
  %v3035 = vpop.f32.mrf.mxu0
  %v3036 = vadd.f32 0.0, %v3035
  %v3037 = vpop.f32.mrf.mxu0
  %v3038 = vadd.f32 0.0, %v3037
  %v3039 = vpop.f32.mrf.mxu0
  %v3040 = vadd.f32 0.0, %v3039
  %3041 = vmatprep.mubr.bf16.mxu0 %v2884
  %3042 = vmatmul.mubr.bf16.gmra.mxu0 %v2729
  %v3043 = vpop.f32.mrf.mxu0
  %v3044 = vadd.f32 0.0, %v3043
  %v3045 = vpop.f32.mrf.mxu0
  %v3046 = vadd.f32 0.0, %v3045
  %v3047 = vpop.f32.mrf.mxu0
  %v3048 = vadd.f32 0.0, %v3047
  %v3049 = vpop.f32.mrf.mxu0
  %v3050 = vadd.f32 0.0, %v3049
  %3051 = vmatprep.mubr.bf16.mxu0 %v2887
  %3052 = vmatmul.mubr.bf16.gmra.mxu0 %v2731
  %v3053 = vpop.f32.mrf.mxu0
  %v3054 = vadd.f32 0.0, %v3053
  %v3055 = vpop.f32.mrf.mxu0
  %v3056 = vadd.f32 0.0, %v3055
  %v3057 = vpop.f32.mrf.mxu0
  %v3058 = vadd.f32 0.0, %v3057
  %v3059 = vpop.f32.mrf.mxu0
  %v3060 = vadd.f32 0.0, %v3059
  %3061 = vdwg.mxu0
  %v3062 = vadd.f32 %v2487, %v2924
  %v3063 = vadd.f32 %v2488, %v2926
  %v3064 = vadd.f32 %v2489, %v2928
  %v3065 = vadd.f32 %v2490, %v2930
  %v3066 = vadd.f32 %v2491, %v2934
  %v3067 = vadd.f32 %v2492, %v2936
  %v3068 = vadd.f32 %v2493, %v2938
  %v3069 = vadd.f32 %v2494, %v2940
  %v3070 = vadd.f32 %v2495, %v2944
  %v3071 = vadd.f32 %v2496, %v2946
  %v3072 = vadd.f32 %v2497, %v2948
  %v3073 = vadd.f32 %v2498, %v2950
  %v3074 = vadd.f32 %v2499, %v2954
  %v3075 = vadd.f32 %v2500, %v2956
  %v3076 = vadd.f32 %v2501, %v2958
  %v3077 = vadd.f32 %v2502, %v2960
  %v3078 = vadd.f32 %v2503, %v2964
  %v3079 = vadd.f32 %v2504, %v2966
  %v3080 = vadd.f32 %v2505, %v2968
  %v3081 = vadd.f32 %v2506, %v2970
  %v3082 = vadd.f32 %v2507, %v2974
  %v3083 = vadd.f32 %v2508, %v2976
  %v3084 = vadd.f32 %v2509, %v2978
  %v3085 = vadd.f32 %v2510, %v2980
  %v3086 = vadd.f32 %v2511, %v2984
  %v3087 = vadd.f32 %v2512, %v2986
  %v3088 = vadd.f32 %v2513, %v2988
  %v3089 = vadd.f32 %v2514, %v2990
  %v3090 = vadd.f32 %v2515, %v2994
  %v3091 = vadd.f32 %v2516, %v2996
  %v3092 = vadd.f32 %v2517, %v2998
  %v3093 = vadd.f32 %v2518, %v3000
  %v3094 = vadd.f32 %v2519, %v3004
  %v3095 = vadd.f32 %v2520, %v3006
  %v3096 = vadd.f32 %v2521, %v3008
  %v3097 = vadd.f32 %v2522, %v3010
  %v3098 = vadd.f32 %v2523, %v3014
  %v3099 = vadd.f32 %v2524, %v3016
  %v3100 = vadd.f32 %v2525, %v3018
  %v3101 = vadd.f32 %v2526, %v3020
  %v3102 = vadd.f32 %v2527, %v3024
  %v3103 = vadd.f32 %v2528, %v3026
  %v3104 = vadd.f32 %v2529, %v3028
  %v3105 = vadd.f32 %v2530, %v3030
  %v3106 = vadd.f32 %v2531, %v3034
  %v3107 = vadd.f32 %v2532, %v3036
  %v3108 = vadd.f32 %v2533, %v3038
  %v3109 = vadd.f32 %v2534, %v3040
  %v3110 = vadd.f32 %v2535, %v3044
  %v3111 = vadd.f32 %v2536, %v3046
  %v3112 = vadd.f32 %v2537, %v3048
  %v3113 = vadd.f32 %v2538, %v3050
  %v3114 = vadd.f32 %v2539, %v3054
  %v3115 = vadd.f32 %v2540, %v3056
  %v3116 = vadd.f32 %v2541, %v3058
  %v3117 = vadd.f32 %v2542, %v3060
  %v3118 = vld [vmem:[%s1968] sm:$0xff]
  %v3119 = vld [vmem:[%s1968 + $0x8] sm:$0xff]
  %v3120 = vld [vmem:[%s1968 + $0x10] sm:$0x11]
  %v3121 = vld [vmem:[%s1968 + $0x18] sm:$0xff]
  %v3122 = vld [vmem:[%s1968 + $0x20] sm:$0xff]
  %v3123 = vld [vmem:[%s1968 + $0x28] sm:$0x11]
  %v3124 = vld [vmem:[%s1968 + $0x30] sm:$0xff]
  %v3125 = vld [vmem:[%s1968 + $0x38] sm:$0xff]
  %v3126 = vld [vmem:[%s1968 + $0x40] sm:$0x11]
  %v3127 = vld [vmem:[%s1968 + $0x48] sm:$0xff]
  %v3128 = vld [vmem:[%s1968 + $0x50] sm:$0xff]
  %v3129 = vld [vmem:[%s1968 + $0x58] sm:$0x11]
  %v3130 = vld [vmem:[%s1968 + $0x60] sm:$0xff]
  %v3131 = vld [vmem:[%s1968 + $0x68] sm:$0xff]
  %v3132 = vld [vmem:[%s1968 + $0x70] sm:$0x11]
  %v3133 = vld [vmem:[%s1968 + $0x78] sm:$0xff]
  %v3134 = vld [vmem:[%s1968 + $0x80] sm:$0xff]
  %v3135 = vld [vmem:[%s1968 + $0x88] sm:$0x11]
  %v3136 = vld [vmem:[%s1968 + $0x90] sm:$0xff]
  %v3137 = vld [vmem:[%s1968 + $0x98] sm:$0xff]
  %v3138 = vld [vmem:[%s1968 + $0xa0] sm:$0x11]
  %v3139 = vld [vmem:[%s1968 + $0xa8] sm:$0xff]
  %v3140 = vld [vmem:[%s1968 + $0xb0] sm:$0xff]
  %v3141 = vld [vmem:[%s1968 + $0xb8] sm:$0x11]
  %v3142 = vld [vmem:[%s1968 + $0xc0] sm:$0xff]
  %v3143 = vld [vmem:[%s1968 + $0xc8] sm:$0xff]
  %v3144 = vld [vmem:[%s1968 + $0xd0] sm:$0x11]
  %v3145 = vld [vmem:[%s1968 + $0xd8] sm:$0xff]
  %v3146 = vld [vmem:[%s1968 + $0xe0] sm:$0xff]
  %v3147 = vld [vmem:[%s1968 + $0xe8] sm:$0x11]
  %v3148 = vld [vmem:[%s1968 + $0xf0] sm:$0xff]
  %v3149 = vld [vmem:[%s1968 + $0xf8] sm:$0xff]
  %v3150 = vld [vmem:[%s1968 + $0x100] sm:$0x11]
  %v3151 = vld [vmem:[%s1968 + $0x108] sm:$0xff]
  %v3152 = vld [vmem:[%s1968 + $0x110] sm:$0xff]
  %v3153 = vld [vmem:[%s1968 + $0x118] sm:$0x11]
  %v3154 = vld [vmem:[%s1968 + $0x120] sm:$0xff]
  %v3155 = vld [vmem:[%s1968 + $0x128] sm:$0xff]
  %v3156 = vld [vmem:[%s1968 + $0x130] sm:$0x11]
  %v3157 = vld [vmem:[%s1968 + $0x138] sm:$0xff]
  %v3158 = vld [vmem:[%s1968 + $0x140] sm:$0xff]
  %v3159 = vld [vmem:[%s1968 + $0x148] sm:$0x11]
  %v3160 = vmax.bf16 %v3118, 0
  %v3161 = vmax.bf16 %v3119, 0
  %v3162 = vmax.bf16 %v3120, 0
  %v3163 = vmax.bf16 %v3121, 0
  %v3164 = vmax.bf16 %v3122, 0
  %v3165 = vmax.bf16 %v3123, 0
  %v3166 = vmax.bf16 %v3124, 0
  %v3167 = vmax.bf16 %v3125, 0
  %v3168 = vmax.bf16 %v3126, 0
  %v3169 = vmax.bf16 %v3127, 0
  %v3170 = vmax.bf16 %v3128, 0
  %v3171 = vmax.bf16 %v3129, 0
  %v3172 = vmax.bf16 %v3130, 0
  %v3173 = vmax.bf16 %v3131, 0
  %v3174 = vmax.bf16 %v3132, 0
  %v3175 = vmax.bf16 %v3133, 0
  %v3176 = vmax.bf16 %v3134, 0
  %v3177 = vmax.bf16 %v3135, 0
  %v3178 = vmax.bf16 %v3136, 0
  %v3179 = vmax.bf16 %v3137, 0
  %v3180 = vmax.bf16 %v3138, 0
  %v3181 = vmax.bf16 %v3139, 0
  %v3182 = vmax.bf16 %v3140, 0
  %v3183 = vmax.bf16 %v3141, 0
  %v3184 = vmax.bf16 %v3142, 0
  %v3185 = vmax.bf16 %v3143, 0
  %v3186 = vmax.bf16 %v3144, 0
  %v3187 = vmax.bf16 %v3145, 0
  %v3188 = vmax.bf16 %v3146, 0
  %v3189 = vmax.bf16 %v3147, 0
  %v3190 = vmax.bf16 %v3148, 0
  %v3191 = vmax.bf16 %v3149, 0
  %v3192 = vmax.bf16 %v3150, 0
  %v3193 = vmax.bf16 %v3151, 0
  %v3194 = vmax.bf16 %v3152, 0
  %v3195 = vmax.bf16 %v3153, 0
  %v3196 = vmax.bf16 %v3154, 0
  %v3197 = vmax.bf16 %v3155, 0
  %v3198 = vmax.bf16 %v3156, 0
  %v3199 = vmax.bf16 %v3157, 0
  %v3200 = vmax.bf16 %v3158, 0
  %v3201 = vmax.bf16 %v3159, 0
  %v3203 = vshrl.u32 %v3160, 16
  %v3205 = vrot.slane %v3203, 4
  %v3206 = vshll.u32 %v3160, 16
  %v3208 = vrot.slane %v3206, 5
  %v3209 = vor.u32 %v3205, %v3208
  %v3210 = vrot.slane %v3209, 4
  %v3212 = vshll.u32 %v3161, 16
  %v3214 = vrot.slane %v3212, 5
  %v3215 = vsel %vm1141, %v3210, %v3214
  %v3216 = vshrl.u32 %v3161, 16
  %v3218 = vrot.slane %v3216, 4
  %v3219 = vor.u32 %v3218, %v3214
  %v3220 = vrot.slane %v3219, 4
  %v3222 = vshll.u32 %v3162, 16
  %v3224 = vrot.slane %v3222, 5
  %v3225 = vsel %vm1141, %v3220, %v3224
  %v3227 = vshrl.u32 %v3163, 16
  %v3229 = vrot.slane %v3227, 4
  %v3230 = vshll.u32 %v3163, 16
  %v3232 = vrot.slane %v3230, 5
  %v3233 = vor.u32 %v3229, %v3232
  %v3234 = vrot.slane %v3233, 4
  %v3236 = vshll.u32 %v3164, 16
  %v3238 = vrot.slane %v3236, 5
  %v3239 = vsel %vm1141, %v3234, %v3238
  %v3240 = vshrl.u32 %v3164, 16
  %v3242 = vrot.slane %v3240, 4
  %v3243 = vor.u32 %v3242, %v3238
  %v3244 = vrot.slane %v3243, 4
  %v3246 = vshll.u32 %v3165, 16
  %v3248 = vrot.slane %v3246, 5
  %v3249 = vsel %vm1141, %v3244, %v3248
  %v3251 = vshrl.u32 %v3166, 16
  %v3253 = vrot.slane %v3251, 4
  %v3254 = vshll.u32 %v3166, 16
  %v3256 = vrot.slane %v3254, 5
  %v3257 = vor.u32 %v3253, %v3256
  %v3258 = vrot.slane %v3257, 4
  %v3260 = vshll.u32 %v3167, 16
  %v3262 = vrot.slane %v3260, 5
  %v3263 = vsel %vm1141, %v3258, %v3262
  %v3264 = vshrl.u32 %v3167, 16
  %v3266 = vrot.slane %v3264, 4
  %v3267 = vor.u32 %v3266, %v3262
  %v3268 = vrot.slane %v3267, 4
  %v3270 = vshll.u32 %v3168, 16
  %v3272 = vrot.slane %v3270, 5
  %v3273 = vsel %vm1141, %v3268, %v3272
  %v3275 = vshrl.u32 %v3169, 16
  %v3277 = vrot.slane %v3275, 4
  %v3278 = vshll.u32 %v3169, 16
  %v3280 = vrot.slane %v3278, 5
  %v3281 = vor.u32 %v3277, %v3280
  %v3282 = vrot.slane %v3281, 4
  %v3284 = vshll.u32 %v3170, 16
  %v3286 = vrot.slane %v3284, 5
  %v3287 = vsel %vm1141, %v3282, %v3286
  %v3288 = vshrl.u32 %v3170, 16
  %v3290 = vrot.slane %v3288, 4
  %v3291 = vor.u32 %v3290, %v3286
  %v3292 = vrot.slane %v3291, 4
  %v3294 = vshll.u32 %v3171, 16
  %v3296 = vrot.slane %v3294, 5
  %v3297 = vsel %vm1141, %v3292, %v3296
  %v3299 = vshrl.u32 %v3172, 16
  %v3301 = vrot.slane %v3299, 4
  %v3302 = vshll.u32 %v3172, 16
  %v3304 = vrot.slane %v3302, 5
  %v3305 = vor.u32 %v3301, %v3304
  %v3306 = vrot.slane %v3305, 4
  %v3308 = vshll.u32 %v3173, 16
  %v3310 = vrot.slane %v3308, 5
  %v3311 = vsel %vm1141, %v3306, %v3310
  %v3312 = vshrl.u32 %v3173, 16
  %v3314 = vrot.slane %v3312, 4
  %v3315 = vor.u32 %v3314, %v3310
  %v3316 = vrot.slane %v3315, 4
  %v3318 = vshll.u32 %v3174, 16
  %v3320 = vrot.slane %v3318, 5
  %v3321 = vsel %vm1141, %v3316, %v3320
  %v3323 = vshrl.u32 %v3175, 16
  %v3325 = vrot.slane %v3323, 4
  %v3326 = vshll.u32 %v3175, 16
  %v3328 = vrot.slane %v3326, 5
  %v3329 = vor.u32 %v3325, %v3328
  %v3330 = vrot.slane %v3329, 4
  %v3332 = vshll.u32 %v3176, 16
  %v3334 = vrot.slane %v3332, 5
  %v3335 = vsel %vm1141, %v3330, %v3334
  %v3336 = vshrl.u32 %v3176, 16
  %v3338 = vrot.slane %v3336, 4
  %v3339 = vor.u32 %v3338, %v3334
  %v3340 = vrot.slane %v3339, 4
  %v3342 = vshll.u32 %v3177, 16
  %v3344 = vrot.slane %v3342, 5
  %v3345 = vsel %vm1141, %v3340, %v3344
  %v3347 = vshrl.u32 %v3178, 16
  %v3349 = vrot.slane %v3347, 4
  %v3350 = vshll.u32 %v3178, 16
  %v3352 = vrot.slane %v3350, 5
  %v3353 = vor.u32 %v3349, %v3352
  %v3354 = vrot.slane %v3353, 4
  %v3356 = vshll.u32 %v3179, 16
  %v3358 = vrot.slane %v3356, 5
  %v3359 = vsel %vm1141, %v3354, %v3358
  %v3360 = vshrl.u32 %v3179, 16
  %v3362 = vrot.slane %v3360, 4
  %v3363 = vor.u32 %v3362, %v3358
  %v3364 = vrot.slane %v3363, 4
  %v3366 = vshll.u32 %v3180, 16
  %v3368 = vrot.slane %v3366, 5
  %v3369 = vsel %vm1141, %v3364, %v3368
  %v3371 = vshrl.u32 %v3181, 16
  %v3373 = vrot.slane %v3371, 4
  %v3374 = vshll.u32 %v3181, 16
  %v3376 = vrot.slane %v3374, 5
  %v3377 = vor.u32 %v3373, %v3376
  %v3378 = vrot.slane %v3377, 4
  %v3380 = vshll.u32 %v3182, 16
  %v3382 = vrot.slane %v3380, 5
  %v3383 = vsel %vm1141, %v3378, %v3382
  %v3384 = vshrl.u32 %v3182, 16
  %v3386 = vrot.slane %v3384, 4
  %v3387 = vor.u32 %v3386, %v3382
  %v3388 = vrot.slane %v3387, 4
  %v3390 = vshll.u32 %v3183, 16
  %v3392 = vrot.slane %v3390, 5
  %v3393 = vsel %vm1141, %v3388, %v3392
  %v3395 = vshrl.u32 %v3184, 16
  %v3397 = vrot.slane %v3395, 4
  %v3398 = vshll.u32 %v3184, 16
  %v3400 = vrot.slane %v3398, 5
  %v3401 = vor.u32 %v3397, %v3400
  %v3402 = vrot.slane %v3401, 4
  %v3404 = vshll.u32 %v3185, 16
  %v3406 = vrot.slane %v3404, 5
  %v3407 = vsel %vm1141, %v3402, %v3406
  %v3408 = vshrl.u32 %v3185, 16
  %v3410 = vrot.slane %v3408, 4
  %v3411 = vor.u32 %v3410, %v3406
  %v3412 = vrot.slane %v3411, 4
  %v3414 = vshll.u32 %v3186, 16
  %v3416 = vrot.slane %v3414, 5
  %v3417 = vsel %vm1141, %v3412, %v3416
  %v3419 = vshrl.u32 %v3187, 16
  %v3421 = vrot.slane %v3419, 4
  %v3422 = vshll.u32 %v3187, 16
  %v3424 = vrot.slane %v3422, 5
  %v3425 = vor.u32 %v3421, %v3424
  %v3426 = vrot.slane %v3425, 4
  %v3428 = vshll.u32 %v3188, 16
  %v3430 = vrot.slane %v3428, 5
  %v3431 = vsel %vm1141, %v3426, %v3430
  %v3432 = vshrl.u32 %v3188, 16
  %v3434 = vrot.slane %v3432, 4
  %v3435 = vor.u32 %v3434, %v3430
  %v3436 = vrot.slane %v3435, 4
  %v3438 = vshll.u32 %v3189, 16
  %v3440 = vrot.slane %v3438, 5
  %v3441 = vsel %vm1141, %v3436, %v3440
  %v3443 = vshrl.u32 %v3190, 16
  %v3445 = vrot.slane %v3443, 4
  %v3446 = vshll.u32 %v3190, 16
  %v3448 = vrot.slane %v3446, 5
  %v3449 = vor.u32 %v3445, %v3448
  %v3450 = vrot.slane %v3449, 4
  %v3452 = vshll.u32 %v3191, 16
  %v3454 = vrot.slane %v3452, 5
  %v3455 = vsel %vm1141, %v3450, %v3454
  %v3456 = vshrl.u32 %v3191, 16
  %v3458 = vrot.slane %v3456, 4
  %v3459 = vor.u32 %v3458, %v3454
  %v3460 = vrot.slane %v3459, 4
  %v3462 = vshll.u32 %v3192, 16
  %v3464 = vrot.slane %v3462, 5
  %v3465 = vsel %vm1141, %v3460, %v3464
  %v3467 = vshrl.u32 %v3193, 16
  %v3469 = vrot.slane %v3467, 4
  %v3470 = vshll.u32 %v3193, 16
  %v3472 = vrot.slane %v3470, 5
  %v3473 = vor.u32 %v3469, %v3472
  %v3474 = vrot.slane %v3473, 4
  %v3476 = vshll.u32 %v3194, 16
  %v3478 = vrot.slane %v3476, 5
  %v3479 = vsel %vm1141, %v3474, %v3478
  %v3480 = vshrl.u32 %v3194, 16
  %v3482 = vrot.slane %v3480, 4
  %v3483 = vor.u32 %v3482, %v3478
  %v3484 = vrot.slane %v3483, 4
  %v3486 = vshll.u32 %v3195, 16
  %v3488 = vrot.slane %v3486, 5
  %v3489 = vsel %vm1141, %v3484, %v3488
  %v3491 = vshrl.u32 %v3196, 16
  %v3493 = vrot.slane %v3491, 4
  %v3494 = vshll.u32 %v3196, 16
  %v3496 = vrot.slane %v3494, 5
  %v3497 = vor.u32 %v3493, %v3496
  %v3498 = vrot.slane %v3497, 4
  %v3500 = vshll.u32 %v3197, 16
  %v3502 = vrot.slane %v3500, 5
  %v3503 = vsel %vm1141, %v3498, %v3502
  %v3504 = vshrl.u32 %v3197, 16
  %v3506 = vrot.slane %v3504, 4
  %v3507 = vor.u32 %v3506, %v3502
  %v3508 = vrot.slane %v3507, 4
  %v3510 = vshll.u32 %v3198, 16
  %v3512 = vrot.slane %v3510, 5
  %v3513 = vsel %vm1141, %v3508, %v3512
  %v3515 = vshrl.u32 %v3199, 16
  %v3517 = vrot.slane %v3515, 4
  %v3518 = vshll.u32 %v3199, 16
  %v3520 = vrot.slane %v3518, 5
  %v3521 = vor.u32 %v3517, %v3520
  %v3522 = vrot.slane %v3521, 4
  %v3524 = vshll.u32 %v3200, 16
  %v3526 = vrot.slane %v3524, 5
  %v3527 = vsel %vm1141, %v3522, %v3526
  %v3528 = vshrl.u32 %v3200, 16
  %v3530 = vrot.slane %v3528, 4
  %v3531 = vor.u32 %v3530, %v3526
  %v3532 = vrot.slane %v3531, 4
  %v3534 = vshll.u32 %v3201, 16
  %v3536 = vrot.slane %v3534, 5
  %v3537 = vsel %vm1141, %v3532, %v3536
  %s3538 = scalar_lea.vmem %s1, 800
  %v3539 = vld [vmem:[%s3538] sm:$0xff]
  %v3540 = vld [vmem:[%s3538 + $0x8] sm:$0xff]
  %v3541 = vld [vmem:[%s3538 + $0x10] sm:$0xff]
  %v3542 = vld [vmem:[%s3538 + $0x18] sm:$0xff]
  %v3543 = vld [vmem:[%s3538 + $0x20] sm:$0xff]
  %v3544 = vld [vmem:[%s3538 + $0x28] sm:$0xff]
  %v3545 = vld [vmem:[%s3538 + $0x30] sm:$0xff]
  %v3546 = vld [vmem:[%s3538 + $0x38] sm:$0xff]
  %v3547 = vld [vmem:[%s3538 + $0x40] sm:$0xff]
  %v3548 = vld [vmem:[%s3538 + $0x48] sm:$0xff]
  %v3549 = vld [vmem:[%s3538 + $0x50] sm:$0xff]
  %v3550 = vld [vmem:[%s3538 + $0x58] sm:$0xff]
  %v3551 = vld [vmem:[%s3538 + $0x60] sm:$0xff]
  %v3552 = vld [vmem:[%s3538 + $0x68] sm:$0xff]
  %v3553 = vld [vmem:[%s3538 + $0x70] sm:$0xff]
  %v3554 = vld [vmem:[%s3538 + $0x78] sm:$0xff]
  %v3555 = vld [vmem:[%s3538 + $0x80] sm:$0xff]
  %v3556 = vld [vmem:[%s3538 + $0x88] sm:$0xff]
  %v3557 = vld [vmem:[%s3538 + $0x90] sm:$0xff]
  %v3558 = vld [vmem:[%s3538 + $0x98] sm:$0xff]
  %v3559 = vunpack.c.l.b16 %v3215
  %v3560 = vunpack.c.h.b16 %v3215
  %v3561 = vunpack.c.l.b16 %v3225
  %v3562 = vunpack.c.h.b16 %v3225
  %v3563 = vunpack.c.l.b16 %v3239
  %v3564 = vunpack.c.h.b16 %v3239
  %v3565 = vunpack.c.l.b16 %v3249
  %v3566 = vunpack.c.h.b16 %v3249
  %v3567 = vunpack.c.l.b16 %v3263
  %v3568 = vunpack.c.h.b16 %v3263
  %v3569 = vunpack.c.l.b16 %v3273
  %v3570 = vunpack.c.h.b16 %v3273
  %v3571 = vunpack.c.l.b16 %v3287
  %v3572 = vunpack.c.h.b16 %v3287
  %v3573 = vunpack.c.l.b16 %v3297
  %v3574 = vunpack.c.h.b16 %v3297
  %v3575 = vunpack.c.l.b16 %v3311
  %v3576 = vunpack.c.h.b16 %v3311
  %v3577 = vunpack.c.l.b16 %v3321
  %v3578 = vunpack.c.h.b16 %v3321
  %v3579 = vunpack.c.l.b16 %v3335
  %v3580 = vunpack.c.h.b16 %v3335
  %v3581 = vunpack.c.l.b16 %v3345
  %v3582 = vunpack.c.h.b16 %v3345
  %v3583 = vunpack.c.l.b16 %v3359
  %v3584 = vunpack.c.h.b16 %v3359
  %v3585 = vunpack.c.l.b16 %v3369
  %v3586 = vunpack.c.h.b16 %v3369
  %v3587 = vunpack.c.l.b16 %v3383
  %v3588 = vunpack.c.h.b16 %v3383
  %v3589 = vunpack.c.l.b16 %v3393
  %v3590 = vunpack.c.h.b16 %v3393
  %v3591 = vunpack.c.l.b16 %v3407
  %v3592 = vunpack.c.h.b16 %v3407
  %v3593 = vunpack.c.l.b16 %v3417
  %v3594 = vunpack.c.h.b16 %v3417
  %v3595 = vunpack.c.l.b16 %v3431
  %v3596 = vunpack.c.h.b16 %v3431
  %v3597 = vunpack.c.l.b16 %v3441
  %v3598 = vunpack.c.h.b16 %v3441
  %v3599 = vunpack.c.l.b16 %v3455
  %v3600 = vunpack.c.h.b16 %v3455
  %v3601 = vunpack.c.l.b16 %v3465
  %v3602 = vunpack.c.h.b16 %v3465
  %v3603 = vunpack.c.l.b16 %v3479
  %v3604 = vunpack.c.h.b16 %v3479
  %v3605 = vunpack.c.l.b16 %v3489
  %v3606 = vunpack.c.h.b16 %v3489
  %v3607 = vunpack.c.l.b16 %v3503
  %v3608 = vunpack.c.h.b16 %v3503
  %v3609 = vunpack.c.l.b16 %v3513
  %v3610 = vunpack.c.h.b16 %v3513
  %v3611 = vunpack.c.l.b16 %v3527
  %v3612 = vunpack.c.h.b16 %v3527
  %v3613 = vunpack.c.l.b16 %v3537
  %v3614 = vunpack.c.h.b16 %v3537
  %v3615 = vpack.c.b16 %v3561, %v3559
  %v3616 = vpack.c.b16 %v3562, %v3560
  %v3617 = vpack.c.b16 %v3565, %v3563
  %v3618 = vpack.c.b16 %v3566, %v3564
  %v3619 = vpack.c.b16 %v3569, %v3567
  %v3620 = vpack.c.b16 %v3570, %v3568
  %v3621 = vpack.c.b16 %v3573, %v3571
  %v3622 = vpack.c.b16 %v3574, %v3572
  %v3623 = vpack.c.b16 %v3577, %v3575
  %v3624 = vpack.c.b16 %v3578, %v3576
  %v3625 = vpack.c.b16 %v3581, %v3579
  %v3626 = vpack.c.b16 %v3582, %v3580
  %v3627 = vpack.c.b16 %v3585, %v3583
  %v3628 = vpack.c.b16 %v3586, %v3584
  %v3629 = vpack.c.b16 %v3589, %v3587
  %v3630 = vpack.c.b16 %v3590, %v3588
  %v3631 = vpack.c.b16 %v3593, %v3591
  %v3632 = vpack.c.b16 %v3594, %v3592
  %v3633 = vpack.c.b16 %v3597, %v3595
  %v3634 = vpack.c.b16 %v3598, %v3596
  %v3635 = vpack.c.b16 %v3601, %v3599
  %v3636 = vpack.c.b16 %v3602, %v3600
  %v3637 = vpack.c.b16 %v3605, %v3603
  %v3638 = vpack.c.b16 %v3606, %v3604
  %v3639 = vpack.c.b16 %v3609, %v3607
  %v3640 = vpack.c.b16 %v3610, %v3608
  %v3641 = vpack.c.b16 %v3613, %v3611
  %v3642 = vpack.c.b16 %v3614, %v3612
  %v3677 = vunpack.c.l.b16 %v3539
  %v3678 = vunpack.c.h.b16 %v3539
  %v3679 = vunpack.c.l.b16 %v3540
  %v3680 = vunpack.c.h.b16 %v3540
  %v3681 = vunpack.c.l.b16 %v3541
  %v3682 = vunpack.c.h.b16 %v3541
  %v3683 = vunpack.c.l.b16 %v3542
  %v3684 = vunpack.c.h.b16 %v3542
  %v3685 = vunpack.c.l.b16 %v3543
  %v3686 = vunpack.c.h.b16 %v3543
  %v3687 = vunpack.c.l.b16 %v3544
  %v3688 = vunpack.c.h.b16 %v3544
  %v3689 = vunpack.c.l.b16 %v3545
  %v3690 = vunpack.c.h.b16 %v3545
  %v3691 = vunpack.c.l.b16 %v3546
  %v3692 = vunpack.c.h.b16 %v3546
  %v3693 = vunpack.c.l.b16 %v3547
  %v3694 = vunpack.c.h.b16 %v3547
  %v3695 = vunpack.c.l.b16 %v3548
  %v3696 = vunpack.c.h.b16 %v3548
  %v3697 = vunpack.c.l.b16 %v3549
  %v3698 = vunpack.c.h.b16 %v3549
  %v3699 = vunpack.c.l.b16 %v3550
  %v3700 = vunpack.c.h.b16 %v3550
  %v3701 = vunpack.c.l.b16 %v3551
  %v3702 = vunpack.c.h.b16 %v3551
  %v3703 = vunpack.c.l.b16 %v3552
  %v3704 = vunpack.c.h.b16 %v3552
  %v3705 = vunpack.c.l.b16 %v3553
  %v3706 = vunpack.c.h.b16 %v3553
  %v3707 = vunpack.c.l.b16 %v3554
  %v3708 = vunpack.c.h.b16 %v3554
  %v3709 = vunpack.c.l.b16 %v3555
  %v3710 = vunpack.c.h.b16 %v3555
  %v3711 = vunpack.c.l.b16 %v3556
  %v3712 = vunpack.c.h.b16 %v3556
  %v3713 = vunpack.c.l.b16 %v3557
  %v3714 = vunpack.c.h.b16 %v3557
  %v3715 = vunpack.c.l.b16 %v3558
  %v3716 = vunpack.c.h.b16 %v3558
  %v3717 = vpack.c.b16 %v3679, %v3677
  %v3718 = vpack.c.b16 %v3680, %v3678
  %v3719 = vpack.c.b16 %v3683, %v3681
  %v3720 = vpack.c.b16 %v3684, %v3682
  %v3721 = vpack.c.b16 %v3687, %v3685
  %v3722 = vpack.c.b16 %v3688, %v3686
  %v3723 = vpack.c.b16 %v3691, %v3689
  %v3724 = vpack.c.b16 %v3692, %v3690
  %v3725 = vpack.c.b16 %v3695, %v3693
  %v3726 = vpack.c.b16 %v3696, %v3694
  %v3727 = vpack.c.b16 %v3699, %v3697
  %v3728 = vpack.c.b16 %v3700, %v3698
  %v3729 = vpack.c.b16 %v3703, %v3701
  %v3730 = vpack.c.b16 %v3704, %v3702
  %v3731 = vpack.c.b16 %v3707, %v3705
  %v3732 = vpack.c.b16 %v3708, %v3706
  %v3733 = vpack.c.b16 %v3711, %v3709
  %v3734 = vpack.c.b16 %v3712, %v3710
  %v3735 = vpack.c.b16 %v3715, %v3713
  %v3736 = vpack.c.b16 %v3716, %v3714
  %v3758 = vsel %vm398, %v3616, 0
  %v3761 = vsel %vm398, %v3618, 0
  %v3764 = vsel %vm398, %v3620, 0
  %v3767 = vsel %vm398, %v3622, 0
  %v3770 = vsel %vm398, %v3624, 0
  %v3773 = vsel %vm398, %v3626, 0
  %v3776 = vsel %vm398, %v3628, 0
  %v3779 = vsel %vm398, %v3630, 0
  %v3782 = vsel %vm398, %v3632, 0
  %v3785 = vsel %vm398, %v3634, 0
  %v3788 = vsel %vm398, %v3636, 0
  %v3791 = vsel %vm398, %v3638, 0
  %v3794 = vsel %vm398, %v3640, 0
  %v3797 = vsel %vm398, %v3642, 0
  %3799 = vmatprep.subr.bf16.mxu0 %v3732
  %3800 = vmatpush1.bf16.msra.mxu0 %v3731
  %3801 = vmatprep.subr.bf16.mxu0 %v3730
  %3802 = vmatpush1.bf16.msra.mxu0 %v3729
  %3803 = vmatprep.subr.bf16.mxu0 %v3728
  %3804 = vmatpush1.bf16.msra.mxu0 %v3727
  %3805 = vmatprep.subr.bf16.mxu0 %v3726
  %3806 = vmatpush1.bf16.msra.mxu0 %v3725
  %3807 = vmatprep.subr.bf16.mxu0 %v3724
  %3808 = vmatpush1.bf16.msra.mxu0 %v3723
  %3809 = vmatprep.subr.bf16.mxu0 %v3722
  %3810 = vmatpush1.bf16.msra.mxu0 %v3721
  %3811 = vmatprep.subr.bf16.mxu0 %v3720
  %3812 = vmatpush1.bf16.msra.mxu0 %v3719
  %3813 = vmatprep.subr.bf16.mxu0 %v3718
  %3814 = vmatpush1.bf16.msra.mxu0 %v3717
  %3815 = vmatprep.subr.bf16.mxu0 0
  %3816 = vmatpush2.bf16.msra.mxu0 0
  %3817 = vmatprep.subr.bf16.mxu0 0
  %3818 = vmatpush2.bf16.msra.mxu0 0
  %3819 = vmatprep.subr.bf16.mxu0 0
  %3820 = vmatpush2.bf16.msra.mxu0 0
  %3821 = vmatprep.subr.bf16.mxu0 0
  %3822 = vmatpush2.bf16.msra.mxu0 0
  %3823 = vmatprep.subr.bf16.mxu0 0
  %3824 = vmatpush2.bf16.msra.mxu0 0
  %3825 = vmatprep.subr.bf16.mxu0 0
  %3826 = vmatpush2.bf16.msra.mxu0 0
  %3827 = vmatprep.subr.bf16.mxu0 %v3736
  %3828 = vmatpush2.bf16.msra.mxu0 %v3735
  %3829 = vmatprep.subr.bf16.mxu0 %v3734
  %3830 = vmatpush2.bf16.msra.mxu0 %v3733
  %3831 = vmatprep.mubr.bf16.mxu0 %v3758
  %3832 = vmatmul.mubr.bf16.gmra.mxu0 %v3615
  %v3833 = vpop.f32.mrf.mxu0
  %v3834 = vadd.f32 0.0, %v3833
  %v3835 = vpop.f32.mrf.mxu0
  %v3836 = vadd.f32 0.0, %v3835
  %v3837 = vpop.f32.mrf.mxu0
  %v3838 = vadd.f32 0.0, %v3837
  %v3839 = vpop.f32.mrf.mxu0
  %v3840 = vadd.f32 0.0, %v3839
  %3841 = vmatprep.mubr.bf16.mxu0 %v3761
  %3842 = vmatmul.mubr.bf16.gmra.mxu0 %v3617
  %v3843 = vpop.f32.mrf.mxu0
  %v3844 = vadd.f32 0.0, %v3843
  %v3845 = vpop.f32.mrf.mxu0
  %v3846 = vadd.f32 0.0, %v3845
  %v3847 = vpop.f32.mrf.mxu0
  %v3848 = vadd.f32 0.0, %v3847
  %v3849 = vpop.f32.mrf.mxu0
  %v3850 = vadd.f32 0.0, %v3849
  %3851 = vmatprep.mubr.bf16.mxu0 %v3764
  %3852 = vmatmul.mubr.bf16.gmra.mxu0 %v3619
  %v3853 = vpop.f32.mrf.mxu0
  %v3854 = vadd.f32 0.0, %v3853
  %v3855 = vpop.f32.mrf.mxu0
  %v3856 = vadd.f32 0.0, %v3855
  %v3857 = vpop.f32.mrf.mxu0
  %v3858 = vadd.f32 0.0, %v3857
  %v3859 = vpop.f32.mrf.mxu0
  %v3860 = vadd.f32 0.0, %v3859
  %3861 = vmatprep.mubr.bf16.mxu0 %v3767
  %3862 = vmatmul.mubr.bf16.gmra.mxu0 %v3621
  %v3863 = vpop.f32.mrf.mxu0
  %v3864 = vadd.f32 0.0, %v3863
  %v3865 = vpop.f32.mrf.mxu0
  %v3866 = vadd.f32 0.0, %v3865
  %v3867 = vpop.f32.mrf.mxu0
  %v3868 = vadd.f32 0.0, %v3867
  %v3869 = vpop.f32.mrf.mxu0
  %v3870 = vadd.f32 0.0, %v3869
  %3871 = vmatprep.mubr.bf16.mxu0 %v3770
  %3872 = vmatmul.mubr.bf16.gmra.mxu0 %v3623
  %v3873 = vpop.f32.mrf.mxu0
  %v3874 = vadd.f32 0.0, %v3873
  %v3875 = vpop.f32.mrf.mxu0
  %v3876 = vadd.f32 0.0, %v3875
  %v3877 = vpop.f32.mrf.mxu0
  %v3878 = vadd.f32 0.0, %v3877
  %v3879 = vpop.f32.mrf.mxu0
  %v3880 = vadd.f32 0.0, %v3879
  %3881 = vmatprep.mubr.bf16.mxu0 %v3773
  %3882 = vmatmul.mubr.bf16.gmra.mxu0 %v3625
  %v3883 = vpop.f32.mrf.mxu0
  %v3884 = vadd.f32 0.0, %v3883
  %v3885 = vpop.f32.mrf.mxu0
  %v3886 = vadd.f32 0.0, %v3885
  %v3887 = vpop.f32.mrf.mxu0
  %v3888 = vadd.f32 0.0, %v3887
  %v3889 = vpop.f32.mrf.mxu0
  %v3890 = vadd.f32 0.0, %v3889
  %3891 = vmatprep.mubr.bf16.mxu0 %v3776
  %3892 = vmatmul.mubr.bf16.gmra.mxu0 %v3627
  %v3893 = vpop.f32.mrf.mxu0
  %v3894 = vadd.f32 0.0, %v3893
  %v3895 = vpop.f32.mrf.mxu0
  %v3896 = vadd.f32 0.0, %v3895
  %v3897 = vpop.f32.mrf.mxu0
  %v3898 = vadd.f32 0.0, %v3897
  %v3899 = vpop.f32.mrf.mxu0
  %v3900 = vadd.f32 0.0, %v3899
  %3901 = vmatprep.mubr.bf16.mxu0 %v3779
  %3902 = vmatmul.mubr.bf16.gmra.mxu0 %v3629
  %v3903 = vpop.f32.mrf.mxu0
  %v3904 = vadd.f32 0.0, %v3903
  %v3905 = vpop.f32.mrf.mxu0
  %v3906 = vadd.f32 0.0, %v3905
  %v3907 = vpop.f32.mrf.mxu0
  %v3908 = vadd.f32 0.0, %v3907
  %v3909 = vpop.f32.mrf.mxu0
  %v3910 = vadd.f32 0.0, %v3909
  %3911 = vmatprep.mubr.bf16.mxu0 %v3782
  %3912 = vmatmul.mubr.bf16.gmra.mxu0 %v3631
  %v3913 = vpop.f32.mrf.mxu0
  %v3914 = vadd.f32 0.0, %v3913
  %v3915 = vpop.f32.mrf.mxu0
  %v3916 = vadd.f32 0.0, %v3915
  %v3917 = vpop.f32.mrf.mxu0
  %v3918 = vadd.f32 0.0, %v3917
  %v3919 = vpop.f32.mrf.mxu0
  %v3920 = vadd.f32 0.0, %v3919
  %3921 = vmatprep.mubr.bf16.mxu0 %v3785
  %3922 = vmatmul.mubr.bf16.gmra.mxu0 %v3633
  %v3923 = vpop.f32.mrf.mxu0
  %v3924 = vadd.f32 0.0, %v3923
  %v3925 = vpop.f32.mrf.mxu0
  %v3926 = vadd.f32 0.0, %v3925
  %v3927 = vpop.f32.mrf.mxu0
  %v3928 = vadd.f32 0.0, %v3927
  %v3929 = vpop.f32.mrf.mxu0
  %v3930 = vadd.f32 0.0, %v3929
  %3931 = vmatprep.mubr.bf16.mxu0 %v3788
  %3932 = vmatmul.mubr.bf16.gmra.mxu0 %v3635
  %v3933 = vpop.f32.mrf.mxu0
  %v3934 = vadd.f32 0.0, %v3933
  %v3935 = vpop.f32.mrf.mxu0
  %v3936 = vadd.f32 0.0, %v3935
  %v3937 = vpop.f32.mrf.mxu0
  %v3938 = vadd.f32 0.0, %v3937
  %v3939 = vpop.f32.mrf.mxu0
  %v3940 = vadd.f32 0.0, %v3939
  %3941 = vmatprep.mubr.bf16.mxu0 %v3791
  %3942 = vmatmul.mubr.bf16.gmra.mxu0 %v3637
  %v3943 = vpop.f32.mrf.mxu0
  %v3944 = vadd.f32 0.0, %v3943
  %v3945 = vpop.f32.mrf.mxu0
  %v3946 = vadd.f32 0.0, %v3945
  %v3947 = vpop.f32.mrf.mxu0
  %v3948 = vadd.f32 0.0, %v3947
  %v3949 = vpop.f32.mrf.mxu0
  %v3950 = vadd.f32 0.0, %v3949
  %3951 = vmatprep.mubr.bf16.mxu0 %v3794
  %3952 = vmatmul.mubr.bf16.gmra.mxu0 %v3639
  %v3953 = vpop.f32.mrf.mxu0
  %v3954 = vadd.f32 0.0, %v3953
  %v3955 = vpop.f32.mrf.mxu0
  %v3956 = vadd.f32 0.0, %v3955
  %v3957 = vpop.f32.mrf.mxu0
  %v3958 = vadd.f32 0.0, %v3957
  %v3959 = vpop.f32.mrf.mxu0
  %v3960 = vadd.f32 0.0, %v3959
  %3961 = vmatprep.mubr.bf16.mxu0 %v3797
  %3962 = vmatmul.mubr.bf16.gmra.mxu0 %v3641
  %v3963 = vpop.f32.mrf.mxu0
  %v3964 = vadd.f32 0.0, %v3963
  %v3965 = vpop.f32.mrf.mxu0
  %v3966 = vadd.f32 0.0, %v3965
  %v3967 = vpop.f32.mrf.mxu0
  %v3968 = vadd.f32 0.0, %v3967
  %v3969 = vpop.f32.mrf.mxu0
  %v3970 = vadd.f32 0.0, %v3969
  %3971 = vdwg.mxu0
  %v3972 = vadd.f32 %v3062, %v3834
  %v3973 = vadd.f32 %v3063, %v3836
  %v3974 = vadd.f32 %v3064, %v3838
  %v3975 = vadd.f32 %v3065, %v3840
  %v3976 = vadd.f32 %v3066, %v3844
  %v3977 = vadd.f32 %v3067, %v3846
  %v3978 = vadd.f32 %v3068, %v3848
  %v3979 = vadd.f32 %v3069, %v3850
  %v3980 = vadd.f32 %v3070, %v3854
  %v3981 = vadd.f32 %v3071, %v3856
  %v3982 = vadd.f32 %v3072, %v3858
  %v3983 = vadd.f32 %v3073, %v3860
  %v3984 = vadd.f32 %v3074, %v3864
  %v3985 = vadd.f32 %v3075, %v3866
  %v3986 = vadd.f32 %v3076, %v3868
  %v3987 = vadd.f32 %v3077, %v3870
  %v3988 = vadd.f32 %v3078, %v3874
  %v3989 = vadd.f32 %v3079, %v3876
  %v3990 = vadd.f32 %v3080, %v3878
  %v3991 = vadd.f32 %v3081, %v3880
  %v3992 = vadd.f32 %v3082, %v3884
  %v3993 = vadd.f32 %v3083, %v3886
  %v3994 = vadd.f32 %v3084, %v3888
  %v3995 = vadd.f32 %v3085, %v3890
  %v3996 = vadd.f32 %v3086, %v3894
  %v3997 = vadd.f32 %v3087, %v3896
  %v3998 = vadd.f32 %v3088, %v3898
  %v3999 = vadd.f32 %v3089, %v3900
  %v4000 = vadd.f32 %v3090, %v3904
  %v4001 = vadd.f32 %v3091, %v3906
  %v4002 = vadd.f32 %v3092, %v3908
  %v4003 = vadd.f32 %v3093, %v3910
  %v4004 = vadd.f32 %v3094, %v3914
  %v4005 = vadd.f32 %v3095, %v3916
  %v4006 = vadd.f32 %v3096, %v3918
  %v4007 = vadd.f32 %v3097, %v3920
  %v4008 = vadd.f32 %v3098, %v3924
  %v4009 = vadd.f32 %v3099, %v3926
  %v4010 = vadd.f32 %v3100, %v3928
  %v4011 = vadd.f32 %v3101, %v3930
  %v4012 = vadd.f32 %v3102, %v3934
  %v4013 = vadd.f32 %v3103, %v3936
  %v4014 = vadd.f32 %v3104, %v3938
  %v4015 = vadd.f32 %v3105, %v3940
  %v4016 = vadd.f32 %v3106, %v3944
  %v4017 = vadd.f32 %v3107, %v3946
  %v4018 = vadd.f32 %v3108, %v3948
  %v4019 = vadd.f32 %v3109, %v3950
  %v4020 = vadd.f32 %v3110, %v3954
  %v4021 = vadd.f32 %v3111, %v3956
  %v4022 = vadd.f32 %v3112, %v3958
  %v4023 = vadd.f32 %v3113, %v3960
  %v4024 = vadd.f32 %v3114, %v3964
  %v4025 = vadd.f32 %v3115, %v3966
  %v4026 = vadd.f32 %v3116, %v3968
  %v4027 = vadd.f32 %v3117, %v3970
  %s4028 = scalar_lea.vmem %s0, 24
  %v4029 = vld [vmem:[%s4028] sm:$0xff]
  %v4030 = vld [vmem:[%s4028 + $0x8] sm:$0xff]
  %v4031 = vld [vmem:[%s4028 + $0x18] sm:$0xff]
  %v4032 = vld [vmem:[%s4028 + $0x20] sm:$0xff]
  %v4033 = vld [vmem:[%s4028 + $0x30] sm:$0xff]
  %v4034 = vld [vmem:[%s4028 + $0x38] sm:$0xff]
  %v4035 = vld [vmem:[%s4028 + $0x48] sm:$0xff]
  %v4036 = vld [vmem:[%s4028 + $0x50] sm:$0xff]
  %v4037 = vld [vmem:[%s4028 + $0x60] sm:$0xff]
  %v4038 = vld [vmem:[%s4028 + $0x68] sm:$0xff]
  %v4039 = vld [vmem:[%s4028 + $0x78] sm:$0xff]
  %v4040 = vld [vmem:[%s4028 + $0x80] sm:$0xff]
  %v4041 = vld [vmem:[%s4028 + $0x90] sm:$0xff]
  %v4042 = vld [vmem:[%s4028 + $0x98] sm:$0xff]
  %v4043 = vld [vmem:[%s4028 + $0xa8] sm:$0xff]
  %v4044 = vld [vmem:[%s4028 + $0xb0] sm:$0xff]
  %v4045 = vld [vmem:[%s4028 + $0xc0] sm:$0xff]
  %v4046 = vld [vmem:[%s4028 + $0xc8] sm:$0xff]
  %v4047 = vld [vmem:[%s4028 + $0xd8] sm:$0xff]
  %v4048 = vld [vmem:[%s4028 + $0xe0] sm:$0xff]
  %v4049 = vld [vmem:[%s4028 + $0xf0] sm:$0xff]
  %v4050 = vld [vmem:[%s4028 + $0xf8] sm:$0xff]
  %v4051 = vld [vmem:[%s4028 + $0x108] sm:$0xff]
  %v4052 = vld [vmem:[%s4028 + $0x110] sm:$0xff]
  %v4053 = vld [vmem:[%s4028 + $0x120] sm:$0xff]
  %v4054 = vld [vmem:[%s4028 + $0x128] sm:$0xff]
  %v4055 = vld [vmem:[%s4028 + $0x138] sm:$0xff]
  %v4056 = vld [vmem:[%s4028 + $0x140] sm:$0xff]
  %v4057 = vmax.bf16 %v4029, 0
  %v4058 = vmax.bf16 %v4030, 0
  %v4059 = vmax.bf16 %v4031, 0
  %v4060 = vmax.bf16 %v4032, 0
  %v4061 = vmax.bf16 %v4033, 0
  %v4062 = vmax.bf16 %v4034, 0
  %v4063 = vmax.bf16 %v4035, 0
  %v4064 = vmax.bf16 %v4036, 0
  %v4065 = vmax.bf16 %v4037, 0
  %v4066 = vmax.bf16 %v4038, 0
  %v4067 = vmax.bf16 %v4039, 0
  %v4068 = vmax.bf16 %v4040, 0
  %v4069 = vmax.bf16 %v4041, 0
  %v4070 = vmax.bf16 %v4042, 0
  %v4071 = vmax.bf16 %v4043, 0
  %v4072 = vmax.bf16 %v4044, 0
  %v4073 = vmax.bf16 %v4045, 0
  %v4074 = vmax.bf16 %v4046, 0
  %v4075 = vmax.bf16 %v4047, 0
  %v4076 = vmax.bf16 %v4048, 0
  %v4077 = vmax.bf16 %v4049, 0
  %v4078 = vmax.bf16 %v4050, 0
  %v4079 = vmax.bf16 %v4051, 0
  %v4080 = vmax.bf16 %v4052, 0
  %v4081 = vmax.bf16 %v4053, 0
  %v4082 = vmax.bf16 %v4054, 0
  %v4083 = vmax.bf16 %v4055, 0
  %v4084 = vmax.bf16 %v4056, 0
  %s4085 = scalar_lea.vmem %s1, 960
  %v4086 = vld [vmem:[%s4085] sm:$0xff]
  %v4087 = vld [vmem:[%s4085 + $0x8] sm:$0xff]
  %v4088 = vld [vmem:[%s4085 + $0x10] sm:$0xff]
  %v4089 = vld [vmem:[%s4085 + $0x18] sm:$0xff]
  %v4090 = vld [vmem:[%s4085 + $0x20] sm:$0xff]
  %v4091 = vld [vmem:[%s4085 + $0x28] sm:$0xff]
  %v4092 = vld [vmem:[%s4085 + $0x30] sm:$0xff]
  %v4093 = vld [vmem:[%s4085 + $0x38] sm:$0xff]
  %v4094 = vld [vmem:[%s4085 + $0x40] sm:$0xff]
  %v4095 = vld [vmem:[%s4085 + $0x48] sm:$0xff]
  %v4096 = vld [vmem:[%s4085 + $0x50] sm:$0xff]
  %v4097 = vld [vmem:[%s4085 + $0x58] sm:$0xff]
  %v4098 = vld [vmem:[%s4085 + $0x60] sm:$0xff]
  %v4099 = vld [vmem:[%s4085 + $0x68] sm:$0xff]
  %v4100 = vld [vmem:[%s4085 + $0x70] sm:$0xff]
  %v4101 = vld [vmem:[%s4085 + $0x78] sm:$0xff]
  %v4102 = vld [vmem:[%s4085 + $0x80] sm:$0xff]
  %v4103 = vld [vmem:[%s4085 + $0x88] sm:$0xff]
  %v4104 = vld [vmem:[%s4085 + $0x90] sm:$0xff]
  %v4105 = vld [vmem:[%s4085 + $0x98] sm:$0xff]
  %v4134 = vunpack.c.l.b16 %v4057
  %v4135 = vunpack.c.h.b16 %v4057
  %v4136 = vunpack.c.l.b16 %v4058
  %v4137 = vunpack.c.h.b16 %v4058
  %v4138 = vunpack.c.l.b16 %v4059
  %v4139 = vunpack.c.h.b16 %v4059
  %v4140 = vunpack.c.l.b16 %v4060
  %v4141 = vunpack.c.h.b16 %v4060
  %v4142 = vunpack.c.l.b16 %v4061
  %v4143 = vunpack.c.h.b16 %v4061
  %v4144 = vunpack.c.l.b16 %v4062
  %v4145 = vunpack.c.h.b16 %v4062
  %v4146 = vunpack.c.l.b16 %v4063
  %v4147 = vunpack.c.h.b16 %v4063
  %v4148 = vunpack.c.l.b16 %v4064
  %v4149 = vunpack.c.h.b16 %v4064
  %v4150 = vunpack.c.l.b16 %v4065
  %v4151 = vunpack.c.h.b16 %v4065
  %v4152 = vunpack.c.l.b16 %v4066
  %v4153 = vunpack.c.h.b16 %v4066
  %v4154 = vunpack.c.l.b16 %v4067
  %v4155 = vunpack.c.h.b16 %v4067
  %v4156 = vunpack.c.l.b16 %v4068
  %v4157 = vunpack.c.h.b16 %v4068
  %v4158 = vunpack.c.l.b16 %v4069
  %v4159 = vunpack.c.h.b16 %v4069
  %v4160 = vunpack.c.l.b16 %v4070
  %v4161 = vunpack.c.h.b16 %v4070
  %v4162 = vunpack.c.l.b16 %v4071
  %v4163 = vunpack.c.h.b16 %v4071
  %v4164 = vunpack.c.l.b16 %v4072
  %v4165 = vunpack.c.h.b16 %v4072
  %v4166 = vunpack.c.l.b16 %v4073
  %v4167 = vunpack.c.h.b16 %v4073
  %v4168 = vunpack.c.l.b16 %v4074
  %v4169 = vunpack.c.h.b16 %v4074
  %v4170 = vunpack.c.l.b16 %v4075
  %v4171 = vunpack.c.h.b16 %v4075
  %v4172 = vunpack.c.l.b16 %v4076
  %v4173 = vunpack.c.h.b16 %v4076
  %v4174 = vunpack.c.l.b16 %v4077
  %v4175 = vunpack.c.h.b16 %v4077
  %v4176 = vunpack.c.l.b16 %v4078
  %v4177 = vunpack.c.h.b16 %v4078
  %v4178 = vunpack.c.l.b16 %v4079
  %v4179 = vunpack.c.h.b16 %v4079
  %v4180 = vunpack.c.l.b16 %v4080
  %v4181 = vunpack.c.h.b16 %v4080
  %v4182 = vunpack.c.l.b16 %v4081
  %v4183 = vunpack.c.h.b16 %v4081
  %v4184 = vunpack.c.l.b16 %v4082
  %v4185 = vunpack.c.h.b16 %v4082
  %v4186 = vunpack.c.l.b16 %v4083
  %v4187 = vunpack.c.h.b16 %v4083
  %v4188 = vunpack.c.l.b16 %v4084
  %v4189 = vunpack.c.h.b16 %v4084
  %v4190 = vpack.c.b16 %v4136, %v4134
  %v4191 = vpack.c.b16 %v4137, %v4135
  %v4192 = vpack.c.b16 %v4140, %v4138
  %v4193 = vpack.c.b16 %v4141, %v4139
  %v4194 = vpack.c.b16 %v4144, %v4142
  %v4195 = vpack.c.b16 %v4145, %v4143
  %v4196 = vpack.c.b16 %v4148, %v4146
  %v4197 = vpack.c.b16 %v4149, %v4147
  %v4198 = vpack.c.b16 %v4152, %v4150
  %v4199 = vpack.c.b16 %v4153, %v4151
  %v4200 = vpack.c.b16 %v4156, %v4154
  %v4201 = vpack.c.b16 %v4157, %v4155
  %v4202 = vpack.c.b16 %v4160, %v4158
  %v4203 = vpack.c.b16 %v4161, %v4159
  %v4204 = vpack.c.b16 %v4164, %v4162
  %v4205 = vpack.c.b16 %v4165, %v4163
  %v4206 = vpack.c.b16 %v4168, %v4166
  %v4207 = vpack.c.b16 %v4169, %v4167
  %v4208 = vpack.c.b16 %v4172, %v4170
  %v4209 = vpack.c.b16 %v4173, %v4171
  %v4210 = vpack.c.b16 %v4176, %v4174
  %v4211 = vpack.c.b16 %v4177, %v4175
  %v4212 = vpack.c.b16 %v4180, %v4178
  %v4213 = vpack.c.b16 %v4181, %v4179
  %v4214 = vpack.c.b16 %v4184, %v4182
  %v4215 = vpack.c.b16 %v4185, %v4183
  %v4216 = vpack.c.b16 %v4188, %v4186
  %v4217 = vpack.c.b16 %v4189, %v4187
  %v4252 = vunpack.c.l.b16 %v4086
  %v4253 = vunpack.c.h.b16 %v4086
  %v4254 = vunpack.c.l.b16 %v4087
  %v4255 = vunpack.c.h.b16 %v4087
  %v4256 = vunpack.c.l.b16 %v4088
  %v4257 = vunpack.c.h.b16 %v4088
  %v4258 = vunpack.c.l.b16 %v4089
  %v4259 = vunpack.c.h.b16 %v4089
  %v4260 = vunpack.c.l.b16 %v4090
  %v4261 = vunpack.c.h.b16 %v4090
  %v4262 = vunpack.c.l.b16 %v4091
  %v4263 = vunpack.c.h.b16 %v4091
  %v4264 = vunpack.c.l.b16 %v4092
  %v4265 = vunpack.c.h.b16 %v4092
  %v4266 = vunpack.c.l.b16 %v4093
  %v4267 = vunpack.c.h.b16 %v4093
  %v4268 = vunpack.c.l.b16 %v4094
  %v4269 = vunpack.c.h.b16 %v4094
  %v4270 = vunpack.c.l.b16 %v4095
  %v4271 = vunpack.c.h.b16 %v4095
  %v4272 = vunpack.c.l.b16 %v4096
  %v4273 = vunpack.c.h.b16 %v4096
  %v4274 = vunpack.c.l.b16 %v4097
  %v4275 = vunpack.c.h.b16 %v4097
  %v4276 = vunpack.c.l.b16 %v4098
  %v4277 = vunpack.c.h.b16 %v4098
  %v4278 = vunpack.c.l.b16 %v4099
  %v4279 = vunpack.c.h.b16 %v4099
  %v4280 = vunpack.c.l.b16 %v4100
  %v4281 = vunpack.c.h.b16 %v4100
  %v4282 = vunpack.c.l.b16 %v4101
  %v4283 = vunpack.c.h.b16 %v4101
  %v4284 = vunpack.c.l.b16 %v4102
  %v4285 = vunpack.c.h.b16 %v4102
  %v4286 = vunpack.c.l.b16 %v4103
  %v4287 = vunpack.c.h.b16 %v4103
  %v4288 = vunpack.c.l.b16 %v4104
  %v4289 = vunpack.c.h.b16 %v4104
  %v4290 = vunpack.c.l.b16 %v4105
  %v4291 = vunpack.c.h.b16 %v4105
  %v4292 = vpack.c.b16 %v4254, %v4252
  %v4293 = vpack.c.b16 %v4255, %v4253
  %v4294 = vpack.c.b16 %v4258, %v4256
  %v4295 = vpack.c.b16 %v4259, %v4257
  %v4296 = vpack.c.b16 %v4262, %v4260
  %v4297 = vpack.c.b16 %v4263, %v4261
  %v4298 = vpack.c.b16 %v4266, %v4264
  %v4299 = vpack.c.b16 %v4267, %v4265
  %v4300 = vpack.c.b16 %v4270, %v4268
  %v4301 = vpack.c.b16 %v4271, %v4269
  %v4302 = vpack.c.b16 %v4274, %v4272
  %v4303 = vpack.c.b16 %v4275, %v4273
  %v4304 = vpack.c.b16 %v4278, %v4276
  %v4305 = vpack.c.b16 %v4279, %v4277
  %v4306 = vpack.c.b16 %v4282, %v4280
  %v4307 = vpack.c.b16 %v4283, %v4281
  %v4308 = vpack.c.b16 %v4286, %v4284
  %v4309 = vpack.c.b16 %v4287, %v4285
  %v4310 = vpack.c.b16 %v4290, %v4288
  %v4311 = vpack.c.b16 %v4291, %v4289
  %v4333 = vsel %vm398, %v4191, 0
  %v4336 = vsel %vm398, %v4193, 0
  %v4339 = vsel %vm398, %v4195, 0
  %v4342 = vsel %vm398, %v4197, 0
  %v4345 = vsel %vm398, %v4199, 0
  %v4348 = vsel %vm398, %v4201, 0
  %v4351 = vsel %vm398, %v4203, 0
  %v4354 = vsel %vm398, %v4205, 0
  %v4357 = vsel %vm398, %v4207, 0
  %v4360 = vsel %vm398, %v4209, 0
  %v4363 = vsel %vm398, %v4211, 0
  %v4366 = vsel %vm398, %v4213, 0
  %v4369 = vsel %vm398, %v4215, 0
  %v4372 = vsel %vm398, %v4217, 0
  %4374 = vmatprep.subr.bf16.mxu0 %v4307
  %4375 = vmatpush1.bf16.msra.mxu0 %v4306
  %4376 = vmatprep.subr.bf16.mxu0 %v4305
  %4377 = vmatpush1.bf16.msra.mxu0 %v4304
  %4378 = vmatprep.subr.bf16.mxu0 %v4303
  %4379 = vmatpush1.bf16.msra.mxu0 %v4302
  %4380 = vmatprep.subr.bf16.mxu0 %v4301
  %4381 = vmatpush1.bf16.msra.mxu0 %v4300
  %4382 = vmatprep.subr.bf16.mxu0 %v4299
  %4383 = vmatpush1.bf16.msra.mxu0 %v4298
  %4384 = vmatprep.subr.bf16.mxu0 %v4297
  %4385 = vmatpush1.bf16.msra.mxu0 %v4296
  %4386 = vmatprep.subr.bf16.mxu0 %v4295
  %4387 = vmatpush1.bf16.msra.mxu0 %v4294
  %4388 = vmatprep.subr.bf16.mxu0 %v4293
  %4389 = vmatpush1.bf16.msra.mxu0 %v4292
  %4390 = vmatprep.subr.bf16.mxu0 0
  %4391 = vmatpush2.bf16.msra.mxu0 0
  %4392 = vmatprep.subr.bf16.mxu0 0
  %4393 = vmatpush2.bf16.msra.mxu0 0
  %4394 = vmatprep.subr.bf16.mxu0 0
  %4395 = vmatpush2.bf16.msra.mxu0 0
  %4396 = vmatprep.subr.bf16.mxu0 0
  %4397 = vmatpush2.bf16.msra.mxu0 0
  %4398 = vmatprep.subr.bf16.mxu0 0
  %4399 = vmatpush2.bf16.msra.mxu0 0
  %4400 = vmatprep.subr.bf16.mxu0 0
  %4401 = vmatpush2.bf16.msra.mxu0 0
  %4402 = vmatprep.subr.bf16.mxu0 %v4311
  %4403 = vmatpush2.bf16.msra.mxu0 %v4310
  %4404 = vmatprep.subr.bf16.mxu0 %v4309
  %4405 = vmatpush2.bf16.msra.mxu0 %v4308
  %4406 = vmatprep.mubr.bf16.mxu0 %v4333
  %4407 = vmatmul.mubr.bf16.gmra.mxu0 %v4190
  %v4408 = vpop.f32.mrf.mxu0
  %v4409 = vadd.f32 0.0, %v4408
  %v4410 = vpop.f32.mrf.mxu0
  %v4411 = vadd.f32 0.0, %v4410
  %v4412 = vpop.f32.mrf.mxu0
  %v4413 = vadd.f32 0.0, %v4412
  %v4414 = vpop.f32.mrf.mxu0
  %v4415 = vadd.f32 0.0, %v4414
  %4416 = vmatprep.mubr.bf16.mxu0 %v4336
  %4417 = vmatmul.mubr.bf16.gmra.mxu0 %v4192
  %v4418 = vpop.f32.mrf.mxu0
  %v4419 = vadd.f32 0.0, %v4418
  %v4420 = vpop.f32.mrf.mxu0
  %v4421 = vadd.f32 0.0, %v4420
  %v4422 = vpop.f32.mrf.mxu0
  %v4423 = vadd.f32 0.0, %v4422
  %v4424 = vpop.f32.mrf.mxu0
  %v4425 = vadd.f32 0.0, %v4424
  %4426 = vmatprep.mubr.bf16.mxu0 %v4339
  %4427 = vmatmul.mubr.bf16.gmra.mxu0 %v4194
  %v4428 = vpop.f32.mrf.mxu0
  %v4429 = vadd.f32 0.0, %v4428
  %v4430 = vpop.f32.mrf.mxu0
  %v4431 = vadd.f32 0.0, %v4430
  %v4432 = vpop.f32.mrf.mxu0
  %v4433 = vadd.f32 0.0, %v4432
  %v4434 = vpop.f32.mrf.mxu0
  %v4435 = vadd.f32 0.0, %v4434
  %4436 = vmatprep.mubr.bf16.mxu0 %v4342
  %4437 = vmatmul.mubr.bf16.gmra.mxu0 %v4196
  %v4438 = vpop.f32.mrf.mxu0
  %v4439 = vadd.f32 0.0, %v4438
  %v4440 = vpop.f32.mrf.mxu0
  %v4441 = vadd.f32 0.0, %v4440
  %v4442 = vpop.f32.mrf.mxu0
  %v4443 = vadd.f32 0.0, %v4442
  %v4444 = vpop.f32.mrf.mxu0
  %v4445 = vadd.f32 0.0, %v4444
  %4446 = vmatprep.mubr.bf16.mxu0 %v4345
  %4447 = vmatmul.mubr.bf16.gmra.mxu0 %v4198
  %v4448 = vpop.f32.mrf.mxu0
  %v4449 = vadd.f32 0.0, %v4448
  %v4450 = vpop.f32.mrf.mxu0
  %v4451 = vadd.f32 0.0, %v4450
  %v4452 = vpop.f32.mrf.mxu0
  %v4453 = vadd.f32 0.0, %v4452
  %v4454 = vpop.f32.mrf.mxu0
  %v4455 = vadd.f32 0.0, %v4454
  %4456 = vmatprep.mubr.bf16.mxu0 %v4348
  %4457 = vmatmul.mubr.bf16.gmra.mxu0 %v4200
  %v4458 = vpop.f32.mrf.mxu0
  %v4459 = vadd.f32 0.0, %v4458
  %v4460 = vpop.f32.mrf.mxu0
  %v4461 = vadd.f32 0.0, %v4460
  %v4462 = vpop.f32.mrf.mxu0
  %v4463 = vadd.f32 0.0, %v4462
  %v4464 = vpop.f32.mrf.mxu0
  %v4465 = vadd.f32 0.0, %v4464
  %4466 = vmatprep.mubr.bf16.mxu0 %v4351
  %4467 = vmatmul.mubr.bf16.gmra.mxu0 %v4202
  %v4468 = vpop.f32.mrf.mxu0
  %v4469 = vadd.f32 0.0, %v4468
  %v4470 = vpop.f32.mrf.mxu0
  %v4471 = vadd.f32 0.0, %v4470
  %v4472 = vpop.f32.mrf.mxu0
  %v4473 = vadd.f32 0.0, %v4472
  %v4474 = vpop.f32.mrf.mxu0
  %v4475 = vadd.f32 0.0, %v4474
  %4476 = vmatprep.mubr.bf16.mxu0 %v4354
  %4477 = vmatmul.mubr.bf16.gmra.mxu0 %v4204
  %v4478 = vpop.f32.mrf.mxu0
  %v4479 = vadd.f32 0.0, %v4478
  %v4480 = vpop.f32.mrf.mxu0
  %v4481 = vadd.f32 0.0, %v4480
  %v4482 = vpop.f32.mrf.mxu0
  %v4483 = vadd.f32 0.0, %v4482
  %v4484 = vpop.f32.mrf.mxu0
  %v4485 = vadd.f32 0.0, %v4484
  %4486 = vmatprep.mubr.bf16.mxu0 %v4357
  %4487 = vmatmul.mubr.bf16.gmra.mxu0 %v4206
  %v4488 = vpop.f32.mrf.mxu0
  %v4489 = vadd.f32 0.0, %v4488
  %v4490 = vpop.f32.mrf.mxu0
  %v4491 = vadd.f32 0.0, %v4490
  %v4492 = vpop.f32.mrf.mxu0
  %v4493 = vadd.f32 0.0, %v4492
  %v4494 = vpop.f32.mrf.mxu0
  %v4495 = vadd.f32 0.0, %v4494
  %4496 = vmatprep.mubr.bf16.mxu0 %v4360
  %4497 = vmatmul.mubr.bf16.gmra.mxu0 %v4208
  %v4498 = vpop.f32.mrf.mxu0
  %v4499 = vadd.f32 0.0, %v4498
  %v4500 = vpop.f32.mrf.mxu0
  %v4501 = vadd.f32 0.0, %v4500
  %v4502 = vpop.f32.mrf.mxu0
  %v4503 = vadd.f32 0.0, %v4502
  %v4504 = vpop.f32.mrf.mxu0
  %v4505 = vadd.f32 0.0, %v4504
  %4506 = vmatprep.mubr.bf16.mxu0 %v4363
  %4507 = vmatmul.mubr.bf16.gmra.mxu0 %v4210
  %v4508 = vpop.f32.mrf.mxu0
  %v4509 = vadd.f32 0.0, %v4508
  %v4510 = vpop.f32.mrf.mxu0
  %v4511 = vadd.f32 0.0, %v4510
  %v4512 = vpop.f32.mrf.mxu0
  %v4513 = vadd.f32 0.0, %v4512
  %v4514 = vpop.f32.mrf.mxu0
  %v4515 = vadd.f32 0.0, %v4514
  %4516 = vmatprep.mubr.bf16.mxu0 %v4366
  %4517 = vmatmul.mubr.bf16.gmra.mxu0 %v4212
  %v4518 = vpop.f32.mrf.mxu0
  %v4519 = vadd.f32 0.0, %v4518
  %v4520 = vpop.f32.mrf.mxu0
  %v4521 = vadd.f32 0.0, %v4520
  %v4522 = vpop.f32.mrf.mxu0
  %v4523 = vadd.f32 0.0, %v4522
  %v4524 = vpop.f32.mrf.mxu0
  %v4525 = vadd.f32 0.0, %v4524
  %4526 = vmatprep.mubr.bf16.mxu0 %v4369
  %4527 = vmatmul.mubr.bf16.gmra.mxu0 %v4214
  %v4528 = vpop.f32.mrf.mxu0
  %v4529 = vadd.f32 0.0, %v4528
  %v4530 = vpop.f32.mrf.mxu0
  %v4531 = vadd.f32 0.0, %v4530
  %v4532 = vpop.f32.mrf.mxu0
  %v4533 = vadd.f32 0.0, %v4532
  %v4534 = vpop.f32.mrf.mxu0
  %v4535 = vadd.f32 0.0, %v4534
  %4536 = vmatprep.mubr.bf16.mxu0 %v4372
  %4537 = vmatmul.mubr.bf16.gmra.mxu0 %v4216
  %v4538 = vpop.f32.mrf.mxu0
  %v4539 = vadd.f32 0.0, %v4538
  %v4540 = vpop.f32.mrf.mxu0
  %v4541 = vadd.f32 0.0, %v4540
  %v4542 = vpop.f32.mrf.mxu0
  %v4543 = vadd.f32 0.0, %v4542
  %v4544 = vpop.f32.mrf.mxu0
  %v4545 = vadd.f32 0.0, %v4544
  %4546 = vdwg.mxu0
  %v4547 = vadd.f32 %v3972, %v4409
  %v4548 = vadd.f32 %v3973, %v4411
  %v4549 = vadd.f32 %v3974, %v4413
  %v4550 = vadd.f32 %v3975, %v4415
  %v4551 = vadd.f32 %v3976, %v4419
  %v4552 = vadd.f32 %v3977, %v4421
  %v4553 = vadd.f32 %v3978, %v4423
  %v4554 = vadd.f32 %v3979, %v4425
  %v4555 = vadd.f32 %v3980, %v4429
  %v4556 = vadd.f32 %v3981, %v4431
  %v4557 = vadd.f32 %v3982, %v4433
  %v4558 = vadd.f32 %v3983, %v4435
  %v4559 = vadd.f32 %v3984, %v4439
  %v4560 = vadd.f32 %v3985, %v4441
  %v4561 = vadd.f32 %v3986, %v4443
  %v4562 = vadd.f32 %v3987, %v4445
  %v4563 = vadd.f32 %v3988, %v4449
  %v4564 = vadd.f32 %v3989, %v4451
  %v4565 = vadd.f32 %v3990, %v4453
  %v4566 = vadd.f32 %v3991, %v4455
  %v4567 = vadd.f32 %v3992, %v4459
  %v4568 = vadd.f32 %v3993, %v4461
  %v4569 = vadd.f32 %v3994, %v4463
  %v4570 = vadd.f32 %v3995, %v4465
  %v4571 = vadd.f32 %v3996, %v4469
  %v4572 = vadd.f32 %v3997, %v4471
  %v4573 = vadd.f32 %v3998, %v4473
  %v4574 = vadd.f32 %v3999, %v4475
  %v4575 = vadd.f32 %v4000, %v4479
  %v4576 = vadd.f32 %v4001, %v4481
  %v4577 = vadd.f32 %v4002, %v4483
  %v4578 = vadd.f32 %v4003, %v4485
  %v4579 = vadd.f32 %v4004, %v4489
  %v4580 = vadd.f32 %v4005, %v4491
  %v4581 = vadd.f32 %v4006, %v4493
  %v4582 = vadd.f32 %v4007, %v4495
  %v4583 = vadd.f32 %v4008, %v4499
  %v4584 = vadd.f32 %v4009, %v4501
  %v4585 = vadd.f32 %v4010, %v4503
  %v4586 = vadd.f32 %v4011, %v4505
  %v4587 = vadd.f32 %v4012, %v4509
  %v4588 = vadd.f32 %v4013, %v4511
  %v4589 = vadd.f32 %v4014, %v4513
  %v4590 = vadd.f32 %v4015, %v4515
  %v4591 = vadd.f32 %v4016, %v4519
  %v4592 = vadd.f32 %v4017, %v4521
  %v4593 = vadd.f32 %v4018, %v4523
  %v4594 = vadd.f32 %v4019, %v4525
  %v4595 = vadd.f32 %v4020, %v4529
  %v4596 = vadd.f32 %v4021, %v4531
  %v4597 = vadd.f32 %v4022, %v4533
  %v4598 = vadd.f32 %v4023, %v4535
  %v4599 = vadd.f32 %v4024, %v4539
  %v4600 = vadd.f32 %v4025, %v4541
  %v4601 = vadd.f32 %v4026, %v4543
  %v4602 = vadd.f32 %v4027, %v4545
  %s4603 = scalar_lea.vmem %s0, 384
  %v4604 = vld [vmem:[%s4603] sm:$0xff]
  %v4605 = vld [vmem:[%s4603 + $0x8] sm:$0xff]
  %v4606 = vld [vmem:[%s4603 + $0x18] sm:$0xff]
  %v4607 = vld [vmem:[%s4603 + $0x20] sm:$0xff]
  %v4608 = vld [vmem:[%s4603 + $0x30] sm:$0xff]
  %v4609 = vld [vmem:[%s4603 + $0x38] sm:$0xff]
  %v4610 = vld [vmem:[%s4603 + $0x48] sm:$0xff]
  %v4611 = vld [vmem:[%s4603 + $0x50] sm:$0xff]
  %v4612 = vld [vmem:[%s4603 + $0x60] sm:$0xff]
  %v4613 = vld [vmem:[%s4603 + $0x68] sm:$0xff]
  %v4614 = vld [vmem:[%s4603 + $0x78] sm:$0xff]
  %v4615 = vld [vmem:[%s4603 + $0x80] sm:$0xff]
  %v4616 = vld [vmem:[%s4603 + $0x90] sm:$0xff]
  %v4617 = vld [vmem:[%s4603 + $0x98] sm:$0xff]
  %v4618 = vld [vmem:[%s4603 + $0xa8] sm:$0xff]
  %v4619 = vld [vmem:[%s4603 + $0xb0] sm:$0xff]
  %v4620 = vld [vmem:[%s4603 + $0xc0] sm:$0xff]
  %v4621 = vld [vmem:[%s4603 + $0xc8] sm:$0xff]
  %v4622 = vld [vmem:[%s4603 + $0xd8] sm:$0xff]
  %v4623 = vld [vmem:[%s4603 + $0xe0] sm:$0xff]
  %v4624 = vld [vmem:[%s4603 + $0xf0] sm:$0xff]
  %v4625 = vld [vmem:[%s4603 + $0xf8] sm:$0xff]
  %v4626 = vld [vmem:[%s4603 + $0x108] sm:$0xff]
  %v4627 = vld [vmem:[%s4603 + $0x110] sm:$0xff]
  %v4628 = vld [vmem:[%s4603 + $0x120] sm:$0xff]
  %v4629 = vld [vmem:[%s4603 + $0x128] sm:$0xff]
  %v4630 = vld [vmem:[%s4603 + $0x138] sm:$0xff]
  %v4631 = vld [vmem:[%s4603 + $0x140] sm:$0xff]
  %v4632 = vmax.bf16 %v4604, 0
  %v4633 = vmax.bf16 %v4605, 0
  %v4634 = vmax.bf16 %v4606, 0
  %v4635 = vmax.bf16 %v4607, 0
  %v4636 = vmax.bf16 %v4608, 0
  %v4637 = vmax.bf16 %v4609, 0
  %v4638 = vmax.bf16 %v4610, 0
  %v4639 = vmax.bf16 %v4611, 0
  %v4640 = vmax.bf16 %v4612, 0
  %v4641 = vmax.bf16 %v4613, 0
  %v4642 = vmax.bf16 %v4614, 0
  %v4643 = vmax.bf16 %v4615, 0
  %v4644 = vmax.bf16 %v4616, 0
  %v4645 = vmax.bf16 %v4617, 0
  %v4646 = vmax.bf16 %v4618, 0
  %v4647 = vmax.bf16 %v4619, 0
  %v4648 = vmax.bf16 %v4620, 0
  %v4649 = vmax.bf16 %v4621, 0
  %v4650 = vmax.bf16 %v4622, 0
  %v4651 = vmax.bf16 %v4623, 0
  %v4652 = vmax.bf16 %v4624, 0
  %v4653 = vmax.bf16 %v4625, 0
  %v4654 = vmax.bf16 %v4626, 0
  %v4655 = vmax.bf16 %v4627, 0
  %v4656 = vmax.bf16 %v4628, 0
  %v4657 = vmax.bf16 %v4629, 0
  %v4658 = vmax.bf16 %v4630, 0
  %v4659 = vmax.bf16 %v4631, 0
  %s4660 = scalar_lea.vmem %s1, 1120
  %v4661 = vld [vmem:[%s4660] sm:$0xff]
  %v4662 = vld [vmem:[%s4660 + $0x8] sm:$0xff]
  %v4663 = vld [vmem:[%s4660 + $0x10] sm:$0xff]
  %v4664 = vld [vmem:[%s4660 + $0x18] sm:$0xff]
  %v4665 = vld [vmem:[%s4660 + $0x20] sm:$0xff]
  %v4666 = vld [vmem:[%s4660 + $0x28] sm:$0xff]
  %v4667 = vld [vmem:[%s4660 + $0x30] sm:$0xff]
  %v4668 = vld [vmem:[%s4660 + $0x38] sm:$0xff]
  %v4669 = vld [vmem:[%s4660 + $0x40] sm:$0xff]
  %v4670 = vld [vmem:[%s4660 + $0x48] sm:$0xff]
  %v4671 = vld [vmem:[%s4660 + $0x50] sm:$0xff]
  %v4672 = vld [vmem:[%s4660 + $0x58] sm:$0xff]
  %v4673 = vld [vmem:[%s4660 + $0x60] sm:$0xff]
  %v4674 = vld [vmem:[%s4660 + $0x68] sm:$0xff]
  %v4675 = vld [vmem:[%s4660 + $0x70] sm:$0xff]
  %v4676 = vld [vmem:[%s4660 + $0x78] sm:$0xff]
  %v4677 = vld [vmem:[%s4660 + $0x80] sm:$0xff]
  %v4678 = vld [vmem:[%s4660 + $0x88] sm:$0xff]
  %v4679 = vld [vmem:[%s4660 + $0x90] sm:$0xff]
  %v4680 = vld [vmem:[%s4660 + $0x98] sm:$0xff]
  %v4709 = vunpack.c.l.b16 %v4632
  %v4710 = vunpack.c.h.b16 %v4632
  %v4711 = vunpack.c.l.b16 %v4633
  %v4712 = vunpack.c.h.b16 %v4633
  %v4713 = vunpack.c.l.b16 %v4634
  %v4714 = vunpack.c.h.b16 %v4634
  %v4715 = vunpack.c.l.b16 %v4635
  %v4716 = vunpack.c.h.b16 %v4635
  %v4717 = vunpack.c.l.b16 %v4636
  %v4718 = vunpack.c.h.b16 %v4636
  %v4719 = vunpack.c.l.b16 %v4637
  %v4720 = vunpack.c.h.b16 %v4637
  %v4721 = vunpack.c.l.b16 %v4638
  %v4722 = vunpack.c.h.b16 %v4638
  %v4723 = vunpack.c.l.b16 %v4639
  %v4724 = vunpack.c.h.b16 %v4639
  %v4725 = vunpack.c.l.b16 %v4640
  %v4726 = vunpack.c.h.b16 %v4640
  %v4727 = vunpack.c.l.b16 %v4641
  %v4728 = vunpack.c.h.b16 %v4641
  %v4729 = vunpack.c.l.b16 %v4642
  %v4730 = vunpack.c.h.b16 %v4642
  %v4731 = vunpack.c.l.b16 %v4643
  %v4732 = vunpack.c.h.b16 %v4643
  %v4733 = vunpack.c.l.b16 %v4644
  %v4734 = vunpack.c.h.b16 %v4644
  %v4735 = vunpack.c.l.b16 %v4645
  %v4736 = vunpack.c.h.b16 %v4645
  %v4737 = vunpack.c.l.b16 %v4646
  %v4738 = vunpack.c.h.b16 %v4646
  %v4739 = vunpack.c.l.b16 %v4647
  %v4740 = vunpack.c.h.b16 %v4647
  %v4741 = vunpack.c.l.b16 %v4648
  %v4742 = vunpack.c.h.b16 %v4648
  %v4743 = vunpack.c.l.b16 %v4649
  %v4744 = vunpack.c.h.b16 %v4649
  %v4745 = vunpack.c.l.b16 %v4650
  %v4746 = vunpack.c.h.b16 %v4650
  %v4747 = vunpack.c.l.b16 %v4651
  %v4748 = vunpack.c.h.b16 %v4651
  %v4749 = vunpack.c.l.b16 %v4652
  %v4750 = vunpack.c.h.b16 %v4652
  %v4751 = vunpack.c.l.b16 %v4653
  %v4752 = vunpack.c.h.b16 %v4653
  %v4753 = vunpack.c.l.b16 %v4654
  %v4754 = vunpack.c.h.b16 %v4654
  %v4755 = vunpack.c.l.b16 %v4655
  %v4756 = vunpack.c.h.b16 %v4655
  %v4757 = vunpack.c.l.b16 %v4656
  %v4758 = vunpack.c.h.b16 %v4656
  %v4759 = vunpack.c.l.b16 %v4657
  %v4760 = vunpack.c.h.b16 %v4657
  %v4761 = vunpack.c.l.b16 %v4658
  %v4762 = vunpack.c.h.b16 %v4658
  %v4763 = vunpack.c.l.b16 %v4659
  %v4764 = vunpack.c.h.b16 %v4659
  %v4765 = vpack.c.b16 %v4711, %v4709
  %v4766 = vpack.c.b16 %v4712, %v4710
  %v4767 = vpack.c.b16 %v4715, %v4713
  %v4768 = vpack.c.b16 %v4716, %v4714
  %v4769 = vpack.c.b16 %v4719, %v4717
  %v4770 = vpack.c.b16 %v4720, %v4718
  %v4771 = vpack.c.b16 %v4723, %v4721
  %v4772 = vpack.c.b16 %v4724, %v4722
  %v4773 = vpack.c.b16 %v4727, %v4725
  %v4774 = vpack.c.b16 %v4728, %v4726
  %v4775 = vpack.c.b16 %v4731, %v4729
  %v4776 = vpack.c.b16 %v4732, %v4730
  %v4777 = vpack.c.b16 %v4735, %v4733
  %v4778 = vpack.c.b16 %v4736, %v4734
  %v4779 = vpack.c.b16 %v4739, %v4737
  %v4780 = vpack.c.b16 %v4740, %v4738
  %v4781 = vpack.c.b16 %v4743, %v4741
  %v4782 = vpack.c.b16 %v4744, %v4742
  %v4783 = vpack.c.b16 %v4747, %v4745
  %v4784 = vpack.c.b16 %v4748, %v4746
  %v4785 = vpack.c.b16 %v4751, %v4749
  %v4786 = vpack.c.b16 %v4752, %v4750
  %v4787 = vpack.c.b16 %v4755, %v4753
  %v4788 = vpack.c.b16 %v4756, %v4754
  %v4789 = vpack.c.b16 %v4759, %v4757
  %v4790 = vpack.c.b16 %v4760, %v4758
  %v4791 = vpack.c.b16 %v4763, %v4761
  %v4792 = vpack.c.b16 %v4764, %v4762
  %v4827 = vunpack.c.l.b16 %v4661
  %v4828 = vunpack.c.h.b16 %v4661
  %v4829 = vunpack.c.l.b16 %v4662
  %v4830 = vunpack.c.h.b16 %v4662
  %v4831 = vunpack.c.l.b16 %v4663
  %v4832 = vunpack.c.h.b16 %v4663
  %v4833 = vunpack.c.l.b16 %v4664
  %v4834 = vunpack.c.h.b16 %v4664
  %v4835 = vunpack.c.l.b16 %v4665
  %v4836 = vunpack.c.h.b16 %v4665
  %v4837 = vunpack.c.l.b16 %v4666
  %v4838 = vunpack.c.h.b16 %v4666
  %v4839 = vunpack.c.l.b16 %v4667
  %v4840 = vunpack.c.h.b16 %v4667
  %v4841 = vunpack.c.l.b16 %v4668
  %v4842 = vunpack.c.h.b16 %v4668
  %v4843 = vunpack.c.l.b16 %v4669
  %v4844 = vunpack.c.h.b16 %v4669
  %v4845 = vunpack.c.l.b16 %v4670
  %v4846 = vunpack.c.h.b16 %v4670
  %v4847 = vunpack.c.l.b16 %v4671
  %v4848 = vunpack.c.h.b16 %v4671
  %v4849 = vunpack.c.l.b16 %v4672
  %v4850 = vunpack.c.h.b16 %v4672
  %v4851 = vunpack.c.l.b16 %v4673
  %v4852 = vunpack.c.h.b16 %v4673
  %v4853 = vunpack.c.l.b16 %v4674
  %v4854 = vunpack.c.h.b16 %v4674
  %v4855 = vunpack.c.l.b16 %v4675
  %v4856 = vunpack.c.h.b16 %v4675
  %v4857 = vunpack.c.l.b16 %v4676
  %v4858 = vunpack.c.h.b16 %v4676
  %v4859 = vunpack.c.l.b16 %v4677
  %v4860 = vunpack.c.h.b16 %v4677
  %v4861 = vunpack.c.l.b16 %v4678
  %v4862 = vunpack.c.h.b16 %v4678
  %v4863 = vunpack.c.l.b16 %v4679
  %v4864 = vunpack.c.h.b16 %v4679
  %v4865 = vunpack.c.l.b16 %v4680
  %v4866 = vunpack.c.h.b16 %v4680
  %v4867 = vpack.c.b16 %v4829, %v4827
  %v4868 = vpack.c.b16 %v4830, %v4828
  %v4869 = vpack.c.b16 %v4833, %v4831
  %v4870 = vpack.c.b16 %v4834, %v4832
  %v4871 = vpack.c.b16 %v4837, %v4835
  %v4872 = vpack.c.b16 %v4838, %v4836
  %v4873 = vpack.c.b16 %v4841, %v4839
  %v4874 = vpack.c.b16 %v4842, %v4840
  %v4875 = vpack.c.b16 %v4845, %v4843
  %v4876 = vpack.c.b16 %v4846, %v4844
  %v4877 = vpack.c.b16 %v4849, %v4847
  %v4878 = vpack.c.b16 %v4850, %v4848
  %v4879 = vpack.c.b16 %v4853, %v4851
  %v4880 = vpack.c.b16 %v4854, %v4852
  %v4881 = vpack.c.b16 %v4857, %v4855
  %v4882 = vpack.c.b16 %v4858, %v4856
  %v4883 = vpack.c.b16 %v4861, %v4859
  %v4884 = vpack.c.b16 %v4862, %v4860
  %v4885 = vpack.c.b16 %v4865, %v4863
  %v4886 = vpack.c.b16 %v4866, %v4864
  %v4908 = vsel %vm398, %v4766, 0
  %v4911 = vsel %vm398, %v4768, 0
  %v4914 = vsel %vm398, %v4770, 0
  %v4917 = vsel %vm398, %v4772, 0
  %v4920 = vsel %vm398, %v4774, 0
  %v4923 = vsel %vm398, %v4776, 0
  %v4926 = vsel %vm398, %v4778, 0
  %v4929 = vsel %vm398, %v4780, 0
  %v4932 = vsel %vm398, %v4782, 0
  %v4935 = vsel %vm398, %v4784, 0
  %v4938 = vsel %vm398, %v4786, 0
  %v4941 = vsel %vm398, %v4788, 0
  %v4944 = vsel %vm398, %v4790, 0
  %v4947 = vsel %vm398, %v4792, 0
  %4949 = vmatprep.subr.bf16.mxu0 %v4882
  %4950 = vmatpush1.bf16.msra.mxu0 %v4881
  %4951 = vmatprep.subr.bf16.mxu0 %v4880
  %4952 = vmatpush1.bf16.msra.mxu0 %v4879
  %4953 = vmatprep.subr.bf16.mxu0 %v4878
  %4954 = vmatpush1.bf16.msra.mxu0 %v4877
  %4955 = vmatprep.subr.bf16.mxu0 %v4876
  %4956 = vmatpush1.bf16.msra.mxu0 %v4875
  %4957 = vmatprep.subr.bf16.mxu0 %v4874
  %4958 = vmatpush1.bf16.msra.mxu0 %v4873
  %4959 = vmatprep.subr.bf16.mxu0 %v4872
  %4960 = vmatpush1.bf16.msra.mxu0 %v4871
  %4961 = vmatprep.subr.bf16.mxu0 %v4870
  %4962 = vmatpush1.bf16.msra.mxu0 %v4869
  %4963 = vmatprep.subr.bf16.mxu0 %v4868
  %4964 = vmatpush1.bf16.msra.mxu0 %v4867
  %4965 = vmatprep.subr.bf16.mxu0 0
  %4966 = vmatpush2.bf16.msra.mxu0 0
  %4967 = vmatprep.subr.bf16.mxu0 0
  %4968 = vmatpush2.bf16.msra.mxu0 0
  %4969 = vmatprep.subr.bf16.mxu0 0
  %4970 = vmatpush2.bf16.msra.mxu0 0
  %4971 = vmatprep.subr.bf16.mxu0 0
  %4972 = vmatpush2.bf16.msra.mxu0 0
  %4973 = vmatprep.subr.bf16.mxu0 0
  %4974 = vmatpush2.bf16.msra.mxu0 0
  %4975 = vmatprep.subr.bf16.mxu0 0
  %4976 = vmatpush2.bf16.msra.mxu0 0
  %4977 = vmatprep.subr.bf16.mxu0 %v4886
  %4978 = vmatpush2.bf16.msra.mxu0 %v4885
  %4979 = vmatprep.subr.bf16.mxu0 %v4884
  %4980 = vmatpush2.bf16.msra.mxu0 %v4883
  %4981 = vmatprep.mubr.bf16.mxu0 %v4908
  %4982 = vmatmul.mubr.bf16.gmra.mxu0 %v4765
  %v4983 = vpop.f32.mrf.mxu0
  %v4984 = vadd.f32 0.0, %v4983
  %v4985 = vpop.f32.mrf.mxu0
  %v4986 = vadd.f32 0.0, %v4985
  %v4987 = vpop.f32.mrf.mxu0
  %v4988 = vadd.f32 0.0, %v4987
  %v4989 = vpop.f32.mrf.mxu0
  %v4990 = vadd.f32 0.0, %v4989
  %4991 = vmatprep.mubr.bf16.mxu0 %v4911
  %4992 = vmatmul.mubr.bf16.gmra.mxu0 %v4767
  %v4993 = vpop.f32.mrf.mxu0
  %v4994 = vadd.f32 0.0, %v4993
  %v4995 = vpop.f32.mrf.mxu0
  %v4996 = vadd.f32 0.0, %v4995
  %v4997 = vpop.f32.mrf.mxu0
  %v4998 = vadd.f32 0.0, %v4997
  %v4999 = vpop.f32.mrf.mxu0
  %v5000 = vadd.f32 0.0, %v4999
  %5001 = vmatprep.mubr.bf16.mxu0 %v4914
  %5002 = vmatmul.mubr.bf16.gmra.mxu0 %v4769
  %v5003 = vpop.f32.mrf.mxu0
  %v5004 = vadd.f32 0.0, %v5003
  %v5005 = vpop.f32.mrf.mxu0
  %v5006 = vadd.f32 0.0, %v5005
  %v5007 = vpop.f32.mrf.mxu0
  %v5008 = vadd.f32 0.0, %v5007
  %v5009 = vpop.f32.mrf.mxu0
  %v5010 = vadd.f32 0.0, %v5009
  %5011 = vmatprep.mubr.bf16.mxu0 %v4917
  %5012 = vmatmul.mubr.bf16.gmra.mxu0 %v4771
  %v5013 = vpop.f32.mrf.mxu0
  %v5014 = vadd.f32 0.0, %v5013
  %v5015 = vpop.f32.mrf.mxu0
  %v5016 = vadd.f32 0.0, %v5015
  %v5017 = vpop.f32.mrf.mxu0
  %v5018 = vadd.f32 0.0, %v5017
  %v5019 = vpop.f32.mrf.mxu0
  %v5020 = vadd.f32 0.0, %v5019
  %5021 = vmatprep.mubr.bf16.mxu0 %v4920
  %5022 = vmatmul.mubr.bf16.gmra.mxu0 %v4773
  %v5023 = vpop.f32.mrf.mxu0
  %v5024 = vadd.f32 0.0, %v5023
  %v5025 = vpop.f32.mrf.mxu0
  %v5026 = vadd.f32 0.0, %v5025
  %v5027 = vpop.f32.mrf.mxu0
  %v5028 = vadd.f32 0.0, %v5027
  %v5029 = vpop.f32.mrf.mxu0
  %v5030 = vadd.f32 0.0, %v5029
  %5031 = vmatprep.mubr.bf16.mxu0 %v4923
  %5032 = vmatmul.mubr.bf16.gmra.mxu0 %v4775
  %v5033 = vpop.f32.mrf.mxu0
  %v5034 = vadd.f32 0.0, %v5033
  %v5035 = vpop.f32.mrf.mxu0
  %v5036 = vadd.f32 0.0, %v5035
  %v5037 = vpop.f32.mrf.mxu0
  %v5038 = vadd.f32 0.0, %v5037
  %v5039 = vpop.f32.mrf.mxu0
  %v5040 = vadd.f32 0.0, %v5039
  %5041 = vmatprep.mubr.bf16.mxu0 %v4926
  %5042 = vmatmul.mubr.bf16.gmra.mxu0 %v4777
  %v5043 = vpop.f32.mrf.mxu0
  %v5044 = vadd.f32 0.0, %v5043
  %v5045 = vpop.f32.mrf.mxu0
  %v5046 = vadd.f32 0.0, %v5045
  %v5047 = vpop.f32.mrf.mxu0
  %v5048 = vadd.f32 0.0, %v5047
  %v5049 = vpop.f32.mrf.mxu0
  %v5050 = vadd.f32 0.0, %v5049
  %5051 = vmatprep.mubr.bf16.mxu0 %v4929
  %5052 = vmatmul.mubr.bf16.gmra.mxu0 %v4779
  %v5053 = vpop.f32.mrf.mxu0
  %v5054 = vadd.f32 0.0, %v5053
  %v5055 = vpop.f32.mrf.mxu0
  %v5056 = vadd.f32 0.0, %v5055
  %v5057 = vpop.f32.mrf.mxu0
  %v5058 = vadd.f32 0.0, %v5057
  %v5059 = vpop.f32.mrf.mxu0
  %v5060 = vadd.f32 0.0, %v5059
  %5061 = vmatprep.mubr.bf16.mxu0 %v4932
  %5062 = vmatmul.mubr.bf16.gmra.mxu0 %v4781
  %v5063 = vpop.f32.mrf.mxu0
  %v5064 = vadd.f32 0.0, %v5063
  %v5065 = vpop.f32.mrf.mxu0
  %v5066 = vadd.f32 0.0, %v5065
  %v5067 = vpop.f32.mrf.mxu0
  %v5068 = vadd.f32 0.0, %v5067
  %v5069 = vpop.f32.mrf.mxu0
  %v5070 = vadd.f32 0.0, %v5069
  %5071 = vmatprep.mubr.bf16.mxu0 %v4935
  %5072 = vmatmul.mubr.bf16.gmra.mxu0 %v4783
  %v5073 = vpop.f32.mrf.mxu0
  %v5074 = vadd.f32 0.0, %v5073
  %v5075 = vpop.f32.mrf.mxu0
  %v5076 = vadd.f32 0.0, %v5075
  %v5077 = vpop.f32.mrf.mxu0
  %v5078 = vadd.f32 0.0, %v5077
  %v5079 = vpop.f32.mrf.mxu0
  %v5080 = vadd.f32 0.0, %v5079
  %5081 = vmatprep.mubr.bf16.mxu0 %v4938
  %5082 = vmatmul.mubr.bf16.gmra.mxu0 %v4785
  %v5083 = vpop.f32.mrf.mxu0
  %v5084 = vadd.f32 0.0, %v5083
  %v5085 = vpop.f32.mrf.mxu0
  %v5086 = vadd.f32 0.0, %v5085
  %v5087 = vpop.f32.mrf.mxu0
  %v5088 = vadd.f32 0.0, %v5087
  %v5089 = vpop.f32.mrf.mxu0
  %v5090 = vadd.f32 0.0, %v5089
  %5091 = vmatprep.mubr.bf16.mxu0 %v4941
  %5092 = vmatmul.mubr.bf16.gmra.mxu0 %v4787
  %v5093 = vpop.f32.mrf.mxu0
  %v5094 = vadd.f32 0.0, %v5093
  %v5095 = vpop.f32.mrf.mxu0
  %v5096 = vadd.f32 0.0, %v5095
  %v5097 = vpop.f32.mrf.mxu0
  %v5098 = vadd.f32 0.0, %v5097
  %v5099 = vpop.f32.mrf.mxu0
  %v5100 = vadd.f32 0.0, %v5099
  %5101 = vmatprep.mubr.bf16.mxu0 %v4944
  %5102 = vmatmul.mubr.bf16.gmra.mxu0 %v4789
  %v5103 = vpop.f32.mrf.mxu0
  %v5104 = vadd.f32 0.0, %v5103
  %v5105 = vpop.f32.mrf.mxu0
  %v5106 = vadd.f32 0.0, %v5105
  %v5107 = vpop.f32.mrf.mxu0
  %v5108 = vadd.f32 0.0, %v5107
  %v5109 = vpop.f32.mrf.mxu0
  %v5110 = vadd.f32 0.0, %v5109
  %5111 = vmatprep.mubr.bf16.mxu0 %v4947
  %5112 = vmatmul.mubr.bf16.gmra.mxu0 %v4791
  %v5113 = vpop.f32.mrf.mxu0
  %v5114 = vadd.f32 0.0, %v5113
  %v5115 = vpop.f32.mrf.mxu0
  %v5116 = vadd.f32 0.0, %v5115
  %v5117 = vpop.f32.mrf.mxu0
  %v5118 = vadd.f32 0.0, %v5117
  %v5119 = vpop.f32.mrf.mxu0
  %v5120 = vadd.f32 0.0, %v5119
  %5121 = vdwg.mxu0
  %v5122 = vadd.f32 %v4547, %v4984
  %v5123 = vadd.f32 %v4548, %v4986
  %v5124 = vadd.f32 %v4549, %v4988
  %v5125 = vadd.f32 %v4550, %v4990
  %v5126 = vadd.f32 %v4551, %v4994
  %v5127 = vadd.f32 %v4552, %v4996
  %v5128 = vadd.f32 %v4553, %v4998
  %v5129 = vadd.f32 %v4554, %v5000
  %v5130 = vadd.f32 %v4555, %v5004
  %v5131 = vadd.f32 %v4556, %v5006
  %v5132 = vadd.f32 %v4557, %v5008
  %v5133 = vadd.f32 %v4558, %v5010
  %v5134 = vadd.f32 %v4559, %v5014
  %v5135 = vadd.f32 %v4560, %v5016
  %v5136 = vadd.f32 %v4561, %v5018
  %v5137 = vadd.f32 %v4562, %v5020
  %v5138 = vadd.f32 %v4563, %v5024
  %v5139 = vadd.f32 %v4564, %v5026
  %v5140 = vadd.f32 %v4565, %v5028
  %v5141 = vadd.f32 %v4566, %v5030
  %v5142 = vadd.f32 %v4567, %v5034
  %v5143 = vadd.f32 %v4568, %v5036
  %v5144 = vadd.f32 %v4569, %v5038
  %v5145 = vadd.f32 %v4570, %v5040
  %v5146 = vadd.f32 %v4571, %v5044
  %v5147 = vadd.f32 %v4572, %v5046
  %v5148 = vadd.f32 %v4573, %v5048
  %v5149 = vadd.f32 %v4574, %v5050
  %v5150 = vadd.f32 %v4575, %v5054
  %v5151 = vadd.f32 %v4576, %v5056
  %v5152 = vadd.f32 %v4577, %v5058
  %v5153 = vadd.f32 %v4578, %v5060
  %v5154 = vadd.f32 %v4579, %v5064
  %v5155 = vadd.f32 %v4580, %v5066
  %v5156 = vadd.f32 %v4581, %v5068
  %v5157 = vadd.f32 %v4582, %v5070
  %v5158 = vadd.f32 %v4583, %v5074
  %v5159 = vadd.f32 %v4584, %v5076
  %v5160 = vadd.f32 %v4585, %v5078
  %v5161 = vadd.f32 %v4586, %v5080
  %v5162 = vadd.f32 %v4587, %v5084
  %v5163 = vadd.f32 %v4588, %v5086
  %v5164 = vadd.f32 %v4589, %v5088
  %v5165 = vadd.f32 %v4590, %v5090
  %v5166 = vadd.f32 %v4591, %v5094
  %v5167 = vadd.f32 %v4592, %v5096
  %v5168 = vadd.f32 %v4593, %v5098
  %v5169 = vadd.f32 %v4594, %v5100
  %v5170 = vadd.f32 %v4595, %v5104
  %v5171 = vadd.f32 %v4596, %v5106
  %v5172 = vadd.f32 %v4597, %v5108
  %v5173 = vadd.f32 %v4598, %v5110
  %v5174 = vadd.f32 %v4599, %v5114
  %v5175 = vadd.f32 %v4600, %v5116
  %v5176 = vadd.f32 %v4601, %v5118
  %v5177 = vadd.f32 %v4602, %v5120
  %v5178 = vld [vmem:[%s4028] sm:$0xff]
  %v5179 = vld [vmem:[%s4028 + $0x8] sm:$0xff]
  %v5180 = vld [vmem:[%s4028 + $0x10] sm:$0x11]
  %v5181 = vld [vmem:[%s4028 + $0x18] sm:$0xff]
  %v5182 = vld [vmem:[%s4028 + $0x20] sm:$0xff]
  %v5183 = vld [vmem:[%s4028 + $0x28] sm:$0x11]
  %v5184 = vld [vmem:[%s4028 + $0x30] sm:$0xff]
  %v5185 = vld [vmem:[%s4028 + $0x38] sm:$0xff]
  %v5186 = vld [vmem:[%s4028 + $0x40] sm:$0x11]
  %v5187 = vld [vmem:[%s4028 + $0x48] sm:$0xff]
  %v5188 = vld [vmem:[%s4028 + $0x50] sm:$0xff]
  %v5189 = vld [vmem:[%s4028 + $0x58] sm:$0x11]
  %v5190 = vld [vmem:[%s4028 + $0x60] sm:$0xff]
  %v5191 = vld [vmem:[%s4028 + $0x68] sm:$0xff]
  %v5192 = vld [vmem:[%s4028 + $0x70] sm:$0x11]
  %v5193 = vld [vmem:[%s4028 + $0x78] sm:$0xff]
  %v5194 = vld [vmem:[%s4028 + $0x80] sm:$0xff]
  %v5195 = vld [vmem:[%s4028 + $0x88] sm:$0x11]
  %v5196 = vld [vmem:[%s4028 + $0x90] sm:$0xff]
  %v5197 = vld [vmem:[%s4028 + $0x98] sm:$0xff]
  %v5198 = vld [vmem:[%s4028 + $0xa0] sm:$0x11]
  %v5199 = vld [vmem:[%s4028 + $0xa8] sm:$0xff]
  %v5200 = vld [vmem:[%s4028 + $0xb0] sm:$0xff]
  %v5201 = vld [vmem:[%s4028 + $0xb8] sm:$0x11]
  %v5202 = vld [vmem:[%s4028 + $0xc0] sm:$0xff]
  %v5203 = vld [vmem:[%s4028 + $0xc8] sm:$0xff]
  %v5204 = vld [vmem:[%s4028 + $0xd0] sm:$0x11]
  %v5205 = vld [vmem:[%s4028 + $0xd8] sm:$0xff]
  %v5206 = vld [vmem:[%s4028 + $0xe0] sm:$0xff]
  %v5207 = vld [vmem:[%s4028 + $0xe8] sm:$0x11]
  %v5208 = vld [vmem:[%s4028 + $0xf0] sm:$0xff]
  %v5209 = vld [vmem:[%s4028 + $0xf8] sm:$0xff]
  %v5210 = vld [vmem:[%s4028 + $0x100] sm:$0x11]
  %v5211 = vld [vmem:[%s4028 + $0x108] sm:$0xff]
  %v5212 = vld [vmem:[%s4028 + $0x110] sm:$0xff]
  %v5213 = vld [vmem:[%s4028 + $0x118] sm:$0x11]
  %v5214 = vld [vmem:[%s4028 + $0x120] sm:$0xff]
  %v5215 = vld [vmem:[%s4028 + $0x128] sm:$0xff]
  %v5216 = vld [vmem:[%s4028 + $0x130] sm:$0x11]
  %v5217 = vld [vmem:[%s4028 + $0x138] sm:$0xff]
  %v5218 = vld [vmem:[%s4028 + $0x140] sm:$0xff]
  %v5219 = vld [vmem:[%s4028 + $0x148] sm:$0x11]
  %v5220 = vmax.bf16 %v5178, 0
  %v5221 = vmax.bf16 %v5179, 0
  %v5222 = vmax.bf16 %v5180, 0
  %v5223 = vmax.bf16 %v5181, 0
  %v5224 = vmax.bf16 %v5182, 0
  %v5225 = vmax.bf16 %v5183, 0
  %v5226 = vmax.bf16 %v5184, 0
  %v5227 = vmax.bf16 %v5185, 0
  %v5228 = vmax.bf16 %v5186, 0
  %v5229 = vmax.bf16 %v5187, 0
  %v5230 = vmax.bf16 %v5188, 0
  %v5231 = vmax.bf16 %v5189, 0
  %v5232 = vmax.bf16 %v5190, 0
  %v5233 = vmax.bf16 %v5191, 0
  %v5234 = vmax.bf16 %v5192, 0
  %v5235 = vmax.bf16 %v5193, 0
  %v5236 = vmax.bf16 %v5194, 0
  %v5237 = vmax.bf16 %v5195, 0
  %v5238 = vmax.bf16 %v5196, 0
  %v5239 = vmax.bf16 %v5197, 0
  %v5240 = vmax.bf16 %v5198, 0
  %v5241 = vmax.bf16 %v5199, 0
  %v5242 = vmax.bf16 %v5200, 0
  %v5243 = vmax.bf16 %v5201, 0
  %v5244 = vmax.bf16 %v5202, 0
  %v5245 = vmax.bf16 %v5203, 0
  %v5246 = vmax.bf16 %v5204, 0
  %v5247 = vmax.bf16 %v5205, 0
  %v5248 = vmax.bf16 %v5206, 0
  %v5249 = vmax.bf16 %v5207, 0
  %v5250 = vmax.bf16 %v5208, 0
  %v5251 = vmax.bf16 %v5209, 0
  %v5252 = vmax.bf16 %v5210, 0
  %v5253 = vmax.bf16 %v5211, 0
  %v5254 = vmax.bf16 %v5212, 0
  %v5255 = vmax.bf16 %v5213, 0
  %v5256 = vmax.bf16 %v5214, 0
  %v5257 = vmax.bf16 %v5215, 0
  %v5258 = vmax.bf16 %v5216, 0
  %v5259 = vmax.bf16 %v5217, 0
  %v5260 = vmax.bf16 %v5218, 0
  %v5261 = vmax.bf16 %v5219, 0
  %v5263 = vshrl.u32 %v5220, 16
  %v5265 = vrot.slane %v5263, 4
  %v5266 = vshll.u32 %v5220, 16
  %v5268 = vrot.slane %v5266, 5
  %v5269 = vor.u32 %v5265, %v5268
  %v5270 = vrot.slane %v5269, 4
  %v5272 = vshll.u32 %v5221, 16
  %v5274 = vrot.slane %v5272, 5
  %v5275 = vsel %vm1141, %v5270, %v5274
  %v5276 = vshrl.u32 %v5221, 16
  %v5278 = vrot.slane %v5276, 4
  %v5279 = vor.u32 %v5278, %v5274
  %v5280 = vrot.slane %v5279, 4
  %v5282 = vshll.u32 %v5222, 16
  %v5284 = vrot.slane %v5282, 5
  %v5285 = vsel %vm1141, %v5280, %v5284
  %v5287 = vshrl.u32 %v5223, 16
  %v5289 = vrot.slane %v5287, 4
  %v5290 = vshll.u32 %v5223, 16
  %v5292 = vrot.slane %v5290, 5
  %v5293 = vor.u32 %v5289, %v5292
  %v5294 = vrot.slane %v5293, 4
  %v5296 = vshll.u32 %v5224, 16
  %v5298 = vrot.slane %v5296, 5
  %v5299 = vsel %vm1141, %v5294, %v5298
  %v5300 = vshrl.u32 %v5224, 16
  %v5302 = vrot.slane %v5300, 4
  %v5303 = vor.u32 %v5302, %v5298
  %v5304 = vrot.slane %v5303, 4
  %v5306 = vshll.u32 %v5225, 16
  %v5308 = vrot.slane %v5306, 5
  %v5309 = vsel %vm1141, %v5304, %v5308
  %v5311 = vshrl.u32 %v5226, 16
  %v5313 = vrot.slane %v5311, 4
  %v5314 = vshll.u32 %v5226, 16
  %v5316 = vrot.slane %v5314, 5
  %v5317 = vor.u32 %v5313, %v5316
  %v5318 = vrot.slane %v5317, 4
  %v5320 = vshll.u32 %v5227, 16
  %v5322 = vrot.slane %v5320, 5
  %v5323 = vsel %vm1141, %v5318, %v5322
  %v5324 = vshrl.u32 %v5227, 16
  %v5326 = vrot.slane %v5324, 4
  %v5327 = vor.u32 %v5326, %v5322
  %v5328 = vrot.slane %v5327, 4
  %v5330 = vshll.u32 %v5228, 16
  %v5332 = vrot.slane %v5330, 5
  %v5333 = vsel %vm1141, %v5328, %v5332
  %v5335 = vshrl.u32 %v5229, 16
  %v5337 = vrot.slane %v5335, 4
  %v5338 = vshll.u32 %v5229, 16
  %v5340 = vrot.slane %v5338, 5
  %v5341 = vor.u32 %v5337, %v5340
  %v5342 = vrot.slane %v5341, 4
  %v5344 = vshll.u32 %v5230, 16
  %v5346 = vrot.slane %v5344, 5
  %v5347 = vsel %vm1141, %v5342, %v5346
  %v5348 = vshrl.u32 %v5230, 16
  %v5350 = vrot.slane %v5348, 4
  %v5351 = vor.u32 %v5350, %v5346
  %v5352 = vrot.slane %v5351, 4
  %v5354 = vshll.u32 %v5231, 16
  %v5356 = vrot.slane %v5354, 5
  %v5357 = vsel %vm1141, %v5352, %v5356
  %v5359 = vshrl.u32 %v5232, 16
  %v5361 = vrot.slane %v5359, 4
  %v5362 = vshll.u32 %v5232, 16
  %v5364 = vrot.slane %v5362, 5
  %v5365 = vor.u32 %v5361, %v5364
  %v5366 = vrot.slane %v5365, 4
  %v5368 = vshll.u32 %v5233, 16
  %v5370 = vrot.slane %v5368, 5
  %v5371 = vsel %vm1141, %v5366, %v5370
  %v5372 = vshrl.u32 %v5233, 16
  %v5374 = vrot.slane %v5372, 4
  %v5375 = vor.u32 %v5374, %v5370
  %v5376 = vrot.slane %v5375, 4
  %v5378 = vshll.u32 %v5234, 16
  %v5380 = vrot.slane %v5378, 5
  %v5381 = vsel %vm1141, %v5376, %v5380
  %v5383 = vshrl.u32 %v5235, 16
  %v5385 = vrot.slane %v5383, 4
  %v5386 = vshll.u32 %v5235, 16
  %v5388 = vrot.slane %v5386, 5
  %v5389 = vor.u32 %v5385, %v5388
  %v5390 = vrot.slane %v5389, 4
  %v5392 = vshll.u32 %v5236, 16
  %v5394 = vrot.slane %v5392, 5
  %v5395 = vsel %vm1141, %v5390, %v5394
  %v5396 = vshrl.u32 %v5236, 16
  %v5398 = vrot.slane %v5396, 4
  %v5399 = vor.u32 %v5398, %v5394
  %v5400 = vrot.slane %v5399, 4
  %v5402 = vshll.u32 %v5237, 16
  %v5404 = vrot.slane %v5402, 5
  %v5405 = vsel %vm1141, %v5400, %v5404
  %v5407 = vshrl.u32 %v5238, 16
  %v5409 = vrot.slane %v5407, 4
  %v5410 = vshll.u32 %v5238, 16
  %v5412 = vrot.slane %v5410, 5
  %v5413 = vor.u32 %v5409, %v5412
  %v5414 = vrot.slane %v5413, 4
  %v5416 = vshll.u32 %v5239, 16
  %v5418 = vrot.slane %v5416, 5
  %v5419 = vsel %vm1141, %v5414, %v5418
  %v5420 = vshrl.u32 %v5239, 16
  %v5422 = vrot.slane %v5420, 4
  %v5423 = vor.u32 %v5422, %v5418
  %v5424 = vrot.slane %v5423, 4
  %v5426 = vshll.u32 %v5240, 16
  %v5428 = vrot.slane %v5426, 5
  %v5429 = vsel %vm1141, %v5424, %v5428
  %v5431 = vshrl.u32 %v5241, 16
  %v5433 = vrot.slane %v5431, 4
  %v5434 = vshll.u32 %v5241, 16
  %v5436 = vrot.slane %v5434, 5
  %v5437 = vor.u32 %v5433, %v5436
  %v5438 = vrot.slane %v5437, 4
  %v5440 = vshll.u32 %v5242, 16
  %v5442 = vrot.slane %v5440, 5
  %v5443 = vsel %vm1141, %v5438, %v5442
  %v5444 = vshrl.u32 %v5242, 16
  %v5446 = vrot.slane %v5444, 4
  %v5447 = vor.u32 %v5446, %v5442
  %v5448 = vrot.slane %v5447, 4
  %v5450 = vshll.u32 %v5243, 16
  %v5452 = vrot.slane %v5450, 5
  %v5453 = vsel %vm1141, %v5448, %v5452
  %v5455 = vshrl.u32 %v5244, 16
  %v5457 = vrot.slane %v5455, 4
  %v5458 = vshll.u32 %v5244, 16
  %v5460 = vrot.slane %v5458, 5
  %v5461 = vor.u32 %v5457, %v5460
  %v5462 = vrot.slane %v5461, 4
  %v5464 = vshll.u32 %v5245, 16
  %v5466 = vrot.slane %v5464, 5
  %v5467 = vsel %vm1141, %v5462, %v5466
  %v5468 = vshrl.u32 %v5245, 16
  %v5470 = vrot.slane %v5468, 4
  %v5471 = vor.u32 %v5470, %v5466
  %v5472 = vrot.slane %v5471, 4
  %v5474 = vshll.u32 %v5246, 16
  %v5476 = vrot.slane %v5474, 5
  %v5477 = vsel %vm1141, %v5472, %v5476
  %v5479 = vshrl.u32 %v5247, 16
  %v5481 = vrot.slane %v5479, 4
  %v5482 = vshll.u32 %v5247, 16
  %v5484 = vrot.slane %v5482, 5
  %v5485 = vor.u32 %v5481, %v5484
  %v5486 = vrot.slane %v5485, 4
  %v5488 = vshll.u32 %v5248, 16
  %v5490 = vrot.slane %v5488, 5
  %v5491 = vsel %vm1141, %v5486, %v5490
  %v5492 = vshrl.u32 %v5248, 16
  %v5494 = vrot.slane %v5492, 4
  %v5495 = vor.u32 %v5494, %v5490
  %v5496 = vrot.slane %v5495, 4
  %v5498 = vshll.u32 %v5249, 16
  %v5500 = vrot.slane %v5498, 5
  %v5501 = vsel %vm1141, %v5496, %v5500
  %v5503 = vshrl.u32 %v5250, 16
  %v5505 = vrot.slane %v5503, 4
  %v5506 = vshll.u32 %v5250, 16
  %v5508 = vrot.slane %v5506, 5
  %v5509 = vor.u32 %v5505, %v5508
  %v5510 = vrot.slane %v5509, 4
  %v5512 = vshll.u32 %v5251, 16
  %v5514 = vrot.slane %v5512, 5
  %v5515 = vsel %vm1141, %v5510, %v5514
  %v5516 = vshrl.u32 %v5251, 16
  %v5518 = vrot.slane %v5516, 4
  %v5519 = vor.u32 %v5518, %v5514
  %v5520 = vrot.slane %v5519, 4
  %v5522 = vshll.u32 %v5252, 16
  %v5524 = vrot.slane %v5522, 5
  %v5525 = vsel %vm1141, %v5520, %v5524
  %v5527 = vshrl.u32 %v5253, 16
  %v5529 = vrot.slane %v5527, 4
  %v5530 = vshll.u32 %v5253, 16
  %v5532 = vrot.slane %v5530, 5
  %v5533 = vor.u32 %v5529, %v5532
  %v5534 = vrot.slane %v5533, 4
  %v5536 = vshll.u32 %v5254, 16
  %v5538 = vrot.slane %v5536, 5
  %v5539 = vsel %vm1141, %v5534, %v5538
  %v5540 = vshrl.u32 %v5254, 16
  %v5542 = vrot.slane %v5540, 4
  %v5543 = vor.u32 %v5542, %v5538
  %v5544 = vrot.slane %v5543, 4
  %v5546 = vshll.u32 %v5255, 16
  %v5548 = vrot.slane %v5546, 5
  %v5549 = vsel %vm1141, %v5544, %v5548
  %v5551 = vshrl.u32 %v5256, 16
  %v5553 = vrot.slane %v5551, 4
  %v5554 = vshll.u32 %v5256, 16
  %v5556 = vrot.slane %v5554, 5
  %v5557 = vor.u32 %v5553, %v5556
  %v5558 = vrot.slane %v5557, 4
  %v5560 = vshll.u32 %v5257, 16
  %v5562 = vrot.slane %v5560, 5
  %v5563 = vsel %vm1141, %v5558, %v5562
  %v5564 = vshrl.u32 %v5257, 16
  %v5566 = vrot.slane %v5564, 4
  %v5567 = vor.u32 %v5566, %v5562
  %v5568 = vrot.slane %v5567, 4
  %v5570 = vshll.u32 %v5258, 16
  %v5572 = vrot.slane %v5570, 5
  %v5573 = vsel %vm1141, %v5568, %v5572
  %v5575 = vshrl.u32 %v5259, 16
  %v5577 = vrot.slane %v5575, 4
  %v5578 = vshll.u32 %v5259, 16
  %v5580 = vrot.slane %v5578, 5
  %v5581 = vor.u32 %v5577, %v5580
  %v5582 = vrot.slane %v5581, 4
  %v5584 = vshll.u32 %v5260, 16
  %v5586 = vrot.slane %v5584, 5
  %v5587 = vsel %vm1141, %v5582, %v5586
  %v5588 = vshrl.u32 %v5260, 16
  %v5590 = vrot.slane %v5588, 4
  %v5591 = vor.u32 %v5590, %v5586
  %v5592 = vrot.slane %v5591, 4
  %v5594 = vshll.u32 %v5261, 16
  %v5596 = vrot.slane %v5594, 5
  %v5597 = vsel %vm1141, %v5592, %v5596
  %s5598 = scalar_lea.vmem %s1, 1280
  %v5599 = vld [vmem:[%s5598] sm:$0xff]
  %v5600 = vld [vmem:[%s5598 + $0x8] sm:$0xff]
  %v5601 = vld [vmem:[%s5598 + $0x10] sm:$0xff]
  %v5602 = vld [vmem:[%s5598 + $0x18] sm:$0xff]
  %v5603 = vld [vmem:[%s5598 + $0x20] sm:$0xff]
  %v5604 = vld [vmem:[%s5598 + $0x28] sm:$0xff]
  %v5605 = vld [vmem:[%s5598 + $0x30] sm:$0xff]
  %v5606 = vld [vmem:[%s5598 + $0x38] sm:$0xff]
  %v5607 = vld [vmem:[%s5598 + $0x40] sm:$0xff]
  %v5608 = vld [vmem:[%s5598 + $0x48] sm:$0xff]
  %v5609 = vld [vmem:[%s5598 + $0x50] sm:$0xff]
  %v5610 = vld [vmem:[%s5598 + $0x58] sm:$0xff]
  %v5611 = vld [vmem:[%s5598 + $0x60] sm:$0xff]
  %v5612 = vld [vmem:[%s5598 + $0x68] sm:$0xff]
  %v5613 = vld [vmem:[%s5598 + $0x70] sm:$0xff]
  %v5614 = vld [vmem:[%s5598 + $0x78] sm:$0xff]
  %v5615 = vld [vmem:[%s5598 + $0x80] sm:$0xff]
  %v5616 = vld [vmem:[%s5598 + $0x88] sm:$0xff]
  %v5617 = vld [vmem:[%s5598 + $0x90] sm:$0xff]
  %v5618 = vld [vmem:[%s5598 + $0x98] sm:$0xff]
  %v5619 = vunpack.c.l.b16 %v5275
  %v5620 = vunpack.c.h.b16 %v5275
  %v5621 = vunpack.c.l.b16 %v5285
  %v5622 = vunpack.c.h.b16 %v5285
  %v5623 = vunpack.c.l.b16 %v5299
  %v5624 = vunpack.c.h.b16 %v5299
  %v5625 = vunpack.c.l.b16 %v5309
  %v5626 = vunpack.c.h.b16 %v5309
  %v5627 = vunpack.c.l.b16 %v5323
  %v5628 = vunpack.c.h.b16 %v5323
  %v5629 = vunpack.c.l.b16 %v5333
  %v5630 = vunpack.c.h.b16 %v5333
  %v5631 = vunpack.c.l.b16 %v5347
  %v5632 = vunpack.c.h.b16 %v5347
  %v5633 = vunpack.c.l.b16 %v5357
  %v5634 = vunpack.c.h.b16 %v5357
  %v5635 = vunpack.c.l.b16 %v5371
  %v5636 = vunpack.c.h.b16 %v5371
  %v5637 = vunpack.c.l.b16 %v5381
  %v5638 = vunpack.c.h.b16 %v5381
  %v5639 = vunpack.c.l.b16 %v5395
  %v5640 = vunpack.c.h.b16 %v5395
  %v5641 = vunpack.c.l.b16 %v5405
  %v5642 = vunpack.c.h.b16 %v5405
  %v5643 = vunpack.c.l.b16 %v5419
  %v5644 = vunpack.c.h.b16 %v5419
  %v5645 = vunpack.c.l.b16 %v5429
  %v5646 = vunpack.c.h.b16 %v5429
  %v5647 = vunpack.c.l.b16 %v5443
  %v5648 = vunpack.c.h.b16 %v5443
  %v5649 = vunpack.c.l.b16 %v5453
  %v5650 = vunpack.c.h.b16 %v5453
  %v5651 = vunpack.c.l.b16 %v5467
  %v5652 = vunpack.c.h.b16 %v5467
  %v5653 = vunpack.c.l.b16 %v5477
  %v5654 = vunpack.c.h.b16 %v5477
  %v5655 = vunpack.c.l.b16 %v5491
  %v5656 = vunpack.c.h.b16 %v5491
  %v5657 = vunpack.c.l.b16 %v5501
  %v5658 = vunpack.c.h.b16 %v5501
  %v5659 = vunpack.c.l.b16 %v5515
  %v5660 = vunpack.c.h.b16 %v5515
  %v5661 = vunpack.c.l.b16 %v5525
  %v5662 = vunpack.c.h.b16 %v5525
  %v5663 = vunpack.c.l.b16 %v5539
  %v5664 = vunpack.c.h.b16 %v5539
  %v5665 = vunpack.c.l.b16 %v5549
  %v5666 = vunpack.c.h.b16 %v5549
  %v5667 = vunpack.c.l.b16 %v5563
  %v5668 = vunpack.c.h.b16 %v5563
  %v5669 = vunpack.c.l.b16 %v5573
  %v5670 = vunpack.c.h.b16 %v5573
  %v5671 = vunpack.c.l.b16 %v5587
  %v5672 = vunpack.c.h.b16 %v5587
  %v5673 = vunpack.c.l.b16 %v5597
  %v5674 = vunpack.c.h.b16 %v5597
  %v5675 = vpack.c.b16 %v5621, %v5619
  %v5676 = vpack.c.b16 %v5622, %v5620
  %v5677 = vpack.c.b16 %v5625, %v5623
  %v5678 = vpack.c.b16 %v5626, %v5624
  %v5679 = vpack.c.b16 %v5629, %v5627
  %v5680 = vpack.c.b16 %v5630, %v5628
  %v5681 = vpack.c.b16 %v5633, %v5631
  %v5682 = vpack.c.b16 %v5634, %v5632
  %v5683 = vpack.c.b16 %v5637, %v5635
  %v5684 = vpack.c.b16 %v5638, %v5636
  %v5685 = vpack.c.b16 %v5641, %v5639
  %v5686 = vpack.c.b16 %v5642, %v5640
  %v5687 = vpack.c.b16 %v5645, %v5643
  %v5688 = vpack.c.b16 %v5646, %v5644
  %v5689 = vpack.c.b16 %v5649, %v5647
  %v5690 = vpack.c.b16 %v5650, %v5648
  %v5691 = vpack.c.b16 %v5653, %v5651
  %v5692 = vpack.c.b16 %v5654, %v5652
  %v5693 = vpack.c.b16 %v5657, %v5655
  %v5694 = vpack.c.b16 %v5658, %v5656
  %v5695 = vpack.c.b16 %v5661, %v5659
  %v5696 = vpack.c.b16 %v5662, %v5660
  %v5697 = vpack.c.b16 %v5665, %v5663
  %v5698 = vpack.c.b16 %v5666, %v5664
  %v5699 = vpack.c.b16 %v5669, %v5667
  %v5700 = vpack.c.b16 %v5670, %v5668
  %v5701 = vpack.c.b16 %v5673, %v5671
  %v5702 = vpack.c.b16 %v5674, %v5672
  %v5737 = vunpack.c.l.b16 %v5599
  %v5738 = vunpack.c.h.b16 %v5599
  %v5739 = vunpack.c.l.b16 %v5600
  %v5740 = vunpack.c.h.b16 %v5600
  %v5741 = vunpack.c.l.b16 %v5601
  %v5742 = vunpack.c.h.b16 %v5601
  %v5743 = vunpack.c.l.b16 %v5602
  %v5744 = vunpack.c.h.b16 %v5602
  %v5745 = vunpack.c.l.b16 %v5603
  %v5746 = vunpack.c.h.b16 %v5603
  %v5747 = vunpack.c.l.b16 %v5604
  %v5748 = vunpack.c.h.b16 %v5604
  %v5749 = vunpack.c.l.b16 %v5605
  %v5750 = vunpack.c.h.b16 %v5605
  %v5751 = vunpack.c.l.b16 %v5606
  %v5752 = vunpack.c.h.b16 %v5606
  %v5753 = vunpack.c.l.b16 %v5607
  %v5754 = vunpack.c.h.b16 %v5607
  %v5755 = vunpack.c.l.b16 %v5608
  %v5756 = vunpack.c.h.b16 %v5608
  %v5757 = vunpack.c.l.b16 %v5609
  %v5758 = vunpack.c.h.b16 %v5609
  %v5759 = vunpack.c.l.b16 %v5610
  %v5760 = vunpack.c.h.b16 %v5610
  %v5761 = vunpack.c.l.b16 %v5611
  %v5762 = vunpack.c.h.b16 %v5611
  %v5763 = vunpack.c.l.b16 %v5612
  %v5764 = vunpack.c.h.b16 %v5612
  %v5765 = vunpack.c.l.b16 %v5613
  %v5766 = vunpack.c.h.b16 %v5613
  %v5767 = vunpack.c.l.b16 %v5614
  %v5768 = vunpack.c.h.b16 %v5614
  %v5769 = vunpack.c.l.b16 %v5615
  %v5770 = vunpack.c.h.b16 %v5615
  %v5771 = vunpack.c.l.b16 %v5616
  %v5772 = vunpack.c.h.b16 %v5616
  %v5773 = vunpack.c.l.b16 %v5617
  %v5774 = vunpack.c.h.b16 %v5617
  %v5775 = vunpack.c.l.b16 %v5618
  %v5776 = vunpack.c.h.b16 %v5618
  %v5777 = vpack.c.b16 %v5739, %v5737
  %v5778 = vpack.c.b16 %v5740, %v5738
  %v5779 = vpack.c.b16 %v5743, %v5741
  %v5780 = vpack.c.b16 %v5744, %v5742
  %v5781 = vpack.c.b16 %v5747, %v5745
  %v5782 = vpack.c.b16 %v5748, %v5746
  %v5783 = vpack.c.b16 %v5751, %v5749
  %v5784 = vpack.c.b16 %v5752, %v5750
  %v5785 = vpack.c.b16 %v5755, %v5753
  %v5786 = vpack.c.b16 %v5756, %v5754
  %v5787 = vpack.c.b16 %v5759, %v5757
  %v5788 = vpack.c.b16 %v5760, %v5758
  %v5789 = vpack.c.b16 %v5763, %v5761
  %v5790 = vpack.c.b16 %v5764, %v5762
  %v5791 = vpack.c.b16 %v5767, %v5765
  %v5792 = vpack.c.b16 %v5768, %v5766
  %v5793 = vpack.c.b16 %v5771, %v5769
  %v5794 = vpack.c.b16 %v5772, %v5770
  %v5795 = vpack.c.b16 %v5775, %v5773
  %v5796 = vpack.c.b16 %v5776, %v5774
  %v5818 = vsel %vm398, %v5676, 0
  %v5821 = vsel %vm398, %v5678, 0
  %v5824 = vsel %vm398, %v5680, 0
  %v5827 = vsel %vm398, %v5682, 0
  %v5830 = vsel %vm398, %v5684, 0
  %v5833 = vsel %vm398, %v5686, 0
  %v5836 = vsel %vm398, %v5688, 0
  %v5839 = vsel %vm398, %v5690, 0
  %v5842 = vsel %vm398, %v5692, 0
  %v5845 = vsel %vm398, %v5694, 0
  %v5848 = vsel %vm398, %v5696, 0
  %v5851 = vsel %vm398, %v5698, 0
  %v5854 = vsel %vm398, %v5700, 0
  %v5857 = vsel %vm398, %v5702, 0
  %5859 = vmatprep.subr.bf16.mxu0 %v5792
  %5860 = vmatpush1.bf16.msra.mxu0 %v5791
  %5861 = vmatprep.subr.bf16.mxu0 %v5790
  %5862 = vmatpush1.bf16.msra.mxu0 %v5789
  %5863 = vmatprep.subr.bf16.mxu0 %v5788
  %5864 = vmatpush1.bf16.msra.mxu0 %v5787
  %5865 = vmatprep.subr.bf16.mxu0 %v5786
  %5866 = vmatpush1.bf16.msra.mxu0 %v5785
  %5867 = vmatprep.subr.bf16.mxu0 %v5784
  %5868 = vmatpush1.bf16.msra.mxu0 %v5783
  %5869 = vmatprep.subr.bf16.mxu0 %v5782
  %5870 = vmatpush1.bf16.msra.mxu0 %v5781
  %5871 = vmatprep.subr.bf16.mxu0 %v5780
  %5872 = vmatpush1.bf16.msra.mxu0 %v5779
  %5873 = vmatprep.subr.bf16.mxu0 %v5778
  %5874 = vmatpush1.bf16.msra.mxu0 %v5777
  %5875 = vmatprep.subr.bf16.mxu0 0
  %5876 = vmatpush2.bf16.msra.mxu0 0
  %5877 = vmatprep.subr.bf16.mxu0 0
  %5878 = vmatpush2.bf16.msra.mxu0 0
  %5879 = vmatprep.subr.bf16.mxu0 0
  %5880 = vmatpush2.bf16.msra.mxu0 0
  %5881 = vmatprep.subr.bf16.mxu0 0
  %5882 = vmatpush2.bf16.msra.mxu0 0
  %5883 = vmatprep.subr.bf16.mxu0 0
  %5884 = vmatpush2.bf16.msra.mxu0 0
  %5885 = vmatprep.subr.bf16.mxu0 0
  %5886 = vmatpush2.bf16.msra.mxu0 0
  %5887 = vmatprep.subr.bf16.mxu0 %v5796
  %5888 = vmatpush2.bf16.msra.mxu0 %v5795
  %5889 = vmatprep.subr.bf16.mxu0 %v5794
  %5890 = vmatpush2.bf16.msra.mxu0 %v5793
  %5891 = vmatprep.mubr.bf16.mxu0 %v5818
  %5892 = vmatmul.mubr.bf16.gmra.mxu0 %v5675
  %v5893 = vpop.f32.mrf.mxu0
  %v5894 = vadd.f32 0.0, %v5893
  %v5895 = vpop.f32.mrf.mxu0
  %v5896 = vadd.f32 0.0, %v5895
  %v5897 = vpop.f32.mrf.mxu0
  %v5898 = vadd.f32 0.0, %v5897
  %v5899 = vpop.f32.mrf.mxu0
  %v5900 = vadd.f32 0.0, %v5899
  %5901 = vmatprep.mubr.bf16.mxu0 %v5821
  %5902 = vmatmul.mubr.bf16.gmra.mxu0 %v5677
  %v5903 = vpop.f32.mrf.mxu0
  %v5904 = vadd.f32 0.0, %v5903
  %v5905 = vpop.f32.mrf.mxu0
  %v5906 = vadd.f32 0.0, %v5905
  %v5907 = vpop.f32.mrf.mxu0
  %v5908 = vadd.f32 0.0, %v5907
  %v5909 = vpop.f32.mrf.mxu0
  %v5910 = vadd.f32 0.0, %v5909
  %5911 = vmatprep.mubr.bf16.mxu0 %v5824
  %5912 = vmatmul.mubr.bf16.gmra.mxu0 %v5679
  %v5913 = vpop.f32.mrf.mxu0
  %v5914 = vadd.f32 0.0, %v5913
  %v5915 = vpop.f32.mrf.mxu0
  %v5916 = vadd.f32 0.0, %v5915
  %v5917 = vpop.f32.mrf.mxu0
  %v5918 = vadd.f32 0.0, %v5917
  %v5919 = vpop.f32.mrf.mxu0
  %v5920 = vadd.f32 0.0, %v5919
  %5921 = vmatprep.mubr.bf16.mxu0 %v5827
  %5922 = vmatmul.mubr.bf16.gmra.mxu0 %v5681
  %v5923 = vpop.f32.mrf.mxu0
  %v5924 = vadd.f32 0.0, %v5923
  %v5925 = vpop.f32.mrf.mxu0
  %v5926 = vadd.f32 0.0, %v5925
  %v5927 = vpop.f32.mrf.mxu0
  %v5928 = vadd.f32 0.0, %v5927
  %v5929 = vpop.f32.mrf.mxu0
  %v5930 = vadd.f32 0.0, %v5929
  %5931 = vmatprep.mubr.bf16.mxu0 %v5830
  %5932 = vmatmul.mubr.bf16.gmra.mxu0 %v5683
  %v5933 = vpop.f32.mrf.mxu0
  %v5934 = vadd.f32 0.0, %v5933
  %v5935 = vpop.f32.mrf.mxu0
  %v5936 = vadd.f32 0.0, %v5935
  %v5937 = vpop.f32.mrf.mxu0
  %v5938 = vadd.f32 0.0, %v5937
  %v5939 = vpop.f32.mrf.mxu0
  %v5940 = vadd.f32 0.0, %v5939
  %5941 = vmatprep.mubr.bf16.mxu0 %v5833
  %5942 = vmatmul.mubr.bf16.gmra.mxu0 %v5685
  %v5943 = vpop.f32.mrf.mxu0
  %v5944 = vadd.f32 0.0, %v5943
  %v5945 = vpop.f32.mrf.mxu0
  %v5946 = vadd.f32 0.0, %v5945
  %v5947 = vpop.f32.mrf.mxu0
  %v5948 = vadd.f32 0.0, %v5947
  %v5949 = vpop.f32.mrf.mxu0
  %v5950 = vadd.f32 0.0, %v5949
  %5951 = vmatprep.mubr.bf16.mxu0 %v5836
  %5952 = vmatmul.mubr.bf16.gmra.mxu0 %v5687
  %v5953 = vpop.f32.mrf.mxu0
  %v5954 = vadd.f32 0.0, %v5953
  %v5955 = vpop.f32.mrf.mxu0
  %v5956 = vadd.f32 0.0, %v5955
  %v5957 = vpop.f32.mrf.mxu0
  %v5958 = vadd.f32 0.0, %v5957
  %v5959 = vpop.f32.mrf.mxu0
  %v5960 = vadd.f32 0.0, %v5959
  %5961 = vmatprep.mubr.bf16.mxu0 %v5839
  %5962 = vmatmul.mubr.bf16.gmra.mxu0 %v5689
  %v5963 = vpop.f32.mrf.mxu0
  %v5964 = vadd.f32 0.0, %v5963
  %v5965 = vpop.f32.mrf.mxu0
  %v5966 = vadd.f32 0.0, %v5965
  %v5967 = vpop.f32.mrf.mxu0
  %v5968 = vadd.f32 0.0, %v5967
  %v5969 = vpop.f32.mrf.mxu0
  %v5970 = vadd.f32 0.0, %v5969
  %5971 = vmatprep.mubr.bf16.mxu0 %v5842
  %5972 = vmatmul.mubr.bf16.gmra.mxu0 %v5691
  %v5973 = vpop.f32.mrf.mxu0
  %v5974 = vadd.f32 0.0, %v5973
  %v5975 = vpop.f32.mrf.mxu0
  %v5976 = vadd.f32 0.0, %v5975
  %v5977 = vpop.f32.mrf.mxu0
  %v5978 = vadd.f32 0.0, %v5977
  %v5979 = vpop.f32.mrf.mxu0
  %v5980 = vadd.f32 0.0, %v5979
  %5981 = vmatprep.mubr.bf16.mxu0 %v5845
  %5982 = vmatmul.mubr.bf16.gmra.mxu0 %v5693
  %v5983 = vpop.f32.mrf.mxu0
  %v5984 = vadd.f32 0.0, %v5983
  %v5985 = vpop.f32.mrf.mxu0
  %v5986 = vadd.f32 0.0, %v5985
  %v5987 = vpop.f32.mrf.mxu0
  %v5988 = vadd.f32 0.0, %v5987
  %v5989 = vpop.f32.mrf.mxu0
  %v5990 = vadd.f32 0.0, %v5989
  %5991 = vmatprep.mubr.bf16.mxu0 %v5848
  %5992 = vmatmul.mubr.bf16.gmra.mxu0 %v5695
  %v5993 = vpop.f32.mrf.mxu0
  %v5994 = vadd.f32 0.0, %v5993
  %v5995 = vpop.f32.mrf.mxu0
  %v5996 = vadd.f32 0.0, %v5995
  %v5997 = vpop.f32.mrf.mxu0
  %v5998 = vadd.f32 0.0, %v5997
  %v5999 = vpop.f32.mrf.mxu0
  %v6000 = vadd.f32 0.0, %v5999
  %6001 = vmatprep.mubr.bf16.mxu0 %v5851
  %6002 = vmatmul.mubr.bf16.gmra.mxu0 %v5697
  %v6003 = vpop.f32.mrf.mxu0
  %v6004 = vadd.f32 0.0, %v6003
  %v6005 = vpop.f32.mrf.mxu0
  %v6006 = vadd.f32 0.0, %v6005
  %v6007 = vpop.f32.mrf.mxu0
  %v6008 = vadd.f32 0.0, %v6007
  %v6009 = vpop.f32.mrf.mxu0
  %v6010 = vadd.f32 0.0, %v6009
  %6011 = vmatprep.mubr.bf16.mxu0 %v5854
  %6012 = vmatmul.mubr.bf16.gmra.mxu0 %v5699
  %v6013 = vpop.f32.mrf.mxu0
  %v6014 = vadd.f32 0.0, %v6013
  %v6015 = vpop.f32.mrf.mxu0
  %v6016 = vadd.f32 0.0, %v6015
  %v6017 = vpop.f32.mrf.mxu0
  %v6018 = vadd.f32 0.0, %v6017
  %v6019 = vpop.f32.mrf.mxu0
  %v6020 = vadd.f32 0.0, %v6019
  %6021 = vmatprep.mubr.bf16.mxu0 %v5857
  %6022 = vmatmul.mubr.bf16.gmra.mxu0 %v5701
  %v6023 = vpop.f32.mrf.mxu0
  %v6024 = vadd.f32 0.0, %v6023
  %v6025 = vpop.f32.mrf.mxu0
  %v6026 = vadd.f32 0.0, %v6025
  %v6027 = vpop.f32.mrf.mxu0
  %v6028 = vadd.f32 0.0, %v6027
  %v6029 = vpop.f32.mrf.mxu0
  %v6030 = vadd.f32 0.0, %v6029
  %6031 = vdwg.mxu0
  %v6032 = vadd.f32 %v5122, %v5894
  %v6033 = vadd.f32 %v5123, %v5896
  %v6034 = vadd.f32 %v5124, %v5898
  %v6035 = vadd.f32 %v5125, %v5900
  %v6036 = vadd.f32 %v5126, %v5904
  %v6037 = vadd.f32 %v5127, %v5906
  %v6038 = vadd.f32 %v5128, %v5908
  %v6039 = vadd.f32 %v5129, %v5910
  %v6040 = vadd.f32 %v5130, %v5914
  %v6041 = vadd.f32 %v5131, %v5916
  %v6042 = vadd.f32 %v5132, %v5918
  %v6043 = vadd.f32 %v5133, %v5920
  %v6044 = vadd.f32 %v5134, %v5924
  %v6045 = vadd.f32 %v5135, %v5926
  %v6046 = vadd.f32 %v5136, %v5928
  %v6047 = vadd.f32 %v5137, %v5930
  %v6048 = vadd.f32 %v5138, %v5934
  %v6049 = vadd.f32 %v5139, %v5936
  %v6050 = vadd.f32 %v5140, %v5938
  %v6051 = vadd.f32 %v5141, %v5940
  %v6052 = vadd.f32 %v5142, %v5944
  %v6053 = vadd.f32 %v5143, %v5946
  %v6054 = vadd.f32 %v5144, %v5948
  %v6055 = vadd.f32 %v5145, %v5950
  %v6056 = vadd.f32 %v5146, %v5954
  %v6057 = vadd.f32 %v5147, %v5956
  %v6058 = vadd.f32 %v5148, %v5958
  %v6059 = vadd.f32 %v5149, %v5960
  %v6060 = vadd.f32 %v5150, %v5964
  %v6061 = vadd.f32 %v5151, %v5966
  %v6062 = vadd.f32 %v5152, %v5968
  %v6063 = vadd.f32 %v5153, %v5970
  %v6064 = vadd.f32 %v5154, %v5974
  %v6065 = vadd.f32 %v5155, %v5976
  %v6066 = vadd.f32 %v5156, %v5978
  %v6067 = vadd.f32 %v5157, %v5980
  %v6068 = vadd.f32 %v5158, %v5984
  %v6069 = vadd.f32 %v5159, %v5986
  %v6070 = vadd.f32 %v5160, %v5988
  %v6071 = vadd.f32 %v5161, %v5990
  %v6072 = vadd.f32 %v5162, %v5994
  %v6073 = vadd.f32 %v5163, %v5996
  %v6074 = vadd.f32 %v5164, %v5998
  %v6075 = vadd.f32 %v5165, %v6000
  %v6076 = vadd.f32 %v5166, %v6004
  %v6077 = vadd.f32 %v5167, %v6006
  %v6078 = vadd.f32 %v5168, %v6008
  %v6079 = vadd.f32 %v5169, %v6010
  %v6080 = vadd.f32 %v5170, %v6014
  %v6081 = vadd.f32 %v5171, %v6016
  %v6082 = vadd.f32 %v5172, %v6018
  %v6083 = vadd.f32 %v5173, %v6020
  %v6084 = vadd.f32 %v5174, %v6024
  %v6085 = vadd.f32 %v5175, %v6026
  %v6086 = vadd.f32 %v5176, %v6028
  %v6087 = vadd.f32 %v5177, %v6030
  %v6088 = vadd.f32 %v6032, %v6034
  %v6089 = vadd.f32 %v6088, %v6036
  %v6090 = vadd.f32 %v6089, %v6038
  %v6091 = vadd.f32 %v6090, %v6040
  %v6092 = vadd.f32 %v6091, %v6042
  %v6093 = vadd.f32 %v6092, %v6044
  %v6094 = vadd.f32 %v6093, %v6046
  %v6095 = vadd.f32 %v6094, %v6048
  %v6096 = vadd.f32 %v6095, %v6050
  %v6097 = vadd.f32 %v6096, %v6052
  %v6098 = vadd.f32 %v6097, %v6054
  %v6099 = vadd.f32 %v6098, %v6056
  %v6100 = vadd.f32 %v6099, %v6058
  %v6101 = vadd.f32 %v6100, %v6060
  %v6102 = vadd.f32 %v6101, %v6062
  %v6103 = vadd.f32 %v6102, %v6064
  %v6104 = vadd.f32 %v6103, %v6066
  %v6105 = vadd.f32 %v6104, %v6068
  %v6106 = vadd.f32 %v6105, %v6070
  %v6107 = vadd.f32 %v6106, %v6072
  %v6108 = vadd.f32 %v6107, %v6074
  %v6109 = vadd.f32 %v6108, %v6076
  %v6110 = vadd.f32 %v6109, %v6078
  %v6111 = vadd.f32 %v6110, %v6080
  %v6112 = vadd.f32 %v6111, %v6082
  %v6113 = vadd.f32 %v6112, %v6084
  %v6114 = vadd.f32 %v6113, %v6086
  %v6115 = vrot.slane %v6114, 4
  %v6116 = vadd.f32 %v6114, %v6115
  %v6117 = vrot.slane %v6116, 2
  %v6118 = vadd.f32 %v6116, %v6117
  %v6119 = vrot.slane %v6118, 1
  %v6120 = vadd.f32 %v6118, %v6119
  %v6121 = vsel %vm398, %v6033, 0.0
  %v6122 = vsel %vm398, %v6035, 0.0
  %v6123 = vadd.f32 %v6121, %v6122
  %v6124 = vsel %vm398, %v6037, 0.0
  %v6125 = vadd.f32 %v6123, %v6124
  %v6126 = vsel %vm398, %v6039, 0.0
  %v6127 = vadd.f32 %v6125, %v6126
  %v6128 = vsel %vm398, %v6041, 0.0
  %v6129 = vadd.f32 %v6127, %v6128
  %v6130 = vsel %vm398, %v6043, 0.0
  %v6131 = vadd.f32 %v6129, %v6130
  %v6132 = vsel %vm398, %v6045, 0.0
  %v6133 = vadd.f32 %v6131, %v6132
  %v6134 = vsel %vm398, %v6047, 0.0
  %v6135 = vadd.f32 %v6133, %v6134
  %v6136 = vsel %vm398, %v6049, 0.0
  %v6137 = vadd.f32 %v6135, %v6136
  %v6138 = vsel %vm398, %v6051, 0.0
  %v6139 = vadd.f32 %v6137, %v6138
  %v6140 = vsel %vm398, %v6053, 0.0
  %v6141 = vadd.f32 %v6139, %v6140
  %v6142 = vsel %vm398, %v6055, 0.0
  %v6143 = vadd.f32 %v6141, %v6142
  %v6144 = vsel %vm398, %v6057, 0.0
  %v6145 = vadd.f32 %v6143, %v6144
  %v6146 = vsel %vm398, %v6059, 0.0
  %v6147 = vadd.f32 %v6145, %v6146
  %v6148 = vsel %vm398, %v6061, 0.0
  %v6149 = vadd.f32 %v6147, %v6148
  %v6150 = vsel %vm398, %v6063, 0.0
  %v6151 = vadd.f32 %v6149, %v6150
  %v6152 = vsel %vm398, %v6065, 0.0
  %v6153 = vadd.f32 %v6151, %v6152
  %v6154 = vsel %vm398, %v6067, 0.0
  %v6155 = vadd.f32 %v6153, %v6154
  %v6156 = vsel %vm398, %v6069, 0.0
  %v6157 = vadd.f32 %v6155, %v6156
  %v6158 = vsel %vm398, %v6071, 0.0
  %v6159 = vadd.f32 %v6157, %v6158
  %v6160 = vsel %vm398, %v6073, 0.0
  %v6161 = vadd.f32 %v6159, %v6160
  %v6162 = vsel %vm398, %v6075, 0.0
  %v6163 = vadd.f32 %v6161, %v6162
  %v6164 = vsel %vm398, %v6077, 0.0
  %v6165 = vadd.f32 %v6163, %v6164
  %v6166 = vsel %vm398, %v6079, 0.0
  %v6167 = vadd.f32 %v6165, %v6166
  %v6168 = vsel %vm398, %v6081, 0.0
  %v6169 = vadd.f32 %v6167, %v6168
  %v6170 = vsel %vm398, %v6083, 0.0
  %v6171 = vadd.f32 %v6169, %v6170
  %v6172 = vsel %vm398, %v6085, 0.0
  %v6173 = vadd.f32 %v6171, %v6172
  %v6174 = vsel %vm398, %v6087, 0.0
  %v6175 = vadd.f32 %v6173, %v6174
  %v6176 = vrot.slane %v6175, 4
  %v6177 = vadd.f32 %v6175, %v6176
  %v6178 = vrot.slane %v6177, 2
  %v6179 = vadd.f32 %v6177, %v6178
  %v6180 = vrot.slane %v6179, 1
  %v6181 = vadd.f32 %v6179, %v6180
  %v6182 = vmul.f32 %v6032, %v6032
  %v6183 = vmul.f32 %v6033, %v6033
  %v6184 = vmul.f32 %v6034, %v6034
  %v6185 = vmul.f32 %v6035, %v6035
  %v6186 = vmul.f32 %v6036, %v6036
  %v6187 = vmul.f32 %v6037, %v6037
  %v6188 = vmul.f32 %v6038, %v6038
  %v6189 = vmul.f32 %v6039, %v6039
  %v6190 = vmul.f32 %v6040, %v6040
  %v6191 = vmul.f32 %v6041, %v6041
  %v6192 = vmul.f32 %v6042, %v6042
  %v6193 = vmul.f32 %v6043, %v6043
  %v6194 = vmul.f32 %v6044, %v6044
  %v6195 = vmul.f32 %v6045, %v6045
  %v6196 = vmul.f32 %v6046, %v6046
  %v6197 = vmul.f32 %v6047, %v6047
  %v6198 = vmul.f32 %v6048, %v6048
  %v6199 = vmul.f32 %v6049, %v6049
  %v6200 = vmul.f32 %v6050, %v6050
  %v6201 = vmul.f32 %v6051, %v6051
  %v6202 = vmul.f32 %v6052, %v6052
  %v6203 = vmul.f32 %v6053, %v6053
  %v6204 = vmul.f32 %v6054, %v6054
  %v6205 = vmul.f32 %v6055, %v6055
  %v6206 = vmul.f32 %v6056, %v6056
  %v6207 = vmul.f32 %v6057, %v6057
  %v6208 = vmul.f32 %v6058, %v6058
  %v6209 = vmul.f32 %v6059, %v6059
  %v6210 = vmul.f32 %v6060, %v6060
  %v6211 = vmul.f32 %v6061, %v6061
  %v6212 = vmul.f32 %v6062, %v6062
  %v6213 = vmul.f32 %v6063, %v6063
  %v6214 = vmul.f32 %v6064, %v6064
  %v6215 = vmul.f32 %v6065, %v6065
  %v6216 = vmul.f32 %v6066, %v6066
  %v6217 = vmul.f32 %v6067, %v6067
  %v6218 = vmul.f32 %v6068, %v6068
  %v6219 = vmul.f32 %v6069, %v6069
  %v6220 = vmul.f32 %v6070, %v6070
  %v6221 = vmul.f32 %v6071, %v6071
  %v6222 = vmul.f32 %v6072, %v6072
  %v6223 = vmul.f32 %v6073, %v6073
  %v6224 = vmul.f32 %v6074, %v6074
  %v6225 = vmul.f32 %v6075, %v6075
  %v6226 = vmul.f32 %v6076, %v6076
  %v6227 = vmul.f32 %v6077, %v6077
  %v6228 = vmul.f32 %v6078, %v6078
  %v6229 = vmul.f32 %v6079, %v6079
  %v6230 = vmul.f32 %v6080, %v6080
  %v6231 = vmul.f32 %v6081, %v6081
  %v6232 = vmul.f32 %v6082, %v6082
  %v6233 = vmul.f32 %v6083, %v6083
  %v6234 = vmul.f32 %v6084, %v6084
  %v6235 = vmul.f32 %v6085, %v6085
  %v6236 = vmul.f32 %v6086, %v6086
  %v6237 = vmul.f32 %v6087, %v6087
  %v6238 = vadd.f32 %v6182, %v6184
  %v6239 = vadd.f32 %v6238, %v6186
  %v6240 = vadd.f32 %v6239, %v6188
  %v6241 = vadd.f32 %v6240, %v6190
  %v6242 = vadd.f32 %v6241, %v6192
  %v6243 = vadd.f32 %v6242, %v6194
  %v6244 = vadd.f32 %v6243, %v6196
  %v6245 = vadd.f32 %v6244, %v6198
  %v6246 = vadd.f32 %v6245, %v6200
  %v6247 = vadd.f32 %v6246, %v6202
  %v6248 = vadd.f32 %v6247, %v6204
  %v6249 = vadd.f32 %v6248, %v6206
  %v6250 = vadd.f32 %v6249, %v6208
  %v6251 = vadd.f32 %v6250, %v6210
  %v6252 = vadd.f32 %v6251, %v6212
  %v6253 = vadd.f32 %v6252, %v6214
  %v6254 = vadd.f32 %v6253, %v6216
  %v6255 = vadd.f32 %v6254, %v6218
  %v6256 = vadd.f32 %v6255, %v6220
  %v6257 = vadd.f32 %v6256, %v6222
  %v6258 = vadd.f32 %v6257, %v6224
  %v6259 = vadd.f32 %v6258, %v6226
  %v6260 = vadd.f32 %v6259, %v6228
  %v6261 = vadd.f32 %v6260, %v6230
  %v6262 = vadd.f32 %v6261, %v6232
  %v6263 = vadd.f32 %v6262, %v6234
  %v6264 = vadd.f32 %v6263, %v6236
  %v6265 = vrot.slane %v6264, 4
  %v6266 = vadd.f32 %v6264, %v6265
  %v6267 = vrot.slane %v6266, 2
  %v6268 = vadd.f32 %v6266, %v6267
  %v6269 = vrot.slane %v6268, 1
  %v6270 = vadd.f32 %v6268, %v6269
  %v6271 = vsel %vm398, %v6183, 0.0
  %v6272 = vsel %vm398, %v6185, 0.0
  %v6273 = vadd.f32 %v6271, %v6272
  %v6274 = vsel %vm398, %v6187, 0.0
  %v6275 = vadd.f32 %v6273, %v6274
  %v6276 = vsel %vm398, %v6189, 0.0
  %v6277 = vadd.f32 %v6275, %v6276
  %v6278 = vsel %vm398, %v6191, 0.0
  %v6279 = vadd.f32 %v6277, %v6278
  %v6280 = vsel %vm398, %v6193, 0.0
  %v6281 = vadd.f32 %v6279, %v6280
  %v6282 = vsel %vm398, %v6195, 0.0
  %v6283 = vadd.f32 %v6281, %v6282
  %v6284 = vsel %vm398, %v6197, 0.0
  %v6285 = vadd.f32 %v6283, %v6284
  %v6286 = vsel %vm398, %v6199, 0.0
  %v6287 = vadd.f32 %v6285, %v6286
  %v6288 = vsel %vm398, %v6201, 0.0
  %v6289 = vadd.f32 %v6287, %v6288
  %v6290 = vsel %vm398, %v6203, 0.0
  %v6291 = vadd.f32 %v6289, %v6290
  %v6292 = vsel %vm398, %v6205, 0.0
  %v6293 = vadd.f32 %v6291, %v6292
  %v6294 = vsel %vm398, %v6207, 0.0
  %v6295 = vadd.f32 %v6293, %v6294
  %v6296 = vsel %vm398, %v6209, 0.0
  %v6297 = vadd.f32 %v6295, %v6296
  %v6298 = vsel %vm398, %v6211, 0.0
  %v6299 = vadd.f32 %v6297, %v6298
  %v6300 = vsel %vm398, %v6213, 0.0
  %v6301 = vadd.f32 %v6299, %v6300
  %v6302 = vsel %vm398, %v6215, 0.0
  %v6303 = vadd.f32 %v6301, %v6302
  %v6304 = vsel %vm398, %v6217, 0.0
  %v6305 = vadd.f32 %v6303, %v6304
  %v6306 = vsel %vm398, %v6219, 0.0
  %v6307 = vadd.f32 %v6305, %v6306
  %v6308 = vsel %vm398, %v6221, 0.0
  %v6309 = vadd.f32 %v6307, %v6308
  %v6310 = vsel %vm398, %v6223, 0.0
  %v6311 = vadd.f32 %v6309, %v6310
  %v6312 = vsel %vm398, %v6225, 0.0
  %v6313 = vadd.f32 %v6311, %v6312
  %v6314 = vsel %vm398, %v6227, 0.0
  %v6315 = vadd.f32 %v6313, %v6314
  %v6316 = vsel %vm398, %v6229, 0.0
  %v6317 = vadd.f32 %v6315, %v6316
  %v6318 = vsel %vm398, %v6231, 0.0
  %v6319 = vadd.f32 %v6317, %v6318
  %v6320 = vsel %vm398, %v6233, 0.0
  %v6321 = vadd.f32 %v6319, %v6320
  %v6322 = vsel %vm398, %v6235, 0.0
  %v6323 = vadd.f32 %v6321, %v6322
  %v6324 = vsel %vm398, %v6237, 0.0
  %v6325 = vadd.f32 %v6323, %v6324
  %v6326 = vrot.slane %v6325, 4
  %v6327 = vadd.f32 %v6325, %v6326
  %v6328 = vrot.slane %v6327, 2
  %v6329 = vadd.f32 %v6327, %v6328
  %v6330 = vrot.slane %v6329, 1
  %v6331 = vadd.f32 %v6329, %v6330
  %v6332 = vmul.f32 %v6120, 0.0051020407
  %v6333 = vmul.f32 %v6181, 0.0051020407
  %v6334 = vmul.f32 %v6270, 0.0051020407
  %v6335 = vmul.f32 %v6331, 0.0051020407
  %v6336 = vmul.f32 %v6332, %v6332
  %v6337 = vmul.f32 %v6333, %v6333
  %v6338 = vsub.f32 %v6334, %v6336
  %v6339 = vsub.f32 %v6335, %v6337
  %v6340 = vmax.f32 %v6338, 0.0
  %v6341 = vmax.f32 %v6339, 0.0
  %v6342 = vadd.f32 %v6340, 1e-05
  %v6343 = vadd.f32 %v6341, 1e-05
  %v6344 = vrsqrt.pop %v6342
  %v6345 = vrsqrt.pop %v6343
  %v6346 = vld [vmem:[%s2] sm:$0x3]
  %v6348 = vlaneseq
  %v6349 = vshrl.u32 %v6348, 7
  %v6350 = vsub.s32 0, %v6349
  %v6351 = vrot.slane %v6346, %v6350
  %v6352 = vlaneseq
  %v6353 = vshrl.u32 %v6352, 7
  %v6354 = vsub.s32 1, %v6353
  %v6355 = vrot.slane %v6346, %v6354
  %v6358 = vmul.f32 %v6344, %v6351
  %v6359 = vmul.f32 %v6345, %v6355
  %v6360 = vld [vmem:[%s3] sm:$0x3]
  %v6361 = vmul.f32 %v6332, %v6358
  %v6362 = vmul.f32 %v6333, %v6359
  %v6365 = vcombine.low %v6361, %v6362
  %v6367 = vunpack.c.l.s4 1966171168
  %v6368 = vunpack.c.0.s8 %v6367
  %v6369 = vlaneseq
  %v6370 = vshrl.u32 %v6369, 7
  %v6371 = vsub.s32 %v6368, %v6370
  %v6372 = vrot.slane %v6365, %v6371
  %v6374 = vunpack.c.l.s4 1966171168
  %v6375 = vunpack.c.0.s8 %v6374
  %v6376 = vlaneseq
  %v6377 = vshrl.u32 %v6376, 7
  %v6378 = vsub.s32 %v6375, %v6377
  %v6379 = vrot.slane %v6372, %v6378
  %v6381 = vsub.f32 %v6360, %v6379
  %v6382 = vlaneseq
  %v6383 = vshrl.u32 %v6382, 7
  %v6384 = vsub.s32 0, %v6383
  %v6385 = vrot.slane %v6358, %v6384
  %v6386 = vlaneseq
  %v6387 = vshrl.u32 %v6386, 7
  %v6388 = vsub.s32 0, %v6387
  %v6389 = vrot.slane %v6359, %v6388
  %v6390 = vmul.f32 %v6032, %v6385
  %v6391 = vmul.f32 %v6033, %v6389
  %v6392 = vmul.f32 %v6034, %v6385
  %v6393 = vmul.f32 %v6035, %v6389
  %v6394 = vmul.f32 %v6036, %v6385
  %v6395 = vmul.f32 %v6037, %v6389
  %v6396 = vmul.f32 %v6038, %v6385
  %v6397 = vmul.f32 %v6039, %v6389
  %v6398 = vmul.f32 %v6040, %v6385
  %v6399 = vmul.f32 %v6041, %v6389
  %v6400 = vmul.f32 %v6042, %v6385
  %v6401 = vmul.f32 %v6043, %v6389
  %v6402 = vmul.f32 %v6044, %v6385
  %v6403 = vmul.f32 %v6045, %v6389
  %v6404 = vmul.f32 %v6046, %v6385
  %v6405 = vmul.f32 %v6047, %v6389
  %v6406 = vmul.f32 %v6048, %v6385
  %v6407 = vmul.f32 %v6049, %v6389
  %v6408 = vmul.f32 %v6050, %v6385
  %v6409 = vmul.f32 %v6051, %v6389
  %v6410 = vmul.f32 %v6052, %v6385
  %v6411 = vmul.f32 %v6053, %v6389
  %v6412 = vmul.f32 %v6054, %v6385
  %v6413 = vmul.f32 %v6055, %v6389
  %v6414 = vmul.f32 %v6056, %v6385
  %v6415 = vmul.f32 %v6057, %v6389
  %v6416 = vmul.f32 %v6058, %v6385
  %v6417 = vmul.f32 %v6059, %v6389
  %v6418 = vmul.f32 %v6060, %v6385
  %v6419 = vmul.f32 %v6061, %v6389
  %v6420 = vmul.f32 %v6062, %v6385
  %v6421 = vmul.f32 %v6063, %v6389
  %v6422 = vmul.f32 %v6064, %v6385
  %v6423 = vmul.f32 %v6065, %v6389
  %v6424 = vmul.f32 %v6066, %v6385
  %v6425 = vmul.f32 %v6067, %v6389
  %v6426 = vmul.f32 %v6068, %v6385
  %v6427 = vmul.f32 %v6069, %v6389
  %v6428 = vmul.f32 %v6070, %v6385
  %v6429 = vmul.f32 %v6071, %v6389
  %v6430 = vmul.f32 %v6072, %v6385
  %v6431 = vmul.f32 %v6073, %v6389
  %v6432 = vmul.f32 %v6074, %v6385
  %v6433 = vmul.f32 %v6075, %v6389
  %v6434 = vmul.f32 %v6076, %v6385
  %v6435 = vmul.f32 %v6077, %v6389
  %v6436 = vmul.f32 %v6078, %v6385
  %v6437 = vmul.f32 %v6079, %v6389
  %v6438 = vmul.f32 %v6080, %v6385
  %v6439 = vmul.f32 %v6081, %v6389
  %v6440 = vmul.f32 %v6082, %v6385
  %v6441 = vmul.f32 %v6083, %v6389
  %v6442 = vmul.f32 %v6084, %v6385
  %v6443 = vmul.f32 %v6085, %v6389
  %v6444 = vmul.f32 %v6086, %v6385
  %v6445 = vmul.f32 %v6087, %v6389
  %v6447 = vlaneseq
  %v6448 = vshrl.u32 %v6447, 7
  %v6449 = vsub.s32 0, %v6448
  %v6450 = vrot.slane %v6381, %v6449
  %v6451 = vlaneseq
  %v6452 = vshrl.u32 %v6451, 7
  %v6453 = vsub.s32 1, %v6452
  %v6454 = vrot.slane %v6381, %v6453
  %v6457 = vadd.f32 %v6390, %v6450
  %v6458 = vadd.f32 %v6391, %v6454
  %v6459 = vadd.f32 %v6392, %v6450
  %v6460 = vadd.f32 %v6393, %v6454
  %v6461 = vadd.f32 %v6394, %v6450
  %v6462 = vadd.f32 %v6395, %v6454
  %v6463 = vadd.f32 %v6396, %v6450
  %v6464 = vadd.f32 %v6397, %v6454
  %v6465 = vadd.f32 %v6398, %v6450
  %v6466 = vadd.f32 %v6399, %v6454
  %v6467 = vadd.f32 %v6400, %v6450
  %v6468 = vadd.f32 %v6401, %v6454
  %v6469 = vadd.f32 %v6402, %v6450
  %v6470 = vadd.f32 %v6403, %v6454
  %v6471 = vadd.f32 %v6404, %v6450
  %v6472 = vadd.f32 %v6405, %v6454
  %v6473 = vadd.f32 %v6406, %v6450
  %v6474 = vadd.f32 %v6407, %v6454
  %v6475 = vadd.f32 %v6408, %v6450
  %v6476 = vadd.f32 %v6409, %v6454
  %v6477 = vadd.f32 %v6410, %v6450
  %v6478 = vadd.f32 %v6411, %v6454
  %v6479 = vadd.f32 %v6412, %v6450
  %v6480 = vadd.f32 %v6413, %v6454
  %v6481 = vadd.f32 %v6414, %v6450
  %v6482 = vadd.f32 %v6415, %v6454
  %v6483 = vadd.f32 %v6416, %v6450
  %v6484 = vadd.f32 %v6417, %v6454
  %v6485 = vadd.f32 %v6418, %v6450
  %v6486 = vadd.f32 %v6419, %v6454
  %v6487 = vadd.f32 %v6420, %v6450
  %v6488 = vadd.f32 %v6421, %v6454
  %v6489 = vadd.f32 %v6422, %v6450
  %v6490 = vadd.f32 %v6423, %v6454
  %v6491 = vadd.f32 %v6424, %v6450
  %v6492 = vadd.f32 %v6425, %v6454
  %v6493 = vadd.f32 %v6426, %v6450
  %v6494 = vadd.f32 %v6427, %v6454
  %v6495 = vadd.f32 %v6428, %v6450
  %v6496 = vadd.f32 %v6429, %v6454
  %v6497 = vadd.f32 %v6430, %v6450
  %v6498 = vadd.f32 %v6431, %v6454
  %v6499 = vadd.f32 %v6432, %v6450
  %v6500 = vadd.f32 %v6433, %v6454
  %v6501 = vadd.f32 %v6434, %v6450
  %v6502 = vadd.f32 %v6435, %v6454
  %v6503 = vadd.f32 %v6436, %v6450
  %v6504 = vadd.f32 %v6437, %v6454
  %v6505 = vadd.f32 %v6438, %v6450
  %v6506 = vadd.f32 %v6439, %v6454
  %v6507 = vadd.f32 %v6440, %v6450
  %v6508 = vadd.f32 %v6441, %v6454
  %v6509 = vadd.f32 %v6442, %v6450
  %v6510 = vadd.f32 %v6443, %v6454
  %v6511 = vadd.f32 %v6444, %v6450
  %v6512 = vadd.f32 %v6445, %v6454
  %v6513 = vmax.f32 %v6457, 0.0
  %v6514 = vmax.f32 %v6458, 0.0
  %v6515 = vmax.f32 %v6459, 0.0
  %v6516 = vmax.f32 %v6460, 0.0
  %v6517 = vmax.f32 %v6461, 0.0
  %v6518 = vmax.f32 %v6462, 0.0
  %v6519 = vmax.f32 %v6463, 0.0
  %v6520 = vmax.f32 %v6464, 0.0
  %v6521 = vmax.f32 %v6465, 0.0
  %v6522 = vmax.f32 %v6466, 0.0
  %v6523 = vmax.f32 %v6467, 0.0
  %v6524 = vmax.f32 %v6468, 0.0
  %v6525 = vmax.f32 %v6469, 0.0
  %v6526 = vmax.f32 %v6470, 0.0
  %v6527 = vmax.f32 %v6471, 0.0
  %v6528 = vmax.f32 %v6472, 0.0
  %v6529 = vmax.f32 %v6473, 0.0
  %v6530 = vmax.f32 %v6474, 0.0
  %v6531 = vmax.f32 %v6475, 0.0
  %v6532 = vmax.f32 %v6476, 0.0
  %v6533 = vmax.f32 %v6477, 0.0
  %v6534 = vmax.f32 %v6478, 0.0
  %v6535 = vmax.f32 %v6479, 0.0
  %v6536 = vmax.f32 %v6480, 0.0
  %v6537 = vmax.f32 %v6481, 0.0
  %v6538 = vmax.f32 %v6482, 0.0
  %v6539 = vmax.f32 %v6483, 0.0
  %v6540 = vmax.f32 %v6484, 0.0
  %v6541 = vmax.f32 %v6485, 0.0
  %v6542 = vmax.f32 %v6486, 0.0
  %v6543 = vmax.f32 %v6487, 0.0
  %v6544 = vmax.f32 %v6488, 0.0
  %v6545 = vmax.f32 %v6489, 0.0
  %v6546 = vmax.f32 %v6490, 0.0
  %v6547 = vmax.f32 %v6491, 0.0
  %v6548 = vmax.f32 %v6492, 0.0
  %v6549 = vmax.f32 %v6493, 0.0
  %v6550 = vmax.f32 %v6494, 0.0
  %v6551 = vmax.f32 %v6495, 0.0
  %v6552 = vmax.f32 %v6496, 0.0
  %v6553 = vmax.f32 %v6497, 0.0
  %v6554 = vmax.f32 %v6498, 0.0
  %v6555 = vmax.f32 %v6499, 0.0
  %v6556 = vmax.f32 %v6500, 0.0
  %v6557 = vmax.f32 %v6501, 0.0
  %v6558 = vmax.f32 %v6502, 0.0
  %v6559 = vmax.f32 %v6503, 0.0
  %v6560 = vmax.f32 %v6504, 0.0
  %v6561 = vmax.f32 %v6505, 0.0
  %v6562 = vmax.f32 %v6506, 0.0
  %v6563 = vmax.f32 %v6507, 0.0
  %v6564 = vmax.f32 %v6508, 0.0
  %v6565 = vmax.f32 %v6509, 0.0
  %v6566 = vmax.f32 %v6510, 0.0
  %v6567 = vmax.f32 %v6511, 0.0
  %v6568 = vmax.f32 %v6512, 0.0
  %6569 = vst [vmem:[%s4] sm:$0xff] %v6513
  %6570 = vst.msk [vmem:[%s4 + $0x8] sm:$0xff] %vm398, %v6514
  %6571 = vst [vmem:[%s4 + $0x10] sm:$0xff] %v6515
  %6572 = vst.msk [vmem:[%s4 + $0x18] sm:$0xff] %vm398, %v6516
  %6573 = vst [vmem:[%s4 + $0x20] sm:$0xff] %v6517
  %6574 = vst.msk [vmem:[%s4 + $0x28] sm:$0xff] %vm398, %v6518
  %6575 = vst [vmem:[%s4 + $0x30] sm:$0xff] %v6519
  %6576 = vst.msk [vmem:[%s4 + $0x38] sm:$0xff] %vm398, %v6520
  %6577 = vst [vmem:[%s4 + $0x40] sm:$0xff] %v6521
  %6578 = vst.msk [vmem:[%s4 + $0x48] sm:$0xff] %vm398, %v6522
  %6579 = vst [vmem:[%s4 + $0x50] sm:$0xff] %v6523
  %6580 = vst.msk [vmem:[%s4 + $0x58] sm:$0xff] %vm398, %v6524
  %6581 = vst [vmem:[%s4 + $0x60] sm:$0xff] %v6525
  %6582 = vst.msk [vmem:[%s4 + $0x68] sm:$0xff] %vm398, %v6526
  %6583 = vst [vmem:[%s4 + $0x70] sm:$0xff] %v6527
  %6584 = vst.msk [vmem:[%s4 + $0x78] sm:$0xff] %vm398, %v6528
  %6585 = vst [vmem:[%s4 + $0x80] sm:$0xff] %v6529
  %6586 = vst.msk [vmem:[%s4 + $0x88] sm:$0xff] %vm398, %v6530
  %6587 = vst [vmem:[%s4 + $0x90] sm:$0xff] %v6531
  %6588 = vst.msk [vmem:[%s4 + $0x98] sm:$0xff] %vm398, %v6532
  %6589 = vst [vmem:[%s4 + $0xa0] sm:$0xff] %v6533
  %6590 = vst.msk [vmem:[%s4 + $0xa8] sm:$0xff] %vm398, %v6534
  %6591 = vst [vmem:[%s4 + $0xb0] sm:$0xff] %v6535
  %6592 = vst.msk [vmem:[%s4 + $0xb8] sm:$0xff] %vm398, %v6536
  %6593 = vst [vmem:[%s4 + $0xc0] sm:$0xff] %v6537
  %6594 = vst.msk [vmem:[%s4 + $0xc8] sm:$0xff] %vm398, %v6538
  %6595 = vst [vmem:[%s4 + $0xd0] sm:$0xff] %v6539
  %6596 = vst.msk [vmem:[%s4 + $0xd8] sm:$0xff] %vm398, %v6540
  %6597 = vst [vmem:[%s4 + $0xe0] sm:$0xff] %v6541
  %6598 = vst.msk [vmem:[%s4 + $0xe8] sm:$0xff] %vm398, %v6542
  %6599 = vst [vmem:[%s4 + $0xf0] sm:$0xff] %v6543
  %6600 = vst.msk [vmem:[%s4 + $0xf8] sm:$0xff] %vm398, %v6544
  %6601 = vst [vmem:[%s4 + $0x100] sm:$0xff] %v6545
  %6602 = vst.msk [vmem:[%s4 + $0x108] sm:$0xff] %vm398, %v6546
  %6603 = vst [vmem:[%s4 + $0x110] sm:$0xff] %v6547
  %6604 = vst.msk [vmem:[%s4 + $0x118] sm:$0xff] %vm398, %v6548
  %6605 = vst [vmem:[%s4 + $0x120] sm:$0xff] %v6549
  %6606 = vst.msk [vmem:[%s4 + $0x128] sm:$0xff] %vm398, %v6550
  %6607 = vst [vmem:[%s4 + $0x130] sm:$0xff] %v6551
  %6608 = vst.msk [vmem:[%s4 + $0x138] sm:$0xff] %vm398, %v6552
  %6609 = vst [vmem:[%s4 + $0x140] sm:$0xff] %v6553
  %6610 = vst.msk [vmem:[%s4 + $0x148] sm:$0xff] %vm398, %v6554
  %6611 = vst [vmem:[%s4 + $0x150] sm:$0xff] %v6555
  %6612 = vst.msk [vmem:[%s4 + $0x158] sm:$0xff] %vm398, %v6556
  %6613 = vst [vmem:[%s4 + $0x160] sm:$0xff] %v6557
  %6614 = vst.msk [vmem:[%s4 + $0x168] sm:$0xff] %vm398, %v6558
  %6615 = vst [vmem:[%s4 + $0x170] sm:$0xff] %v6559
  %6616 = vst.msk [vmem:[%s4 + $0x178] sm:$0xff] %vm398, %v6560
  %6617 = vst [vmem:[%s4 + $0x180] sm:$0xff] %v6561
  %6618 = vst.msk [vmem:[%s4 + $0x188] sm:$0xff] %vm398, %v6562
  %6619 = vst [vmem:[%s4 + $0x190] sm:$0xff] %v6563
  %6620 = vst.msk [vmem:[%s4 + $0x198] sm:$0xff] %vm398, %v6564
  %6621 = vst [vmem:[%s4 + $0x1a0] sm:$0xff] %v6565
  %6622 = vst.msk [vmem:[%s4 + $0x1a8] sm:$0xff] %vm398, %v6566
  %6623 = vst [vmem:[%s4 + $0x1b0] sm:$0xff] %v6567
  %6624 = vst.msk [vmem:[%s4 + $0x1b8] sm:$0xff] %vm398, %v6568
  // Predicated region
  $region18: #{fused_relu_gconv_bn_relu.1} parent=0 // pred_check
    _
  $region19: #{fused_relu_gconv_bn_relu.1} parent=0 // pred_check_branch
    %6626 = sbr.rel (0) target = $region21
  $region20: #{fused_relu_gconv_bn_relu.1} parent=0 // pred_region
    _
  $region21: #{fused_relu_gconv_bn_relu.1} parent=0 // pred_fallthru
    _
  // Predicated region
  $region22: #{fused_relu_gconv_bn_relu.1} parent=0 // pred_check
    _
  $region23: #{fused_relu_gconv_bn_relu.1} parent=0 // pred_check_branch
    %6628 = sbr.rel (0) target = $region25
  $region24: #{fused_relu_gconv_bn_relu.1} parent=0 // pred_region
    _
  $region25: #{fused_relu_gconv_bn_relu.1} parent=0 // pred_fallthru
    _

</llo_original>
